<compile_context>
chip_gen: v7x
topology: tpu7x:2x2x1
jax: 0.10.0
libtpu: 0.0.40
codegen_flags: <defaults>
</compile_context>

<pallas_src>
import functools

import jax
import jax.numpy as jnp
from jax.experimental import pallas as pl
from jax.experimental.pallas import tpu as pltpu


def _round_up(x, m):
    return ((x + m - 1) // m) * m


def _pick_chunk(seq):
    # Largest chunk in {32, 16, 8} that divides seq; otherwise one chunk = whole
    # seq (a block equal to the full array dim is always legal).
    for t in (32, 16, 8):
        if seq % t == 0:
            return t
    return seq


# -----------------------------------------------------------------------------
# Kernel: one grid step == one chunk of T timesteps.  h/c are carried across
# grid steps in their own (VMEM-resident) output blocks and across the inner
# unrolled loop as register values.
# -----------------------------------------------------------------------------
def _time_lstm_kernel(xu_ref, ts_ref, w_ref, bd_ref,
                      o_ref, h_ref, c_ref, *, hp, t_chunk):
    t = pl.program_id(0)

    @pl.when(t == 0)
    def _():
        h_ref[...] = jnp.zeros_like(h_ref)
        c_ref[...] = jnp.zeros_like(c_ref)

    w_comb = w_ref[...]      # (2Hp, 5Hp): [[W_d^T, 0], [0, W_all^T]] block layout
    b_d = bd_ref[...]        # (1, Hp)

    def step(i, carry):
        h, c = carry                          # (b, Hp) each, live in registers
        xu = xu_ref[i]                        # (b, 4Hp) = U_all(x_s) + U_all_b + W_all_b
        tsv = ts_ref[i]                       # (b, 1)

        ch = jnp.concatenate([c, h], axis=-1)                          # (b, 2Hp)
        z = jnp.dot(ch, w_comb, preferred_element_type=jnp.float32)    # (b, 5Hp)

        # Time-decay of the cell state (W_d path).
        c_s1 = jnp.tanh(z[:, :hp] + b_d)
        c_adj = (c - c_s1) + c_s1 * tsv

        # Gates (W_all path + hoisted U_all path), 128-lane-aligned chunks.
        gates = z[:, hp:] + xu                                         # (b, 4Hp)
        f_g = jax.nn.sigmoid(gates[:, 0 * hp:1 * hp])
        i_g = jax.nn.sigmoid(gates[:, 1 * hp:2 * hp])
        o_g = jax.nn.sigmoid(gates[:, 2 * hp:3 * hp])
        c_tmp = jnp.tanh(gates[:, 3 * hp:4 * hp])

        c_new = f_g * c_adj + i_g * c_tmp
        h_new = o_g * jnp.tanh(c_new)

        o_ref[i] = o_g.astype(o_ref.dtype)    # per-step output == output gate
        return h_new, c_new

    h_fin, c_fin = jax.lax.fori_loop(
        0, t_chunk, step, (h_ref[...], c_ref[...]), unroll=True)
    h_ref[...] = h_fin
    c_ref[...] = c_fin


# -----------------------------------------------------------------------------
# Wrapper: parameter plumbing, hoisted x-projection, padding and layout glue.
# -----------------------------------------------------------------------------
def time_lstm_forward(inputs, timestamps, params, reverse=False):
    """inputs: (b, seq, input_size), timestamps: (b, seq).
    Returns (outputs (b, seq, H), (h (b, H), c (b, H)))."""
    f32 = jnp.float32
    b, seq, input_size = inputs.shape
    H = params["W_d_w"].shape[0]
    Hp = _round_up(H, 128)          # lane-dense padded hidden size
    T = _pick_chunk(seq)            # timesteps per grid step

    inputs = inputs.astype(f32)
    timestamps = timestamps.astype(f32)

    # ---- Hoisted input projection (one big MXU-friendly matmul, no recurrence).
    gate_bias = (params["U_all_b"] + params["W_all_b"]).astype(f32)           # (4H,)
    xu = jnp.dot(inputs.reshape(b * seq, input_size),
                 params["U_all_w"].T.astype(f32),
                 preferred_element_type=f32) + gate_bias                      # (b*seq, 4H)
    xu = xu.reshape(b, seq, 4, H)
    xu = jnp.pad(xu, ((0, 0), (0, 0), (0, 0), (0, Hp - H)))                   # per-gate pad
    xu_tm = jnp.transpose(xu.reshape(b, seq, 4 * Hp), (1, 0, 2))              # (seq, b, 4Hp)

    ts_tm = jnp.transpose(timestamps, (1, 0))[:, :, None]                     # (seq, b, 1)

    # ---- Fused, padded recurrent weight: [c | h] @ W_comb, W_comb (2Hp, 5Hp).
    w_comb = jnp.zeros((2 * Hp, 5 * Hp), f32)
    w_comb = w_comb.at[:H, :H].set(params["W_d_w"].T.astype(f32))             # W_d block
    w_all_t = params["W_all_w"].T.astype(f32).reshape(H, 4, H)
    for g in range(4):                                                        # W_all blocks
        w_comb = w_comb.at[Hp:Hp + H,
                           (g + 1) * Hp:(g + 1) * Hp + H].set(w_all_t[:, g, :])
    b_d = jnp.zeros((1, Hp), f32).at[:, :H].set(params["W_d_b"].astype(f32))

    kernel = functools.partial(_time_lstm_kernel, hp=Hp, t_chunk=T)

    o_tm, h_fin, c_fin = pl.pallas_call(
        kernel,
        out_shape=(
            jax.ShapeDtypeStruct((seq, b, Hp), f32),
            jax.ShapeDtypeStruct((b, Hp), f32),
            jax.ShapeDtypeStruct((b, Hp), f32),
        ),
        grid_spec=pltpu.PrefetchScalarGridSpec(
            num_scalar_prefetch=0,
            grid=(seq // T,),
            in_specs=[
                pl.BlockSpec((T, b, 4 * Hp), lambda t: (t, 0, 0)),   # xU chunk
                pl.BlockSpec((T, b, 1), lambda t: (t, 0, 0)),        # ts chunk
                pl.BlockSpec((2 * Hp, 5 * Hp), lambda t: (0, 0)),    # fused weights
                pl.BlockSpec((1, Hp), lambda t: (0, 0)),             # decay bias
            ],
            out_specs=[
                pl.BlockSpec((T, b, Hp), lambda t: (t, 0, 0)),       # o per chunk
                pl.BlockSpec((b, Hp), lambda t: (0, 0)),             # final h (carry)
                pl.BlockSpec((b, Hp), lambda t: (0, 0)),             # final c (carry)
            ],
        ),
        compiler_params=pltpu.CompilerParams(
            dimension_semantics=("arbitrary",),    # strictly sequential recurrence
        ),
    )(xu_tm, ts_tm, w_comb, b_d)

    outputs = jnp.transpose(o_tm[:, :, :H], (1, 0, 2))               # (b, seq, H)
    if reverse:
        outputs = jnp.flip(outputs, axis=1)       # matches outputs.reverse() + stack
    return outputs, (h_fin[:, :H], c_fin[:, :H])


# -----------------------------------------------------------------------------
# Pure-JAX reference (mirrors the PyTorch forward) for a sanity check.
# -----------------------------------------------------------------------------
def time_lstm_reference(inputs, timestamps, params):
    b, seq, _ = inputs.shape
    H = params["W_d_w"].shape[0]
    h = jnp.zeros((b, H), jnp.float32)
    c = jnp.zeros((b, H), jnp.float32)
    outs_list = []
    for s in range(seq):
        c_s1 = jnp.tanh(c @ params["W_d_w"].T + params["W_d_b"])
        c_s2 = c_s1 * timestamps[:, s:s + 1]
        c_adj = (c - c_s1) + c_s2
        outs = (h @ params["W_all_w"].T + params["W_all_b"]
                + inputs[:, s] @ params["U_all_w"].T + params["U_all_b"])
        f, i, o, c_tmp = jnp.split(outs, 4, axis=1)
        f, i, o = jax.nn.sigmoid(f), jax.nn.sigmoid(i), jax.nn.sigmoid(o)
        c_tmp = jnp.tanh(c_tmp)
        c = f * c_adj + i * c_tmp
        h = o * jnp.tanh(c)
        outs_list.append(o)
    return jnp.stack(outs_list, 1), (h, c)


def _init_linear(key, in_features, out_features):
    # Mimic torch.nn.Linear default init: U(-1/sqrt(in), 1/sqrt(in)).
    kw, kb = jax.random.split(key)
    bound = 1.0 / jnp.sqrt(jnp.float32(in_features))
    w = jax.random.uniform(kw, (out_features, in_features), jnp.float32, -bound, bound)
    b = jax.random.uniform(kb, (out_features,), jnp.float32, -bound, bound)
    return w, b


if __name__ == "__main__":
    batch, seq, input_size, hidden_size = 2, 8, 16, 32

    root = jax.random.PRNGKey(0)
    k_in, k_ts, k_wall, k_uall, k_wd = jax.random.split(root, 5)

    params = {}
    params["W_all_w"], params["W_all_b"] = _init_linear(k_wall, hidden_size, 4 * hidden_size)
    params["U_all_w"], params["U_all_b"] = _init_linear(k_uall, input_size, 4 * hidden_size)
    params["W_d_w"], params["W_d_b"] = _init_linear(k_wd, hidden_size, hidden_size)

    inputs = jax.random.normal(k_in, (batch, seq, input_size), jnp.float32)
    timestamps = jax.random.uniform(k_ts, (batch, seq), jnp.float32, 0.0, 2.0)

    outputs, (h_fin, c_fin) = time_lstm_forward(inputs, timestamps, params)
    jax.block_until_ready((outputs, h_fin, c_fin))

    ref_out, (ref_h, ref_c) = time_lstm_reference(inputs, timestamps, params)
    assert outputs.shape == (batch, seq, hidden_size)
    assert h_fin.shape == (batch, hidden_size) and c_fin.shape == (batch, hidden_size)
    assert jnp.allclose(outputs, ref_out, atol=2e-5, rtol=2e-5)
    assert jnp.allclose(h_fin, ref_h, atol=2e-5, rtol=2e-5)
    assert jnp.allclose(c_fin, ref_c, atol=2e-5, rtol=2e-5)

    print("KERNEL_OK")
</pallas_src>

<mosaic_0001>
module attributes {stable_mosaic.version = 11 : i64} {
  func.func @_time_lstm_kernel(%arg0: i32, %arg1: memref<8x2x512xf32, #tpu.memory_space<vmem>>, %arg2: memref<8x2x1xf32, #tpu.memory_space<vmem>>, %arg3: memref<256x640xf32, #tpu.memory_space<vmem>>, %arg4: memref<1x128xf32, #tpu.memory_space<vmem>>, %arg5: memref<8x2x128xf32, #tpu.memory_space<vmem>>, %arg6: memref<2x128xf32, #tpu.memory_space<vmem>>, %arg7: memref<2x128xf32, #tpu.memory_space<vmem>>) attributes {dimension_semantics = [#tpu.dimension_semantics<arbitrary>], iteration_bounds = array<i64: 1>, scalar_prefetch = 0 : i64, scratch_operands = 0 : i64, tpu.core_type = #tpu.core_type<tc>, window_params = [{transform_indices = @transform_0, window_bounds = array<i64: 8, 2, 512>}, {transform_indices = @transform_1, window_bounds = array<i64: 8, 2, 1>}, {pipeline_mode = #tpu.pipeline_mode<synchronous>, transform_indices = @transform_2, window_bounds = array<i64: 256, 640>}, {pipeline_mode = #tpu.pipeline_mode<synchronous>, transform_indices = @transform_3, window_bounds = array<i64: 1, 128>}, {transform_indices = @transform_4, window_bounds = array<i64: 8, 2, 128>}, {pipeline_mode = #tpu.pipeline_mode<synchronous>, transform_indices = @transform_5, window_bounds = array<i64: 2, 128>}, {pipeline_mode = #tpu.pipeline_mode<synchronous>, transform_indices = @transform_6, window_bounds = array<i64: 2, 128>}]} {
    %c0_i32 = arith.constant 0 : i32
    %0 = arith.cmpi eq, %arg0, %c0_i32 : i32
    %1 = arith.extui %0 : i1 to i32
    %c0_i32_0 = arith.constant 0 : i32
    %2 = arith.cmpi ne, %1, %c0_i32_0 : i32
    scf.if %2 {
      %cst_92 = arith.constant 0.000000e+00 : f32
      %385 = vector.broadcast %cst_92 : f32 to vector<2x128xf32>
      %c0_93 = arith.constant 0 : index
      %c0_94 = arith.constant 0 : index
      %386 = vector.load %arg6[%c0_93, %c0_94] : memref<2x128xf32, #tpu.memory_space<vmem>>, vector<2x128xf32>
      tpu.vector_store %arg6[%c0_93, %c0_94], %385 {strides = array<i32>} : memref<2x128xf32, #tpu.memory_space<vmem>>, vector<2x128xf32>,
      %cst_95 = arith.constant 0.000000e+00 : f32
      %387 = vector.broadcast %cst_95 : f32 to vector<2x128xf32>
      %c0_96 = arith.constant 0 : index
      %c0_97 = arith.constant 0 : index
      %388 = vector.load %arg7[%c0_96, %c0_97] : memref<2x128xf32, #tpu.memory_space<vmem>>, vector<2x128xf32>
      tpu.vector_store %arg7[%c0_96, %c0_97], %387 {strides = array<i32>} : memref<2x128xf32, #tpu.memory_space<vmem>>, vector<2x128xf32>,
    } else {
    }
    %c0 = arith.constant 0 : index
    %c0_1 = arith.constant 0 : index
    %3 = vector.load %arg3[%c0, %c0_1] : memref<256x640xf32, #tpu.memory_space<vmem>>, vector<256x640xf32>
    %c0_2 = arith.constant 0 : index
    %c0_3 = arith.constant 0 : index
    %4 = vector.load %arg4[%c0_2, %c0_3] : memref<1x128xf32, #tpu.memory_space<vmem>>, vector<1x128xf32>
    %c0_4 = arith.constant 0 : index
    %c0_5 = arith.constant 0 : index
    %5 = vector.load %arg6[%c0_4, %c0_5] : memref<2x128xf32, #tpu.memory_space<vmem>>, vector<2x128xf32>
    %c0_6 = arith.constant 0 : index
    %c0_7 = arith.constant 0 : index
    %6 = vector.load %arg7[%c0_6, %c0_7] : memref<2x128xf32, #tpu.memory_space<vmem>>, vector<2x128xf32>
    %c0_i32_8 = arith.constant 0 : i32
    %7 = arith.index_cast %c0_i32_8 : i32 to index
    %c0_9 = arith.constant 0 : index
    %c0_10 = arith.constant 0 : index
    %8 = vector.load %arg1[%7, %c0_9, %c0_10] : memref<8x2x512xf32, #tpu.memory_space<vmem>>, vector<1x2x512xf32>
    %9 = vector.shape_cast %8 : vector<1x2x512xf32> to vector<2x512xf32>
    %10 = arith.index_cast %c0_i32_8 : i32 to index
    %c0_11 = arith.constant 0 : index
    %c0_12 = arith.constant 0 : index
    %11 = vector.load %arg2[%10, %c0_11, %c0_12] : memref<8x2x1xf32, #tpu.memory_space<vmem>>, vector<1x2x1xf32>
    %12 = vector.shape_cast %11 : vector<1x2x1xf32> to vector<2x1xf32>
    %13 = tpu.concatenate %6, %5 in 1 : vector<2x128xf32>, vector<2x128xf32> -> vector<2x256xf32>
    %cst = arith.constant dense<0.000000e+00> : vector<2x640xf32>
    %14 = tpu.matmul %13, %3, %cst {dimension_numbers = #tpu.dot_dimension_numbers<[1], [0], [0], [1], [0, 0, 1, 1], [], []>} : vector<2x256xf32>, vector<256x640xf32>, vector<2x640xf32> -> vector<2x640xf32>
    %15 = vector.extract_strided_slice %14 {offsets = [0, 0], sizes = [2, 128], strides = [1, 1]} : vector<2x640xf32> to vector<2x128xf32>
    %16 = vector.broadcast %4 : vector<1x128xf32> to vector<2x128xf32>
    %17 = arith.addf %15, %16 : vector<2x128xf32>
    %18 = math.tanh %17 : vector<2x128xf32>
    %19 = arith.subf %6, %18 : vector<2x128xf32>
    %20 = vector.broadcast %12 : vector<2x1xf32> to vector<2x128xf32>
    %21 = arith.mulf %18, %20 : vector<2x128xf32>
    %22 = arith.addf %19, %21 : vector<2x128xf32>
    %23 = vector.extract_strided_slice %14 {offsets = [0, 128], sizes = [2, 512], strides = [1, 1]} : vector<2x640xf32> to vector<2x512xf32>
    %24 = arith.addf %23, %9 : vector<2x512xf32>
    %25 = vector.extract_strided_slice %24 {offsets = [0, 0], sizes = [2, 128], strides = [1, 1]} : vector<2x512xf32> to vector<2x128xf32>
    %26 = arith.negf %25 : vector<2x128xf32>
    %27 = math.exp %26 : vector<2x128xf32>
    %cst_13 = arith.constant 1.000000e+00 : f32
    %28 = vector.broadcast %cst_13 : f32 to vector<2x128xf32>
    %29 = arith.addf %28, %27 : vector<2x128xf32>
    %30 = arith.divf %28, %29 : vector<2x128xf32>
    %31 = vector.extract_strided_slice %24 {offsets = [0, 128], sizes = [2, 128], strides = [1, 1]} : vector<2x512xf32> to vector<2x128xf32>
    %32 = arith.negf %31 : vector<2x128xf32>
    %33 = math.exp %32 : vector<2x128xf32>
    %cst_14 = arith.constant 1.000000e+00 : f32
    %34 = vector.broadcast %cst_14 : f32 to vector<2x128xf32>
    %35 = arith.addf %34, %33 : vector<2x128xf32>
    %36 = arith.divf %34, %35 : vector<2x128xf32>
    %37 = vector.extract_strided_slice %24 {offsets = [0, 256], sizes = [2, 128], strides = [1, 1]} : vector<2x512xf32> to vector<2x128xf32>
    %38 = arith.negf %37 : vector<2x128xf32>
    %39 = math.exp %38 : vector<2x128xf32>
    %cst_15 = arith.constant 1.000000e+00 : f32
    %40 = vector.broadcast %cst_15 : f32 to vector<2x128xf32>
    %41 = arith.addf %40, %39 : vector<2x128xf32>
    %42 = arith.divf %40, %41 : vector<2x128xf32>
    %43 = vector.extract_strided_slice %24 {offsets = [0, 384], sizes = [2, 128], strides = [1, 1]} : vector<2x512xf32> to vector<2x128xf32>
    %44 = math.tanh %43 : vector<2x128xf32>
    %45 = arith.mulf %30, %22 : vector<2x128xf32>
    %46 = arith.mulf %36, %44 : vector<2x128xf32>
    %47 = arith.addf %45, %46 : vector<2x128xf32>
    %48 = math.tanh %47 : vector<2x128xf32>
    %49 = arith.mulf %42, %48 : vector<2x128xf32>
    %50 = arith.index_cast %c0_i32_8 : i32 to index
    %c0_16 = arith.constant 0 : index
    %c0_17 = arith.constant 0 : index
    %51 = vector.load %arg5[%50, %c0_16, %c0_17] : memref<8x2x128xf32, #tpu.memory_space<vmem>>, vector<1x2x128xf32>
    %52 = vector.shape_cast %51 : vector<1x2x128xf32> to vector<2x128xf32>
    %53 = vector.shape_cast %42 : vector<2x128xf32> to vector<1x2x128xf32>
    tpu.vector_store %arg5[%50, %c0_16, %c0_17], %53 {strides = array<i32>} : memref<8x2x128xf32, #tpu.memory_space<vmem>>, vector<1x2x128xf32>,
    %c1_i32 = arith.constant 1 : i32
    %54 = arith.index_cast %c1_i32 : i32 to index
    %c0_18 = arith.constant 0 : index
    %c0_19 = arith.constant 0 : index
    %55 = vector.load %arg1[%54, %c0_18, %c0_19] : memref<8x2x512xf32, #tpu.memory_space<vmem>>, vector<1x2x512xf32>
    %56 = vector.shape_cast %55 : vector<1x2x512xf32> to vector<2x512xf32>
    %57 = arith.index_cast %c1_i32 : i32 to index
    %c0_20 = arith.constant 0 : index
    %c0_21 = arith.constant 0 : index
    %58 = vector.load %arg2[%57, %c0_20, %c0_21] : memref<8x2x1xf32, #tpu.memory_space<vmem>>, vector<1x2x1xf32>
    %59 = vector.shape_cast %58 : vector<1x2x1xf32> to vector<2x1xf32>
    %60 = tpu.concatenate %47, %49 in 1 : vector<2x128xf32>, vector<2x128xf32> -> vector<2x256xf32>
    %cst_22 = arith.constant dense<0.000000e+00> : vector<2x640xf32>
    %61 = tpu.matmul %60, %3, %cst_22 {dimension_numbers = #tpu.dot_dimension_numbers<[1], [0], [0], [1], [0, 0, 1, 1], [], []>} : vector<2x256xf32>, vector<256x640xf32>, vector<2x640xf32> -> vector<2x640xf32>
    %62 = vector.extract_strided_slice %61 {offsets = [0, 0], sizes = [2, 128], strides = [1, 1]} : vector<2x640xf32> to vector<2x128xf32>
    %63 = vector.broadcast %4 : vector<1x128xf32> to vector<2x128xf32>
    %64 = arith.addf %62, %63 : vector<2x128xf32>
    %65 = math.tanh %64 : vector<2x128xf32>
    %66 = arith.subf %47, %65 : vector<2x128xf32>
    %67 = vector.broadcast %59 : vector<2x1xf32> to vector<2x128xf32>
    %68 = arith.mulf %65, %67 : vector<2x128xf32>
    %69 = arith.addf %66, %68 : vector<2x128xf32>
    %70 = vector.extract_strided_slice %61 {offsets = [0, 128], sizes = [2, 512], strides = [1, 1]} : vector<2x640xf32> to vector<2x512xf32>
    %71 = arith.addf %70, %56 : vector<2x512xf32>
    %72 = vector.extract_strided_slice %71 {offsets = [0, 0], sizes = [2, 128], strides = [1, 1]} : vector<2x512xf32> to vector<2x128xf32>
    %73 = arith.negf %72 : vector<2x128xf32>
    %74 = math.exp %73 : vector<2x128xf32>
    %cst_23 = arith.constant 1.000000e+00 : f32
    %75 = vector.broadcast %cst_23 : f32 to vector<2x128xf32>
    %76 = arith.addf %75, %74 : vector<2x128xf32>
    %77 = arith.divf %75, %76 : vector<2x128xf32>
    %78 = vector.extract_strided_slice %71 {offsets = [0, 128], sizes = [2, 128], strides = [1, 1]} : vector<2x512xf32> to vector<2x128xf32>
    %79 = arith.negf %78 : vector<2x128xf32>
    %80 = math.exp %79 : vector<2x128xf32>
    %cst_24 = arith.constant 1.000000e+00 : f32
    %81 = vector.broadcast %cst_24 : f32 to vector<2x128xf32>
    %82 = arith.addf %81, %80 : vector<2x128xf32>
    %83 = arith.divf %81, %82 : vector<2x128xf32>
    %84 = vector.extract_strided_slice %71 {offsets = [0, 256], sizes = [2, 128], strides = [1, 1]} : vector<2x512xf32> to vector<2x128xf32>
    %85 = arith.negf %84 : vector<2x128xf32>
    %86 = math.exp %85 : vector<2x128xf32>
    %cst_25 = arith.constant 1.000000e+00 : f32
    %87 = vector.broadcast %cst_25 : f32 to vector<2x128xf32>
    %88 = arith.addf %87, %86 : vector<2x128xf32>
    %89 = arith.divf %87, %88 : vector<2x128xf32>
    %90 = vector.extract_strided_slice %71 {offsets = [0, 384], sizes = [2, 128], strides = [1, 1]} : vector<2x512xf32> to vector<2x128xf32>
    %91 = math.tanh %90 : vector<2x128xf32>
    %92 = arith.mulf %77, %69 : vector<2x128xf32>
    %93 = arith.mulf %83, %91 : vector<2x128xf32>
    %94 = arith.addf %92, %93 : vector<2x128xf32>
    %95 = math.tanh %94 : vector<2x128xf32>
    %96 = arith.mulf %89, %95 : vector<2x128xf32>
    %97 = arith.index_cast %c1_i32 : i32 to index
    %c0_26 = arith.constant 0 : index
    %c0_27 = arith.constant 0 : index
    %98 = vector.load %arg5[%97, %c0_26, %c0_27] : memref<8x2x128xf32, #tpu.memory_space<vmem>>, vector<1x2x128xf32>
    %99 = vector.shape_cast %98 : vector<1x2x128xf32> to vector<2x128xf32>
    %100 = vector.shape_cast %89 : vector<2x128xf32> to vector<1x2x128xf32>
    tpu.vector_store %arg5[%97, %c0_26, %c0_27], %100 {strides = array<i32>} : memref<8x2x128xf32, #tpu.memory_space<vmem>>, vector<1x2x128xf32>,
    %c2_i32 = arith.constant 2 : i32
    %101 = arith.index_cast %c2_i32 : i32 to index
    %c0_28 = arith.constant 0 : index
    %c0_29 = arith.constant 0 : index
    %102 = vector.load %arg1[%101, %c0_28, %c0_29] : memref<8x2x512xf32, #tpu.memory_space<vmem>>, vector<1x2x512xf32>
    %103 = vector.shape_cast %102 : vector<1x2x512xf32> to vector<2x512xf32>
    %104 = arith.index_cast %c2_i32 : i32 to index
    %c0_30 = arith.constant 0 : index
    %c0_31 = arith.constant 0 : index
    %105 = vector.load %arg2[%104, %c0_30, %c0_31] : memref<8x2x1xf32, #tpu.memory_space<vmem>>, vector<1x2x1xf32>
    %106 = vector.shape_cast %105 : vector<1x2x1xf32> to vector<2x1xf32>
    %107 = tpu.concatenate %94, %96 in 1 : vector<2x128xf32>, vector<2x128xf32> -> vector<2x256xf32>
    %cst_32 = arith.constant dense<0.000000e+00> : vector<2x640xf32>
    %108 = tpu.matmul %107, %3, %cst_32 {dimension_numbers = #tpu.dot_dimension_numbers<[1], [0], [0], [1], [0, 0, 1, 1], [], []>} : vector<2x256xf32>, vector<256x640xf32>, vector<2x640xf32> -> vector<2x640xf32>
    %109 = vector.extract_strided_slice %108 {offsets = [0, 0], sizes = [2, 128], strides = [1, 1]} : vector<2x640xf32> to vector<2x128xf32>
    %110 = vector.broadcast %4 : vector<1x128xf32> to vector<2x128xf32>
    %111 = arith.addf %109, %110 : vector<2x128xf32>
    %112 = math.tanh %111 : vector<2x128xf32>
    %113 = arith.subf %94, %112 : vector<2x128xf32>
    %114 = vector.broadcast %106 : vector<2x1xf32> to vector<2x128xf32>
    %115 = arith.mulf %112, %114 : vector<2x128xf32>
    %116 = arith.addf %113, %115 : vector<2x128xf32>
    %117 = vector.extract_strided_slice %108 {offsets = [0, 128], sizes = [2, 512], strides = [1, 1]} : vector<2x640xf32> to vector<2x512xf32>
    %118 = arith.addf %117, %103 : vector<2x512xf32>
    %119 = vector.extract_strided_slice %118 {offsets = [0, 0], sizes = [2, 128], strides = [1, 1]} : vector<2x512xf32> to vector<2x128xf32>
    %120 = arith.negf %119 : vector<2x128xf32>
    %121 = math.exp %120 : vector<2x128xf32>
    %cst_33 = arith.constant 1.000000e+00 : f32
    %122 = vector.broadcast %cst_33 : f32 to vector<2x128xf32>
    %123 = arith.addf %122, %121 : vector<2x128xf32>
    %124 = arith.divf %122, %123 : vector<2x128xf32>
    %125 = vector.extract_strided_slice %118 {offsets = [0, 128], sizes = [2, 128], strides = [1, 1]} : vector<2x512xf32> to vector<2x128xf32>
    %126 = arith.negf %125 : vector<2x128xf32>
    %127 = math.exp %126 : vector<2x128xf32>
    %cst_34 = arith.constant 1.000000e+00 : f32
    %128 = vector.broadcast %cst_34 : f32 to vector<2x128xf32>
    %129 = arith.addf %128, %127 : vector<2x128xf32>
    %130 = arith.divf %128, %129 : vector<2x128xf32>
    %131 = vector.extract_strided_slice %118 {offsets = [0, 256], sizes = [2, 128], strides = [1, 1]} : vector<2x512xf32> to vector<2x128xf32>
    %132 = arith.negf %131 : vector<2x128xf32>
    %133 = math.exp %132 : vector<2x128xf32>
    %cst_35 = arith.constant 1.000000e+00 : f32
    %134 = vector.broadcast %cst_35 : f32 to vector<2x128xf32>
    %135 = arith.addf %134, %133 : vector<2x128xf32>
    %136 = arith.divf %134, %135 : vector<2x128xf32>
    %137 = vector.extract_strided_slice %118 {offsets = [0, 384], sizes = [2, 128], strides = [1, 1]} : vector<2x512xf32> to vector<2x128xf32>
    %138 = math.tanh %137 : vector<2x128xf32>
    %139 = arith.mulf %124, %116 : vector<2x128xf32>
    %140 = arith.mulf %130, %138 : vector<2x128xf32>
    %141 = arith.addf %139, %140 : vector<2x128xf32>
    %142 = math.tanh %141 : vector<2x128xf32>
    %143 = arith.mulf %136, %142 : vector<2x128xf32>
    %144 = arith.index_cast %c2_i32 : i32 to index
    %c0_36 = arith.constant 0 : index
    %c0_37 = arith.constant 0 : index
    %145 = vector.load %arg5[%144, %c0_36, %c0_37] : memref<8x2x128xf32, #tpu.memory_space<vmem>>, vector<1x2x128xf32>
    %146 = vector.shape_cast %145 : vector<1x2x128xf32> to vector<2x128xf32>
    %147 = vector.shape_cast %136 : vector<2x128xf32> to vector<1x2x128xf32>
    tpu.vector_store %arg5[%144, %c0_36, %c0_37], %147 {strides = array<i32>} : memref<8x2x128xf32, #tpu.memory_space<vmem>>, vector<1x2x128xf32>,
    %c3_i32 = arith.constant 3 : i32
    %148 = arith.index_cast %c3_i32 : i32 to index
    %c0_38 = arith.constant 0 : index
    %c0_39 = arith.constant 0 : index
    %149 = vector.load %arg1[%148, %c0_38, %c0_39] : memref<8x2x512xf32, #tpu.memory_space<vmem>>, vector<1x2x512xf32>
    %150 = vector.shape_cast %149 : vector<1x2x512xf32> to vector<2x512xf32>
    %151 = arith.index_cast %c3_i32 : i32 to index
    %c0_40 = arith.constant 0 : index
    %c0_41 = arith.constant 0 : index
    %152 = vector.load %arg2[%151, %c0_40, %c0_41] : memref<8x2x1xf32, #tpu.memory_space<vmem>>, vector<1x2x1xf32>
    %153 = vector.shape_cast %152 : vector<1x2x1xf32> to vector<2x1xf32>
    %154 = tpu.concatenate %141, %143 in 1 : vector<2x128xf32>, vector<2x128xf32> -> vector<2x256xf32>
    %cst_42 = arith.constant dense<0.000000e+00> : vector<2x640xf32>
    %155 = tpu.matmul %154, %3, %cst_42 {dimension_numbers = #tpu.dot_dimension_numbers<[1], [0], [0], [1], [0, 0, 1, 1], [], []>} : vector<2x256xf32>, vector<256x640xf32>, vector<2x640xf32> -> vector<2x640xf32>
    %156 = vector.extract_strided_slice %155 {offsets = [0, 0], sizes = [2, 128], strides = [1, 1]} : vector<2x640xf32> to vector<2x128xf32>
    %157 = vector.broadcast %4 : vector<1x128xf32> to vector<2x128xf32>
    %158 = arith.addf %156, %157 : vector<2x128xf32>
    %159 = math.tanh %158 : vector<2x128xf32>
    %160 = arith.subf %141, %159 : vector<2x128xf32>
    %161 = vector.broadcast %153 : vector<2x1xf32> to vector<2x128xf32>
    %162 = arith.mulf %159, %161 : vector<2x128xf32>
    %163 = arith.addf %160, %162 : vector<2x128xf32>
    %164 = vector.extract_strided_slice %155 {offsets = [0, 128], sizes = [2, 512], strides = [1, 1]} : vector<2x640xf32> to vector<2x512xf32>
    %165 = arith.addf %164, %150 : vector<2x512xf32>
    %166 = vector.extract_strided_slice %165 {offsets = [0, 0], sizes = [2, 128], strides = [1, 1]} : vector<2x512xf32> to vector<2x128xf32>
    %167 = arith.negf %166 : vector<2x128xf32>
    %168 = math.exp %167 : vector<2x128xf32>
    %cst_43 = arith.constant 1.000000e+00 : f32
    %169 = vector.broadcast %cst_43 : f32 to vector<2x128xf32>
    %170 = arith.addf %169, %168 : vector<2x128xf32>
    %171 = arith.divf %169, %170 : vector<2x128xf32>
    %172 = vector.extract_strided_slice %165 {offsets = [0, 128], sizes = [2, 128], strides = [1, 1]} : vector<2x512xf32> to vector<2x128xf32>
    %173 = arith.negf %172 : vector<2x128xf32>
    %174 = math.exp %173 : vector<2x128xf32>
    %cst_44 = arith.constant 1.000000e+00 : f32
    %175 = vector.broadcast %cst_44 : f32 to vector<2x128xf32>
    %176 = arith.addf %175, %174 : vector<2x128xf32>
    %177 = arith.divf %175, %176 : vector<2x128xf32>
    %178 = vector.extract_strided_slice %165 {offsets = [0, 256], sizes = [2, 128], strides = [1, 1]} : vector<2x512xf32> to vector<2x128xf32>
    %179 = arith.negf %178 : vector<2x128xf32>
    %180 = math.exp %179 : vector<2x128xf32>
    %cst_45 = arith.constant 1.000000e+00 : f32
    %181 = vector.broadcast %cst_45 : f32 to vector<2x128xf32>
    %182 = arith.addf %181, %180 : vector<2x128xf32>
    %183 = arith.divf %181, %182 : vector<2x128xf32>
    %184 = vector.extract_strided_slice %165 {offsets = [0, 384], sizes = [2, 128], strides = [1, 1]} : vector<2x512xf32> to vector<2x128xf32>
    %185 = math.tanh %184 : vector<2x128xf32>
    %186 = arith.mulf %171, %163 : vector<2x128xf32>
    %187 = arith.mulf %177, %185 : vector<2x128xf32>
    %188 = arith.addf %186, %187 : vector<2x128xf32>
    %189 = math.tanh %188 : vector<2x128xf32>
    %190 = arith.mulf %183, %189 : vector<2x128xf32>
    %191 = arith.index_cast %c3_i32 : i32 to index
    %c0_46 = arith.constant 0 : index
    %c0_47 = arith.constant 0 : index
    %192 = vector.load %arg5[%191, %c0_46, %c0_47] : memref<8x2x128xf32, #tpu.memory_space<vmem>>, vector<1x2x128xf32>
    %193 = vector.shape_cast %192 : vector<1x2x128xf32> to vector<2x128xf32>
    %194 = vector.shape_cast %183 : vector<2x128xf32> to vector<1x2x128xf32>
    tpu.vector_store %arg5[%191, %c0_46, %c0_47], %194 {strides = array<i32>} : memref<8x2x128xf32, #tpu.memory_space<vmem>>, vector<1x2x128xf32>,
    %c4_i32 = arith.constant 4 : i32
    %195 = arith.index_cast %c4_i32 : i32 to index
    %c0_48 = arith.constant 0 : index
    %c0_49 = arith.constant 0 : index
    %196 = vector.load %arg1[%195, %c0_48, %c0_49] : memref<8x2x512xf32, #tpu.memory_space<vmem>>, vector<1x2x512xf32>
    %197 = vector.shape_cast %196 : vector<1x2x512xf32> to vector<2x512xf32>
    %198 = arith.index_cast %c4_i32 : i32 to index
    %c0_50 = arith.constant 0 : index
    %c0_51 = arith.constant 0 : index
    %199 = vector.load %arg2[%198, %c0_50, %c0_51] : memref<8x2x1xf32, #tpu.memory_space<vmem>>, vector<1x2x1xf32>
    %200 = vector.shape_cast %199 : vector<1x2x1xf32> to vector<2x1xf32>
    %201 = tpu.concatenate %188, %190 in 1 : vector<2x128xf32>, vector<2x128xf32> -> vector<2x256xf32>
    %cst_52 = arith.constant dense<0.000000e+00> : vector<2x640xf32>
    %202 = tpu.matmul %201, %3, %cst_52 {dimension_numbers = #tpu.dot_dimension_numbers<[1], [0], [0], [1], [0, 0, 1, 1], [], []>} : vector<2x256xf32>, vector<256x640xf32>, vector<2x640xf32> -> vector<2x640xf32>
    %203 = vector.extract_strided_slice %202 {offsets = [0, 0], sizes = [2, 128], strides = [1, 1]} : vector<2x640xf32> to vector<2x128xf32>
    %204 = vector.broadcast %4 : vector<1x128xf32> to vector<2x128xf32>
    %205 = arith.addf %203, %204 : vector<2x128xf32>
    %206 = math.tanh %205 : vector<2x128xf32>
    %207 = arith.subf %188, %206 : vector<2x128xf32>
    %208 = vector.broadcast %200 : vector<2x1xf32> to vector<2x128xf32>
    %209 = arith.mulf %206, %208 : vector<2x128xf32>
    %210 = arith.addf %207, %209 : vector<2x128xf32>
    %211 = vector.extract_strided_slice %202 {offsets = [0, 128], sizes = [2, 512], strides = [1, 1]} : vector<2x640xf32> to vector<2x512xf32>
    %212 = arith.addf %211, %197 : vector<2x512xf32>
    %213 = vector.extract_strided_slice %212 {offsets = [0, 0], sizes = [2, 128], strides = [1, 1]} : vector<2x512xf32> to vector<2x128xf32>
    %214 = arith.negf %213 : vector<2x128xf32>
    %215 = math.exp %214 : vector<2x128xf32>
    %cst_53 = arith.constant 1.000000e+00 : f32
    %216 = vector.broadcast %cst_53 : f32 to vector<2x128xf32>
    %217 = arith.addf %216, %215 : vector<2x128xf32>
    %218 = arith.divf %216, %217 : vector<2x128xf32>
    %219 = vector.extract_strided_slice %212 {offsets = [0, 128], sizes = [2, 128], strides = [1, 1]} : vector<2x512xf32> to vector<2x128xf32>
    %220 = arith.negf %219 : vector<2x128xf32>
    %221 = math.exp %220 : vector<2x128xf32>
    %cst_54 = arith.constant 1.000000e+00 : f32
    %222 = vector.broadcast %cst_54 : f32 to vector<2x128xf32>
    %223 = arith.addf %222, %221 : vector<2x128xf32>
    %224 = arith.divf %222, %223 : vector<2x128xf32>
    %225 = vector.extract_strided_slice %212 {offsets = [0, 256], sizes = [2, 128], strides = [1, 1]} : vector<2x512xf32> to vector<2x128xf32>
    %226 = arith.negf %225 : vector<2x128xf32>
    %227 = math.exp %226 : vector<2x128xf32>
    %cst_55 = arith.constant 1.000000e+00 : f32
    %228 = vector.broadcast %cst_55 : f32 to vector<2x128xf32>
    %229 = arith.addf %228, %227 : vector<2x128xf32>
    %230 = arith.divf %228, %229 : vector<2x128xf32>
    %231 = vector.extract_strided_slice %212 {offsets = [0, 384], sizes = [2, 128], strides = [1, 1]} : vector<2x512xf32> to vector<2x128xf32>
    %232 = math.tanh %231 : vector<2x128xf32>
    %233 = arith.mulf %218, %210 : vector<2x128xf32>
    %234 = arith.mulf %224, %232 : vector<2x128xf32>
    %235 = arith.addf %233, %234 : vector<2x128xf32>
    %236 = math.tanh %235 : vector<2x128xf32>
    %237 = arith.mulf %230, %236 : vector<2x128xf32>
    %238 = arith.index_cast %c4_i32 : i32 to index
    %c0_56 = arith.constant 0 : index
    %c0_57 = arith.constant 0 : index
    %239 = vector.load %arg5[%238, %c0_56, %c0_57] : memref<8x2x128xf32, #tpu.memory_space<vmem>>, vector<1x2x128xf32>
    %240 = vector.shape_cast %239 : vector<1x2x128xf32> to vector<2x128xf32>
    %241 = vector.shape_cast %230 : vector<2x128xf32> to vector<1x2x128xf32>
    tpu.vector_store %arg5[%238, %c0_56, %c0_57], %241 {strides = array<i32>} : memref<8x2x128xf32, #tpu.memory_space<vmem>>, vector<1x2x128xf32>,
    %c5_i32 = arith.constant 5 : i32
    %242 = arith.index_cast %c5_i32 : i32 to index
    %c0_58 = arith.constant 0 : index
    %c0_59 = arith.constant 0 : index
    %243 = vector.load %arg1[%242, %c0_58, %c0_59] : memref<8x2x512xf32, #tpu.memory_space<vmem>>, vector<1x2x512xf32>
    %244 = vector.shape_cast %243 : vector<1x2x512xf32> to vector<2x512xf32>
    %245 = arith.index_cast %c5_i32 : i32 to index
    %c0_60 = arith.constant 0 : index
    %c0_61 = arith.constant 0 : index
    %246 = vector.load %arg2[%245, %c0_60, %c0_61] : memref<8x2x1xf32, #tpu.memory_space<vmem>>, vector<1x2x1xf32>
    %247 = vector.shape_cast %246 : vector<1x2x1xf32> to vector<2x1xf32>
    %248 = tpu.concatenate %235, %237 in 1 : vector<2x128xf32>, vector<2x128xf32> -> vector<2x256xf32>
    %cst_62 = arith.constant dense<0.000000e+00> : vector<2x640xf32>
    %249 = tpu.matmul %248, %3, %cst_62 {dimension_numbers = #tpu.dot_dimension_numbers<[1], [0], [0], [1], [0, 0, 1, 1], [], []>} : vector<2x256xf32>, vector<256x640xf32>, vector<2x640xf32> -> vector<2x640xf32>
    %250 = vector.extract_strided_slice %249 {offsets = [0, 0], sizes = [2, 128], strides = [1, 1]} : vector<2x640xf32> to vector<2x128xf32>
    %251 = vector.broadcast %4 : vector<1x128xf32> to vector<2x128xf32>
    %252 = arith.addf %250, %251 : vector<2x128xf32>
    %253 = math.tanh %252 : vector<2x128xf32>
    %254 = arith.subf %235, %253 : vector<2x128xf32>
    %255 = vector.broadcast %247 : vector<2x1xf32> to vector<2x128xf32>
    %256 = arith.mulf %253, %255 : vector<2x128xf32>
    %257 = arith.addf %254, %256 : vector<2x128xf32>
    %258 = vector.extract_strided_slice %249 {offsets = [0, 128], sizes = [2, 512], strides = [1, 1]} : vector<2x640xf32> to vector<2x512xf32>
    %259 = arith.addf %258, %244 : vector<2x512xf32>
    %260 = vector.extract_strided_slice %259 {offsets = [0, 0], sizes = [2, 128], strides = [1, 1]} : vector<2x512xf32> to vector<2x128xf32>
    %261 = arith.negf %260 : vector<2x128xf32>
    %262 = math.exp %261 : vector<2x128xf32>
    %cst_63 = arith.constant 1.000000e+00 : f32
    %263 = vector.broadcast %cst_63 : f32 to vector<2x128xf32>
    %264 = arith.addf %263, %262 : vector<2x128xf32>
    %265 = arith.divf %263, %264 : vector<2x128xf32>
    %266 = vector.extract_strided_slice %259 {offsets = [0, 128], sizes = [2, 128], strides = [1, 1]} : vector<2x512xf32> to vector<2x128xf32>
    %267 = arith.negf %266 : vector<2x128xf32>
    %268 = math.exp %267 : vector<2x128xf32>
    %cst_64 = arith.constant 1.000000e+00 : f32
    %269 = vector.broadcast %cst_64 : f32 to vector<2x128xf32>
    %270 = arith.addf %269, %268 : vector<2x128xf32>
    %271 = arith.divf %269, %270 : vector<2x128xf32>
    %272 = vector.extract_strided_slice %259 {offsets = [0, 256], sizes = [2, 128], strides = [1, 1]} : vector<2x512xf32> to vector<2x128xf32>
    %273 = arith.negf %272 : vector<2x128xf32>
    %274 = math.exp %273 : vector<2x128xf32>
    %cst_65 = arith.constant 1.000000e+00 : f32
    %275 = vector.broadcast %cst_65 : f32 to vector<2x128xf32>
    %276 = arith.addf %275, %274 : vector<2x128xf32>
    %277 = arith.divf %275, %276 : vector<2x128xf32>
    %278 = vector.extract_strided_slice %259 {offsets = [0, 384], sizes = [2, 128], strides = [1, 1]} : vector<2x512xf32> to vector<2x128xf32>
    %279 = math.tanh %278 : vector<2x128xf32>
    %280 = arith.mulf %265, %257 : vector<2x128xf32>
    %281 = arith.mulf %271, %279 : vector<2x128xf32>
    %282 = arith.addf %280, %281 : vector<2x128xf32>
    %283 = math.tanh %282 : vector<2x128xf32>
    %284 = arith.mulf %277, %283 : vector<2x128xf32>
    %285 = arith.index_cast %c5_i32 : i32 to index
    %c0_66 = arith.constant 0 : index
    %c0_67 = arith.constant 0 : index
    %286 = vector.load %arg5[%285, %c0_66, %c0_67] : memref<8x2x128xf32, #tpu.memory_space<vmem>>, vector<1x2x128xf32>
    %287 = vector.shape_cast %286 : vector<1x2x128xf32> to vector<2x128xf32>
    %288 = vector.shape_cast %277 : vector<2x128xf32> to vector<1x2x128xf32>
    tpu.vector_store %arg5[%285, %c0_66, %c0_67], %288 {strides = array<i32>} : memref<8x2x128xf32, #tpu.memory_space<vmem>>, vector<1x2x128xf32>,
    %c6_i32 = arith.constant 6 : i32
    %289 = arith.index_cast %c6_i32 : i32 to index
    %c0_68 = arith.constant 0 : index
    %c0_69 = arith.constant 0 : index
    %290 = vector.load %arg1[%289, %c0_68, %c0_69] : memref<8x2x512xf32, #tpu.memory_space<vmem>>, vector<1x2x512xf32>
    %291 = vector.shape_cast %290 : vector<1x2x512xf32> to vector<2x512xf32>
    %292 = arith.index_cast %c6_i32 : i32 to index
    %c0_70 = arith.constant 0 : index
    %c0_71 = arith.constant 0 : index
    %293 = vector.load %arg2[%292, %c0_70, %c0_71] : memref<8x2x1xf32, #tpu.memory_space<vmem>>, vector<1x2x1xf32>
    %294 = vector.shape_cast %293 : vector<1x2x1xf32> to vector<2x1xf32>
    %295 = tpu.concatenate %282, %284 in 1 : vector<2x128xf32>, vector<2x128xf32> -> vector<2x256xf32>
    %cst_72 = arith.constant dense<0.000000e+00> : vector<2x640xf32>
    %296 = tpu.matmul %295, %3, %cst_72 {dimension_numbers = #tpu.dot_dimension_numbers<[1], [0], [0], [1], [0, 0, 1, 1], [], []>} : vector<2x256xf32>, vector<256x640xf32>, vector<2x640xf32> -> vector<2x640xf32>
    %297 = vector.extract_strided_slice %296 {offsets = [0, 0], sizes = [2, 128], strides = [1, 1]} : vector<2x640xf32> to vector<2x128xf32>
    %298 = vector.broadcast %4 : vector<1x128xf32> to vector<2x128xf32>
    %299 = arith.addf %297, %298 : vector<2x128xf32>
    %300 = math.tanh %299 : vector<2x128xf32>
    %301 = arith.subf %282, %300 : vector<2x128xf32>
    %302 = vector.broadcast %294 : vector<2x1xf32> to vector<2x128xf32>
    %303 = arith.mulf %300, %302 : vector<2x128xf32>
    %304 = arith.addf %301, %303 : vector<2x128xf32>
    %305 = vector.extract_strided_slice %296 {offsets = [0, 128], sizes = [2, 512], strides = [1, 1]} : vector<2x640xf32> to vector<2x512xf32>
    %306 = arith.addf %305, %291 : vector<2x512xf32>
    %307 = vector.extract_strided_slice %306 {offsets = [0, 0], sizes = [2, 128], strides = [1, 1]} : vector<2x512xf32> to vector<2x128xf32>
    %308 = arith.negf %307 : vector<2x128xf32>
    %309 = math.exp %308 : vector<2x128xf32>
    %cst_73 = arith.constant 1.000000e+00 : f32
    %310 = vector.broadcast %cst_73 : f32 to vector<2x128xf32>
    %311 = arith.addf %310, %309 : vector<2x128xf32>
    %312 = arith.divf %310, %311 : vector<2x128xf32>
    %313 = vector.extract_strided_slice %306 {offsets = [0, 128], sizes = [2, 128], strides = [1, 1]} : vector<2x512xf32> to vector<2x128xf32>
    %314 = arith.negf %313 : vector<2x128xf32>
    %315 = math.exp %314 : vector<2x128xf32>
    %cst_74 = arith.constant 1.000000e+00 : f32
    %316 = vector.broadcast %cst_74 : f32 to vector<2x128xf32>
    %317 = arith.addf %316, %315 : vector<2x128xf32>
    %318 = arith.divf %316, %317 : vector<2x128xf32>
    %319 = vector.extract_strided_slice %306 {offsets = [0, 256], sizes = [2, 128], strides = [1, 1]} : vector<2x512xf32> to vector<2x128xf32>
    %320 = arith.negf %319 : vector<2x128xf32>
    %321 = math.exp %320 : vector<2x128xf32>
    %cst_75 = arith.constant 1.000000e+00 : f32
    %322 = vector.broadcast %cst_75 : f32 to vector<2x128xf32>
    %323 = arith.addf %322, %321 : vector<2x128xf32>
    %324 = arith.divf %322, %323 : vector<2x128xf32>
    %325 = vector.extract_strided_slice %306 {offsets = [0, 384], sizes = [2, 128], strides = [1, 1]} : vector<2x512xf32> to vector<2x128xf32>
    %326 = math.tanh %325 : vector<2x128xf32>
    %327 = arith.mulf %312, %304 : vector<2x128xf32>
    %328 = arith.mulf %318, %326 : vector<2x128xf32>
    %329 = arith.addf %327, %328 : vector<2x128xf32>
    %330 = math.tanh %329 : vector<2x128xf32>
    %331 = arith.mulf %324, %330 : vector<2x128xf32>
    %332 = arith.index_cast %c6_i32 : i32 to index
    %c0_76 = arith.constant 0 : index
    %c0_77 = arith.constant 0 : index
    %333 = vector.load %arg5[%332, %c0_76, %c0_77] : memref<8x2x128xf32, #tpu.memory_space<vmem>>, vector<1x2x128xf32>
    %334 = vector.shape_cast %333 : vector<1x2x128xf32> to vector<2x128xf32>
    %335 = vector.shape_cast %324 : vector<2x128xf32> to vector<1x2x128xf32>
    tpu.vector_store %arg5[%332, %c0_76, %c0_77], %335 {strides = array<i32>} : memref<8x2x128xf32, #tpu.memory_space<vmem>>, vector<1x2x128xf32>,
    %c7_i32 = arith.constant 7 : i32
    %336 = arith.index_cast %c7_i32 : i32 to index
    %c0_78 = arith.constant 0 : index
    %c0_79 = arith.constant 0 : index
    %337 = vector.load %arg1[%336, %c0_78, %c0_79] : memref<8x2x512xf32, #tpu.memory_space<vmem>>, vector<1x2x512xf32>
    %338 = vector.shape_cast %337 : vector<1x2x512xf32> to vector<2x512xf32>
    %339 = arith.index_cast %c7_i32 : i32 to index
    %c0_80 = arith.constant 0 : index
    %c0_81 = arith.constant 0 : index
    %340 = vector.load %arg2[%339, %c0_80, %c0_81] : memref<8x2x1xf32, #tpu.memory_space<vmem>>, vector<1x2x1xf32>
    %341 = vector.shape_cast %340 : vector<1x2x1xf32> to vector<2x1xf32>
    %342 = tpu.concatenate %329, %331 in 1 : vector<2x128xf32>, vector<2x128xf32> -> vector<2x256xf32>
    %cst_82 = arith.constant dense<0.000000e+00> : vector<2x640xf32>
    %343 = tpu.matmul %342, %3, %cst_82 {dimension_numbers = #tpu.dot_dimension_numbers<[1], [0], [0], [1], [0, 0, 1, 1], [], []>} : vector<2x256xf32>, vector<256x640xf32>, vector<2x640xf32> -> vector<2x640xf32>
    %344 = vector.extract_strided_slice %343 {offsets = [0, 0], sizes = [2, 128], strides = [1, 1]} : vector<2x640xf32> to vector<2x128xf32>
    %345 = vector.broadcast %4 : vector<1x128xf32> to vector<2x128xf32>
    %346 = arith.addf %344, %345 : vector<2x128xf32>
    %347 = math.tanh %346 : vector<2x128xf32>
    %348 = arith.subf %329, %347 : vector<2x128xf32>
    %349 = vector.broadcast %341 : vector<2x1xf32> to vector<2x128xf32>
    %350 = arith.mulf %347, %349 : vector<2x128xf32>
    %351 = arith.addf %348, %350 : vector<2x128xf32>
    %352 = vector.extract_strided_slice %343 {offsets = [0, 128], sizes = [2, 512], strides = [1, 1]} : vector<2x640xf32> to vector<2x512xf32>
    %353 = arith.addf %352, %338 : vector<2x512xf32>
    %354 = vector.extract_strided_slice %353 {offsets = [0, 0], sizes = [2, 128], strides = [1, 1]} : vector<2x512xf32> to vector<2x128xf32>
    %355 = arith.negf %354 : vector<2x128xf32>
    %356 = math.exp %355 : vector<2x128xf32>
    %cst_83 = arith.constant 1.000000e+00 : f32
    %357 = vector.broadcast %cst_83 : f32 to vector<2x128xf32>
    %358 = arith.addf %357, %356 : vector<2x128xf32>
    %359 = arith.divf %357, %358 : vector<2x128xf32>
    %360 = vector.extract_strided_slice %353 {offsets = [0, 128], sizes = [2, 128], strides = [1, 1]} : vector<2x512xf32> to vector<2x128xf32>
    %361 = arith.negf %360 : vector<2x128xf32>
    %362 = math.exp %361 : vector<2x128xf32>
    %cst_84 = arith.constant 1.000000e+00 : f32
    %363 = vector.broadcast %cst_84 : f32 to vector<2x128xf32>
    %364 = arith.addf %363, %362 : vector<2x128xf32>
    %365 = arith.divf %363, %364 : vector<2x128xf32>
    %366 = vector.extract_strided_slice %353 {offsets = [0, 256], sizes = [2, 128], strides = [1, 1]} : vector<2x512xf32> to vector<2x128xf32>
    %367 = arith.negf %366 : vector<2x128xf32>
    %368 = math.exp %367 : vector<2x128xf32>
    %cst_85 = arith.constant 1.000000e+00 : f32
    %369 = vector.broadcast %cst_85 : f32 to vector<2x128xf32>
    %370 = arith.addf %369, %368 : vector<2x128xf32>
    %371 = arith.divf %369, %370 : vector<2x128xf32>
    %372 = vector.extract_strided_slice %353 {offsets = [0, 384], sizes = [2, 128], strides = [1, 1]} : vector<2x512xf32> to vector<2x128xf32>
    %373 = math.tanh %372 : vector<2x128xf32>
    %374 = arith.mulf %359, %351 : vector<2x128xf32>
    %375 = arith.mulf %365, %373 : vector<2x128xf32>
    %376 = arith.addf %374, %375 : vector<2x128xf32>
    %377 = math.tanh %376 : vector<2x128xf32>
    %378 = arith.mulf %371, %377 : vector<2x128xf32>
    %379 = arith.index_cast %c7_i32 : i32 to index
    %c0_86 = arith.constant 0 : index
    %c0_87 = arith.constant 0 : index
    %380 = vector.load %arg5[%379, %c0_86, %c0_87] : memref<8x2x128xf32, #tpu.memory_space<vmem>>, vector<1x2x128xf32>
    %381 = vector.shape_cast %380 : vector<1x2x128xf32> to vector<2x128xf32>
    %382 = vector.shape_cast %371 : vector<2x128xf32> to vector<1x2x128xf32>
    tpu.vector_store %arg5[%379, %c0_86, %c0_87], %382 {strides = array<i32>} : memref<8x2x128xf32, #tpu.memory_space<vmem>>, vector<1x2x128xf32>,
    %c8_i32 = arith.constant 8 : i32
    %c0_88 = arith.constant 0 : index
    %c0_89 = arith.constant 0 : index
    %383 = vector.load %arg6[%c0_88, %c0_89] : memref<2x128xf32, #tpu.memory_space<vmem>>, vector<2x128xf32>
    tpu.vector_store %arg6[%c0_88, %c0_89], %378 {strides = array<i32>} : memref<2x128xf32, #tpu.memory_space<vmem>>, vector<2x128xf32>,
    %c0_90 = arith.constant 0 : index
    %c0_91 = arith.constant 0 : index
    %384 = vector.load %arg7[%c0_90, %c0_91] : memref<2x128xf32, #tpu.memory_space<vmem>>, vector<2x128xf32>
    tpu.vector_store %arg7[%c0_90, %c0_91], %376 {strides = array<i32>} : memref<2x128xf32, #tpu.memory_space<vmem>>, vector<2x128xf32>,
    return
  }
  func.func @transform_0(%arg0: i32) -> (i32, i32, i32) {
    %c0_i32 = arith.constant 0 : i32
    %c0_i32_0 = arith.constant 0 : i32
    %c0_i32_1 = arith.constant 0 : i32
    return %arg0, %c0_i32, %c0_i32_0 : i32, i32, i32
  }
  func.func @transform_1(%arg0: i32) -> (i32, i32, i32) {
    %c0_i32 = arith.constant 0 : i32
    %c0_i32_0 = arith.constant 0 : i32
    %c0_i32_1 = arith.constant 0 : i32
    return %arg0, %c0_i32, %c0_i32_0 : i32, i32, i32
  }
  func.func @transform_2(%arg0: i32) -> (i32, i32) {
    %c0_i32 = arith.constant 0 : i32
    %c0_i32_0 = arith.constant 0 : i32
    %c0_i32_1 = arith.constant 0 : i32
    return %c0_i32, %c0_i32_0 : i32, i32
  }
  func.func @transform_3(%arg0: i32) -> (i32, i32) {
    %c0_i32 = arith.constant 0 : i32
    %c0_i32_0 = arith.constant 0 : i32
    %c0_i32_1 = arith.constant 0 : i32
    return %c0_i32, %c0_i32_0 : i32, i32
  }
  func.func @transform_4(%arg0: i32) -> (i32, i32, i32) {
    %c0_i32 = arith.constant 0 : i32
    %c0_i32_0 = arith.constant 0 : i32
    %c0_i32_1 = arith.constant 0 : i32
    return %arg0, %c0_i32, %c0_i32_0 : i32, i32, i32
  }
  func.func @transform_5(%arg0: i32) -> (i32, i32) {
    %c0_i32 = arith.constant 0 : i32
    %c0_i32_0 = arith.constant 0 : i32
    %c0_i32_1 = arith.constant 0 : i32
    return %c0_i32, %c0_i32_0 : i32, i32
  }
  func.func @transform_6(%arg0: i32) -> (i32, i32) {
    %c0_i32 = arith.constant 0 : i32
    %c0_i32_0 = arith.constant 0 : i32
    %c0_i32_1 = arith.constant 0 : i32
    return %c0_i32, %c0_i32_0 : i32, i32
  }
}

</mosaic_0001>

<llo_original>
// kernel: tpu_custom_call.1
$region0: #{tpu_custom_call.1}
  #allocation0 [shape = 'u32[]', space=smem, size = 0x4, offset = 0x4, fixed_abs, tag = 'smem constant byte address 0x4 - core index']
  #allocation1 [shape = 'u32[144,128]{1,0:T(1,128)}', space=vmem, size = 0x12000, scoped, tag = 'internal scratch']
  %s0 = inlined_call_operand.hbm [shape: f32[8,2,512], index: 0, kind: input, shape index: {}]
  %s1 = inlined_call_operand.vmem [shape: f32[8,2,1], index: 1, kind: input, shape index: {}]
  %s2 = inlined_call_operand.hbm [shape: f32[256,640], index: 2, kind: input, shape index: {}]
  %s3 = inlined_call_operand.vmem [shape: f32[1,128], index: 3, kind: input, shape index: {}]
  %s4 = inlined_call_operand.hbm [shape: f32[8,2,128], index: 4, kind: output, shape index: {0}]
  %s5 = inlined_call_operand.hbm [shape: f32[2,128], index: 5, kind: output, shape index: {1}]
  %s6 = inlined_call_operand.hbm [shape: f32[2,128], index: 6, kind: output, shape index: {2}]
  %7 = xla_tuple %s4, %s5, %s6
  %s8 = sld [smem:[#allocation0]]
  $region54: #{tpu_custom_call.1} parent=0
    _
  %s10 = ssub.s32 1, %s8
  %s11 = scalar_select 0, %s10, %s8
  $region1: #{tpu_custom_call.1} parent=0
    #allocation2 [shape = 'u8[32768]{0}', space=vmem, size = 0x8000, scoped, tag = 'input window, operand 0, single buffered']
    #allocation3 [shape = 's32[1]{0}', space=sflag, size = 0x4, scoped, tag = 'scoped memory for tpu_custom_call.1']
    #allocation4 [shape = 's32[1]{0}', space=sflag, size = 0x4, scoped, tag = 'scoped memory for tpu_custom_call.1']
    #allocation5 [shape = 'u8[655360]{0}', space=vmem, size = 0xa0000, scoped, tag = 'input window, operand 2, single buffered']
    #allocation6 [shape = 's32[1]{0}', space=sflag, size = 0x4, scoped, tag = 'scoped memory for tpu_custom_call.1']
    #allocation7 [shape = 'u8[8192]{0}', space=vmem, size = 0x2000, scoped, tag = 'output window, operand 0, single buffered']
    #allocation8 [shape = 'u8[1024]{0}', space=vmem, size = 0x400, scoped, tag = 'output window, operand 1, single buffered']
    #allocation9 [shape = 's32[1]{0}', space=sflag, size = 0x4, scoped, tag = 'scoped memory for tpu_custom_call.1']
    #allocation10 [shape = 'u8[1024]{0}', space=vmem, size = 0x400, scoped, tag = 'output window, operand 2, single buffered']
    %12 = vsyncpa [#allocation3], 0
    %13 = vsyncpa [#allocation6], 0
    %14 = vsyncpa [#allocation4], 0
    %15 = vsyncpa [#allocation9], 0
    // Predicated region
    $region2: #{tpu_custom_call.1} parent=1 // pred_check
      _
    $region3: #{tpu_custom_call.1} parent=1 // pred_check_branch
      %17 = sbr.rel (0) target = $region5
    $region4: #{tpu_custom_call.1} parent=1 // pred_region
      %s19 = ssub.s32 1024, 1024
      %20 = vsyncadd [#allocation3], %s19
      %s21 = sshll.u32 [#allocation2], 4
      %s22 = int_to_ptr.vmem [resolvable:$true] %s21
      %27 = dma.hbm_to_vmem [thread:$0]  %s0, 1024, %s22, [#allocation3], 128, 128, 8
    $region5: #{tpu_custom_call.1} parent=1 // pred_fallthru
      _
    // Predicated region
    $region6: #{tpu_custom_call.1} parent=1 // pred_check
      _
    $region7: #{tpu_custom_call.1} parent=1 // pred_check_branch
      %29 = sbr.rel (0) target = $region9
    $region8: #{tpu_custom_call.1} parent=1 // pred_region
      _
    $region9: #{tpu_custom_call.1} parent=1 // pred_fallthru
      _
    // Predicated region
    $region10: #{tpu_custom_call.1} parent=1 // pred_check
      _
    $region11: #{tpu_custom_call.1} parent=1 // pred_check_branch
      %31 = sbr.rel (0) target = $region13
    $region12: #{tpu_custom_call.1} parent=1 // pred_region
      %s33 = ssub.s32 20480, 20480
      %34 = vsyncadd [#allocation6], %s33
      %s35 = sshll.u32 [#allocation5], 4
      %s36 = int_to_ptr.vmem [resolvable:$true] %s35
      %41 = dma.hbm_to_vmem [thread:$0]  %s2, 20480, %s36, [#allocation6], 640, 640, 40
    $region13: #{tpu_custom_call.1} parent=1 // pred_fallthru
      _
    // Predicated region
    $region14: #{tpu_custom_call.1} parent=1 // pred_check
      _
    $region15: #{tpu_custom_call.1} parent=1 // pred_check_branch
      %43 = sbr.rel (0) target = $region17
    $region16: #{tpu_custom_call.1} parent=1 // pred_region
      _
    $region17: #{tpu_custom_call.1} parent=1 // pred_fallthru
      _
    // Predicated region
    $region18: #{tpu_custom_call.1} parent=1 // pred_check
      _
    $region19: #{tpu_custom_call.1} parent=1 // pred_check_branch
      %45 = sbr.rel (0) target = $region21
    $region20: #{tpu_custom_call.1} parent=1 // pred_region
      %46 = dma.done [#allocation3], 1024
    $region21: #{tpu_custom_call.1} parent=1 // pred_fallthru
      _
    // Predicated region
    $region22: #{tpu_custom_call.1} parent=1 // pred_check
      _
    $region23: #{tpu_custom_call.1} parent=1 // pred_check_branch
      %48 = sbr.rel (0) target = $region25
    $region24: #{tpu_custom_call.1} parent=1 // pred_region
      %49 = dma.done [#allocation6], 20480
    $region25: #{tpu_custom_call.1} parent=1 // pred_fallthru
      _
    %p50 = scmp.eq.s32.totalorder 0, 0
    // Predicated region
    $region26: #{tpu_custom_call.1} parent=1 // pred_check
      %p51 = pneg %p50
    $region27: #{tpu_custom_call.1} parent=1 // pred_check_branch
      %53 = sbr.rel (%p51) target = $region29
    $region28: #{tpu_custom_call.1} parent=1 // pred_region
      %54 = vst [vmem:[#allocation8] sm:$0x3] 0.0
      %55 = vst [vmem:[#allocation10] sm:$0x3] 0.0
    $region29: #{tpu_custom_call.1} parent=1 // pred_fallthru
      _
    %v56 = vld [vmem:[#allocation5] sm:$0xff]
    %v57 = vld [vmem:[#allocation5 + $0x8] sm:$0xff]
    %v58 = vld [vmem:[#allocation5 + $0x10] sm:$0xff]
    %v59 = vld [vmem:[#allocation5 + $0x18] sm:$0xff]
    %v60 = vld [vmem:[#allocation5 + $0x20] sm:$0xff]
    %v61 = vld [vmem:[#allocation5 + $0x28] sm:$0xff]
    %v62 = vld [vmem:[#allocation5 + $0x30] sm:$0xff]
    %v63 = vld [vmem:[#allocation5 + $0x38] sm:$0xff]
    %v64 = vld [vmem:[#allocation5 + $0x40] sm:$0xff]
    %v65 = vld [vmem:[#allocation5 + $0x48] sm:$0xff]
    %v66 = vld [vmem:[#allocation5 + $0x50] sm:$0xff]
    %v67 = vld [vmem:[#allocation5 + $0x58] sm:$0xff]
    %v68 = vld [vmem:[#allocation5 + $0x60] sm:$0xff]
    %v69 = vld [vmem:[#allocation5 + $0x68] sm:$0xff]
    %v70 = vld [vmem:[#allocation5 + $0x70] sm:$0xff]
    %v71 = vld [vmem:[#allocation5 + $0x78] sm:$0xff]
    %v72 = vld [vmem:[#allocation5 + $0x80] sm:$0xff]
    %v73 = vld [vmem:[#allocation5 + $0x88] sm:$0xff]
    %v74 = vld [vmem:[#allocation5 + $0x90] sm:$0xff]
    %v75 = vld [vmem:[#allocation5 + $0x98] sm:$0xff]
    %v76 = vld [vmem:[#allocation5 + $0xa0] sm:$0xff]
    %v77 = vld [vmem:[#allocation5 + $0xa8] sm:$0xff]
    %v78 = vld [vmem:[#allocation5 + $0xb0] sm:$0xff]
    %v79 = vld [vmem:[#allocation5 + $0xb8] sm:$0xff]
    %v80 = vld [vmem:[#allocation5 + $0xc0] sm:$0xff]
    %v81 = vld [vmem:[#allocation5 + $0xc8] sm:$0xff]
    %v82 = vld [vmem:[#allocation5 + $0xd0] sm:$0xff]
    %v83 = vld [vmem:[#allocation5 + $0xd8] sm:$0xff]
    %v84 = vld [vmem:[#allocation5 + $0xe0] sm:$0xff]
    %v85 = vld [vmem:[#allocation5 + $0xe8] sm:$0xff]
    %v86 = vld [vmem:[#allocation5 + $0xf0] sm:$0xff]
    %v87 = vld [vmem:[#allocation5 + $0xf8] sm:$0xff]
    %v88 = vld [vmem:[#allocation5 + $0x100] sm:$0xff]
    %v89 = vld [vmem:[#allocation5 + $0x108] sm:$0xff]
    %v90 = vld [vmem:[#allocation5 + $0x110] sm:$0xff]
    %v91 = vld [vmem:[#allocation5 + $0x118] sm:$0xff]
    %v92 = vld [vmem:[#allocation5 + $0x120] sm:$0xff]
    %v93 = vld [vmem:[#allocation5 + $0x128] sm:$0xff]
    %v94 = vld [vmem:[#allocation5 + $0x130] sm:$0xff]
    %v95 = vld [vmem:[#allocation5 + $0x138] sm:$0xff]
    %v96 = vld [vmem:[#allocation5 + $0x140] sm:$0xff]
    %v97 = vld [vmem:[#allocation5 + $0x148] sm:$0xff]
    %v98 = vld [vmem:[#allocation5 + $0x150] sm:$0xff]
    %v99 = vld [vmem:[#allocation5 + $0x158] sm:$0xff]
    %v100 = vld [vmem:[#allocation5 + $0x160] sm:$0xff]
    %v101 = vld [vmem:[#allocation5 + $0x168] sm:$0xff]
    %v102 = vld [vmem:[#allocation5 + $0x170] sm:$0xff]
    %v103 = vld [vmem:[#allocation5 + $0x178] sm:$0xff]
    %v104 = vld [vmem:[#allocation5 + $0x180] sm:$0xff]
    %v105 = vld [vmem:[#allocation5 + $0x188] sm:$0xff]
    %v106 = vld [vmem:[#allocation5 + $0x190] sm:$0xff]
    %v107 = vld [vmem:[#allocation5 + $0x198] sm:$0xff]
    %v108 = vld [vmem:[#allocation5 + $0x1a0] sm:$0xff]
    %v109 = vld [vmem:[#allocation5 + $0x1a8] sm:$0xff]
    %v110 = vld [vmem:[#allocation5 + $0x1b0] sm:$0xff]
    %v111 = vld [vmem:[#allocation5 + $0x1b8] sm:$0xff]
    %v112 = vld [vmem:[#allocation5 + $0x1c0] sm:$0xff]
    %v113 = vld [vmem:[#allocation5 + $0x1c8] sm:$0xff]
    %v114 = vld [vmem:[#allocation5 + $0x1d0] sm:$0xff]
    %v115 = vld [vmem:[#allocation5 + $0x1d8] sm:$0xff]
    %v116 = vld [vmem:[#allocation5 + $0x1e0] sm:$0xff]
    %v117 = vld [vmem:[#allocation5 + $0x1e8] sm:$0xff]
    %v118 = vld [vmem:[#allocation5 + $0x1f0] sm:$0xff]
    %v119 = vld [vmem:[#allocation5 + $0x1f8] sm:$0xff]
    %v120 = vld [vmem:[#allocation5 + $0x200] sm:$0xff]
    %v121 = vld [vmem:[#allocation5 + $0x208] sm:$0xff]
    %v122 = vld [vmem:[#allocation5 + $0x210] sm:$0xff]
    %v123 = vld [vmem:[#allocation5 + $0x218] sm:$0xff]
    %v124 = vld [vmem:[#allocation5 + $0x220] sm:$0xff]
    %v125 = vld [vmem:[#allocation5 + $0x228] sm:$0xff]
    %v126 = vld [vmem:[#allocation5 + $0x230] sm:$0xff]
    %v127 = vld [vmem:[#allocation5 + $0x238] sm:$0xff]
    %v128 = vld [vmem:[#allocation5 + $0x240] sm:$0xff]
    %v129 = vld [vmem:[#allocation5 + $0x248] sm:$0xff]
    %v130 = vld [vmem:[#allocation5 + $0x250] sm:$0xff]
    %v131 = vld [vmem:[#allocation5 + $0x258] sm:$0xff]
    %v132 = vld [vmem:[#allocation5 + $0x260] sm:$0xff]
    %v133 = vld [vmem:[#allocation5 + $0x268] sm:$0xff]
    %v134 = vld [vmem:[#allocation5 + $0x270] sm:$0xff]
    %v135 = vld [vmem:[#allocation5 + $0x278] sm:$0xff]
    %v136 = vld [vmem:[#allocation5 + $0x280] sm:$0xff]
    %v137 = vld [vmem:[#allocation5 + $0x288] sm:$0xff]
    %v138 = vld [vmem:[#allocation5 + $0x290] sm:$0xff]
    %v139 = vld [vmem:[#allocation5 + $0x298] sm:$0xff]
    %v140 = vld [vmem:[#allocation5 + $0x2a0] sm:$0xff]
    %v141 = vld [vmem:[#allocation5 + $0x2a8] sm:$0xff]
    %v142 = vld [vmem:[#allocation5 + $0x2b0] sm:$0xff]
    %v143 = vld [vmem:[#allocation5 + $0x2b8] sm:$0xff]
    %v144 = vld [vmem:[#allocation5 + $0x2c0] sm:$0xff]
    %v145 = vld [vmem:[#allocation5 + $0x2c8] sm:$0xff]
    %v146 = vld [vmem:[#allocation5 + $0x2d0] sm:$0xff]
    %v147 = vld [vmem:[#allocation5 + $0x2d8] sm:$0xff]
    %v148 = vld [vmem:[#allocation5 + $0x2e0] sm:$0xff]
    %v149 = vld [vmem:[#allocation5 + $0x2e8] sm:$0xff]
    %v150 = vld [vmem:[#allocation5 + $0x2f0] sm:$0xff]
    %v151 = vld [vmem:[#allocation5 + $0x2f8] sm:$0xff]
    %v152 = vld [vmem:[#allocation5 + $0x300] sm:$0xff]
    %v153 = vld [vmem:[#allocation5 + $0x308] sm:$0xff]
    %v154 = vld [vmem:[#allocation5 + $0x310] sm:$0xff]
    %v155 = vld [vmem:[#allocation5 + $0x318] sm:$0xff]
    %v156 = vld [vmem:[#allocation5 + $0x320] sm:$0xff]
    %v157 = vld [vmem:[#allocation5 + $0x328] sm:$0xff]
    %v158 = vld [vmem:[#allocation5 + $0x330] sm:$0xff]
    %v159 = vld [vmem:[#allocation5 + $0x338] sm:$0xff]
    %v160 = vld [vmem:[#allocation5 + $0x340] sm:$0xff]
    %v161 = vld [vmem:[#allocation5 + $0x348] sm:$0xff]
    %v162 = vld [vmem:[#allocation5 + $0x350] sm:$0xff]
    %v163 = vld [vmem:[#allocation5 + $0x358] sm:$0xff]
    %v164 = vld [vmem:[#allocation5 + $0x360] sm:$0xff]
    %v165 = vld [vmem:[#allocation5 + $0x368] sm:$0xff]
    %v166 = vld [vmem:[#allocation5 + $0x370] sm:$0xff]
    %v167 = vld [vmem:[#allocation5 + $0x378] sm:$0xff]
    %v168 = vld [vmem:[#allocation5 + $0x380] sm:$0xff]
    %v169 = vld [vmem:[#allocation5 + $0x388] sm:$0xff]
    %v170 = vld [vmem:[#allocation5 + $0x390] sm:$0xff]
    %v171 = vld [vmem:[#allocation5 + $0x398] sm:$0xff]
    %v172 = vld [vmem:[#allocation5 + $0x3a0] sm:$0xff]
    %v173 = vld [vmem:[#allocation5 + $0x3a8] sm:$0xff]
    %v174 = vld [vmem:[#allocation5 + $0x3b0] sm:$0xff]
    %v175 = vld [vmem:[#allocation5 + $0x3b8] sm:$0xff]
    %v176 = vld [vmem:[#allocation5 + $0x3c0] sm:$0xff]
    %v177 = vld [vmem:[#allocation5 + $0x3c8] sm:$0xff]
    %v178 = vld [vmem:[#allocation5 + $0x3d0] sm:$0xff]
    %v179 = vld [vmem:[#allocation5 + $0x3d8] sm:$0xff]
    %v180 = vld [vmem:[#allocation5 + $0x3e0] sm:$0xff]
    %v181 = vld [vmem:[#allocation5 + $0x3e8] sm:$0xff]
    %v182 = vld [vmem:[#allocation5 + $0x3f0] sm:$0xff]
    %v183 = vld [vmem:[#allocation5 + $0x3f8] sm:$0xff]
    %v184 = vld [vmem:[#allocation5 + $0x400] sm:$0xff]
    %v185 = vld [vmem:[#allocation5 + $0x408] sm:$0xff]
    %v186 = vld [vmem:[#allocation5 + $0x410] sm:$0xff]
    %v187 = vld [vmem:[#allocation5 + $0x418] sm:$0xff]
    %v188 = vld [vmem:[#allocation5 + $0x420] sm:$0xff]
    %v189 = vld [vmem:[#allocation5 + $0x428] sm:$0xff]
    %v190 = vld [vmem:[#allocation5 + $0x430] sm:$0xff]
    %v191 = vld [vmem:[#allocation5 + $0x438] sm:$0xff]
    %v192 = vld [vmem:[#allocation5 + $0x440] sm:$0xff]
    %v193 = vld [vmem:[#allocation5 + $0x448] sm:$0xff]
    %v194 = vld [vmem:[#allocation5 + $0x450] sm:$0xff]
    %v195 = vld [vmem:[#allocation5 + $0x458] sm:$0xff]
    %v196 = vld [vmem:[#allocation5 + $0x460] sm:$0xff]
    %v197 = vld [vmem:[#allocation5 + $0x468] sm:$0xff]
    %v198 = vld [vmem:[#allocation5 + $0x470] sm:$0xff]
    %v199 = vld [vmem:[#allocation5 + $0x478] sm:$0xff]
    %v200 = vld [vmem:[#allocation5 + $0x480] sm:$0xff]
    %v201 = vld [vmem:[#allocation5 + $0x488] sm:$0xff]
    %v202 = vld [vmem:[#allocation5 + $0x490] sm:$0xff]
    %v203 = vld [vmem:[#allocation5 + $0x498] sm:$0xff]
    %v204 = vld [vmem:[#allocation5 + $0x4a0] sm:$0xff]
    %v205 = vld [vmem:[#allocation5 + $0x4a8] sm:$0xff]
    %v206 = vld [vmem:[#allocation5 + $0x4b0] sm:$0xff]
    %v207 = vld [vmem:[#allocation5 + $0x4b8] sm:$0xff]
    %v208 = vld [vmem:[#allocation5 + $0x4c0] sm:$0xff]
    %v209 = vld [vmem:[#allocation5 + $0x4c8] sm:$0xff]
    %v210 = vld [vmem:[#allocation5 + $0x4d0] sm:$0xff]
    %v211 = vld [vmem:[#allocation5 + $0x4d8] sm:$0xff]
    %v212 = vld [vmem:[#allocation5 + $0x4e0] sm:$0xff]
    %v213 = vld [vmem:[#allocation5 + $0x4e8] sm:$0xff]
    %v214 = vld [vmem:[#allocation5 + $0x4f0] sm:$0xff]
    %v215 = vld [vmem:[#allocation5 + $0x4f8] sm:$0xff]
    %v216 = vld [vmem:[%s3] sm:$0x1]
    %v217 = vld [vmem:[#allocation8] sm:$0x3]
    %v218 = vld [vmem:[#allocation10] sm:$0x3]
    %v219 = vld [vmem:[#allocation2] sm:$0xff]
    %v220 = vld [vmem:[%s1] sm:$0x3]
    %221 = vmatprep.subr.mxu0 %v57
    %222 = vmatpush1.msra.mxu0 %v56
    %223 = vmatprep.subr.mxu0 %v62
    %224 = vmatpush1.msra.mxu0 %v61
    %225 = vmatprep.subr.mxu0 %v67
    %226 = vmatpush1.msra.mxu0 %v66
    %227 = vmatprep.subr.mxu0 %v72
    %228 = vmatpush1.msra.mxu0 %v71
    %229 = vmatprep.subr.mxu0 %v77
    %230 = vmatpush1.msra.mxu0 %v76
    %231 = vmatprep.subr.mxu0 %v82
    %232 = vmatpush1.msra.mxu0 %v81
    %233 = vmatprep.subr.mxu0 %v87
    %234 = vmatpush1.msra.mxu0 %v86
    %235 = vmatprep.subr.mxu0 %v92
    %236 = vmatpush1.msra.mxu0 %v91
    %237 = vmatprep.subr.mxu0 %v97
    %238 = vmatpush1.msra.mxu0 %v96
    %239 = vmatprep.subr.mxu0 %v102
    %240 = vmatpush1.msra.mxu0 %v101
    %241 = vmatprep.subr.mxu0 %v107
    %242 = vmatpush1.msra.mxu0 %v106
    %243 = vmatprep.subr.mxu0 %v112
    %244 = vmatpush1.msra.mxu0 %v111
    %245 = vmatprep.subr.mxu0 %v117
    %246 = vmatpush1.msra.mxu0 %v116
    %247 = vmatprep.subr.mxu0 %v122
    %248 = vmatpush1.msra.mxu0 %v121
    %249 = vmatprep.subr.mxu0 %v127
    %250 = vmatpush1.msra.mxu0 %v126
    %251 = vmatprep.subr.mxu0 %v132
    %252 = vmatpush1.msra.mxu0 %v131
    %253 = vmatprep.subr.mxu0 %v137
    %254 = vmatpush1.msra.mxu0 %v136
    %255 = vmatprep.subr.mxu0 %v142
    %256 = vmatpush1.msra.mxu0 %v141
    %257 = vmatprep.subr.mxu0 %v147
    %258 = vmatpush1.msra.mxu0 %v146
    %259 = vmatprep.subr.mxu0 %v152
    %260 = vmatpush1.msra.mxu0 %v151
    %261 = vmatprep.subr.mxu0 %v157
    %262 = vmatpush1.msra.mxu0 %v156
    %263 = vmatprep.subr.mxu0 %v162
    %264 = vmatpush1.msra.mxu0 %v161
    %265 = vmatprep.subr.mxu0 %v167
    %266 = vmatpush1.msra.mxu0 %v166
    %267 = vmatprep.subr.mxu0 %v172
    %268 = vmatpush1.msra.mxu0 %v171
    %269 = vmatprep.subr.mxu0 %v177
    %270 = vmatpush1.msra.mxu0 %v176
    %271 = vmatprep.subr.mxu0 %v182
    %272 = vmatpush1.msra.mxu0 %v181
    %273 = vmatprep.subr.mxu0 %v187
    %274 = vmatpush1.msra.mxu0 %v186
    %275 = vmatprep.subr.mxu0 %v192
    %276 = vmatpush1.msra.mxu0 %v191
    %277 = vmatprep.subr.mxu0 %v197
    %278 = vmatpush1.msra.mxu0 %v196
    %279 = vmatprep.subr.mxu0 %v202
    %280 = vmatpush1.msra.mxu0 %v201
    %281 = vmatprep.subr.mxu0 %v207
    %282 = vmatpush1.msra.mxu0 %v206
    %283 = vmatprep.subr.mxu0 %v212
    %284 = vmatpush1.msra.mxu0 %v211
    %285 = vmatprep.mubr.f32.mxu0 %v217
    %286 = vmatmul.mubr.f32.gmra.mrb[0].mxu0 %v218
    %v287 = vpop.f32.mrb[0].mxu0
    %v288 = vadd.f32 0.0, %v287
    %v289 = vpop.f32.mrb[0].mxu0
    %v290 = vadd.f32 0.0, %v289
    %291 = vdwg.mxu0
    %292 = vmatprep.subr.mxu0 %v59
    %293 = vmatpush1.msra.mxu0 %v58
    %294 = vmatprep.subr.mxu0 %v64
    %295 = vmatpush1.msra.mxu0 %v63
    %296 = vmatprep.subr.mxu0 %v69
    %297 = vmatpush1.msra.mxu0 %v68
    %298 = vmatprep.subr.mxu0 %v74
    %299 = vmatpush1.msra.mxu0 %v73
    %300 = vmatprep.subr.mxu0 %v79
    %301 = vmatpush1.msra.mxu0 %v78
    %302 = vmatprep.subr.mxu0 %v84
    %303 = vmatpush1.msra.mxu0 %v83
    %304 = vmatprep.subr.mxu0 %v89
    %305 = vmatpush1.msra.mxu0 %v88
    %306 = vmatprep.subr.mxu0 %v94
    %307 = vmatpush1.msra.mxu0 %v93
    %308 = vmatprep.subr.mxu0 %v99
    %309 = vmatpush1.msra.mxu0 %v98
    %310 = vmatprep.subr.mxu0 %v104
    %311 = vmatpush1.msra.mxu0 %v103
    %312 = vmatprep.subr.mxu0 %v109
    %313 = vmatpush1.msra.mxu0 %v108
    %314 = vmatprep.subr.mxu0 %v114
    %315 = vmatpush1.msra.mxu0 %v113
    %316 = vmatprep.subr.mxu0 %v119
    %317 = vmatpush1.msra.mxu0 %v118
    %318 = vmatprep.subr.mxu0 %v124
    %319 = vmatpush1.msra.mxu0 %v123
    %320 = vmatprep.subr.mxu0 %v129
    %321 = vmatpush1.msra.mxu0 %v128
    %322 = vmatprep.subr.mxu0 %v134
    %323 = vmatpush1.msra.mxu0 %v133
    %324 = vmatprep.subr.mxu0 %v139
    %325 = vmatpush1.msra.mxu0 %v138
    %326 = vmatprep.subr.mxu0 %v144
    %327 = vmatpush1.msra.mxu0 %v143
    %328 = vmatprep.subr.mxu0 %v149
    %329 = vmatpush1.msra.mxu0 %v148
    %330 = vmatprep.subr.mxu0 %v154
    %331 = vmatpush1.msra.mxu0 %v153
    %332 = vmatprep.subr.mxu0 %v159
    %333 = vmatpush1.msra.mxu0 %v158
    %334 = vmatprep.subr.mxu0 %v164
    %335 = vmatpush1.msra.mxu0 %v163
    %336 = vmatprep.subr.mxu0 %v169
    %337 = vmatpush1.msra.mxu0 %v168
    %338 = vmatprep.subr.mxu0 %v174
    %339 = vmatpush1.msra.mxu0 %v173
    %340 = vmatprep.subr.mxu0 %v179
    %341 = vmatpush1.msra.mxu0 %v178
    %342 = vmatprep.subr.mxu0 %v184
    %343 = vmatpush1.msra.mxu0 %v183
    %344 = vmatprep.subr.mxu0 %v189
    %345 = vmatpush1.msra.mxu0 %v188
    %346 = vmatprep.subr.mxu0 %v194
    %347 = vmatpush1.msra.mxu0 %v193
    %348 = vmatprep.subr.mxu0 %v199
    %349 = vmatpush1.msra.mxu0 %v198
    %350 = vmatprep.subr.mxu0 %v204
    %351 = vmatpush1.msra.mxu0 %v203
    %352 = vmatprep.subr.mxu0 %v209
    %353 = vmatpush1.msra.mxu0 %v208
    %354 = vmatprep.subr.mxu0 %v214
    %355 = vmatpush1.msra.mxu0 %v213
    %356 = vmatprep.mubr.f32.mxu0 %v217
    %357 = vmatmul.mubr.f32.gmra.mrb[0].mxu0 %v218
    %v358 = vpop.f32.mrb[0].mxu0
    %v359 = vadd.f32 0.0, %v358
    %v360 = vpop.f32.mrb[0].mxu0
    %v361 = vadd.f32 0.0, %v360
    %362 = vdwg.mxu0
    %363 = vmatprep.subr.mxu0 0.0
    %364 = vmatpush1.msra.mxu0 %v60
    %365 = vmatprep.subr.mxu0 0.0
    %366 = vmatpush1.msra.mxu0 %v65
    %367 = vmatprep.subr.mxu0 0.0
    %368 = vmatpush1.msra.mxu0 %v70
    %369 = vmatprep.subr.mxu0 0.0
    %370 = vmatpush1.msra.mxu0 %v75
    %371 = vmatprep.subr.mxu0 0.0
    %372 = vmatpush1.msra.mxu0 %v80
    %373 = vmatprep.subr.mxu0 0.0
    %374 = vmatpush1.msra.mxu0 %v85
    %375 = vmatprep.subr.mxu0 0.0
    %376 = vmatpush1.msra.mxu0 %v90
    %377 = vmatprep.subr.mxu0 0.0
    %378 = vmatpush1.msra.mxu0 %v95
    %379 = vmatprep.subr.mxu0 0.0
    %380 = vmatpush1.msra.mxu0 %v100
    %381 = vmatprep.subr.mxu0 0.0
    %382 = vmatpush1.msra.mxu0 %v105
    %383 = vmatprep.subr.mxu0 0.0
    %384 = vmatpush1.msra.mxu0 %v110
    %385 = vmatprep.subr.mxu0 0.0
    %386 = vmatpush1.msra.mxu0 %v115
    %387 = vmatprep.subr.mxu0 0.0
    %388 = vmatpush1.msra.mxu0 %v120
    %389 = vmatprep.subr.mxu0 0.0
    %390 = vmatpush1.msra.mxu0 %v125
    %391 = vmatprep.subr.mxu0 0.0
    %392 = vmatpush1.msra.mxu0 %v130
    %393 = vmatprep.subr.mxu0 0.0
    %394 = vmatpush1.msra.mxu0 %v135
    %395 = vmatprep.subr.mxu0 0.0
    %396 = vmatpush1.msra.mxu0 %v140
    %397 = vmatprep.subr.mxu0 0.0
    %398 = vmatpush1.msra.mxu0 %v145
    %399 = vmatprep.subr.mxu0 0.0
    %400 = vmatpush1.msra.mxu0 %v150
    %401 = vmatprep.subr.mxu0 0.0
    %402 = vmatpush1.msra.mxu0 %v155
    %403 = vmatprep.subr.mxu0 0.0
    %404 = vmatpush1.msra.mxu0 %v160
    %405 = vmatprep.subr.mxu0 0.0
    %406 = vmatpush1.msra.mxu0 %v165
    %407 = vmatprep.subr.mxu0 0.0
    %408 = vmatpush1.msra.mxu0 %v170
    %409 = vmatprep.subr.mxu0 0.0
    %410 = vmatpush1.msra.mxu0 %v175
    %411 = vmatprep.subr.mxu0 0.0
    %412 = vmatpush1.msra.mxu0 %v180
    %413 = vmatprep.subr.mxu0 0.0
    %414 = vmatpush1.msra.mxu0 %v185
    %415 = vmatprep.subr.mxu0 0.0
    %416 = vmatpush1.msra.mxu0 %v190
    %417 = vmatprep.subr.mxu0 0.0
    %418 = vmatpush1.msra.mxu0 %v195
    %419 = vmatprep.subr.mxu0 0.0
    %420 = vmatpush1.msra.mxu0 %v200
    %421 = vmatprep.subr.mxu0 0.0
    %422 = vmatpush1.msra.mxu0 %v205
    %423 = vmatprep.subr.mxu0 0.0
    %424 = vmatpush1.msra.mxu0 %v210
    %425 = vmatprep.subr.mxu0 0.0
    %426 = vmatpush1.msra.mxu0 %v215
    %427 = vmatprep.mubr.f32.mxu0 %v217
    %428 = vmatmul.mubr.f32.gmra.mrb[0].mxu0 %v218
    %v429 = vpop.f32.mrb[0].mxu0
    %v430 = vadd.f32 0.0, %v429
    %v431 = vpop.f32.mrb[0].mxu0
    %432 = vdwg.mxu0
    %v434 = vlaneseq
    %v435 = vshrl.u32 %v434, 7
    %v436 = vsub.s32 0, %v435
    %v437 = vrot.slane %v216, %v436
    %v439 = vadd.f32 %v288, %v437
    %v440 = vtanh.pop %v439
    %v441 = vsub.f32 %v218, %v440
    %443 = vset.pattern.permute.xlu0 0
    %444 = vperm.xlu0 %443, %v220
    %v445 = vpop.permute.xlu0 %444
    %v447 = vmul.f32 %v440, %v445
    %v448 = vadd.f32 %v441, %v447
    %v450 = vcombine.high %v219, %v219
    %v452 = vunpack.c.l.s4 1983009808
    %v453 = vunpack.c.0.s8 %v452
    %v454 = vlaneseq
    %v455 = vshrl.u32 %v454, 7
    %v456 = vsub.s32 %v453, %v455
    %v457 = vrot.slane %v219, %v456
    %v459 = vunpack.c.l.s4 1983009808
    %v460 = vunpack.c.0.s8 %v459
    %v461 = vlaneseq
    %v462 = vshrl.u32 %v461, 7
    %v463 = vsub.s32 %v460, %v462
    %v464 = vrot.slane %v450, %v463
    %v465 = vcombine.high %v457, %v457
    %v466 = vcombine.high %v464, %v464
    %v471 = vadd.f32 %v290, %v457
    %v472 = vadd.f32 %v359, %v465
    %v473 = vadd.f32 %v361, %v464
    %v474 = vadd.f32 %v430, %v466
    %v475 = vxor.u32 %v471, 2147483648
    %v476 = vmul.f32 %v475, 1.442695
    %v477 = vpow.pop %v476
    %v478 = vadd.f32 %v477, 1.0
    %v479 = vrcp.pop %v478
    %v480 = vmul.f32 1.0, %v479
    %v481 = vxor.u32 %v472, 2147483648
    %v482 = vmul.f32 %v481, 1.442695
    %v483 = vpow.pop %v482
    %v484 = vadd.f32 %v483, 1.0
    %v485 = vrcp.pop %v484
    %v486 = vmul.f32 1.0, %v485
    %v487 = vxor.u32 %v473, 2147483648
    %v488 = vmul.f32 %v487, 1.442695
    %v489 = vpow.pop %v488
    %v490 = vadd.f32 %v489, 1.0
    %v491 = vrcp.pop %v490
    %v492 = vmul.f32 1.0, %v491
    %v493 = vtanh.pop %v474
    %v494 = vmul.f32 %v480, %v448
    %v495 = vmul.f32 %v486, %v493
    %v496 = vadd.f32 %v494, %v495
    %v497 = vtanh.pop %v496
    %v498 = vmul.f32 %v492, %v497
    %499 = vst [vmem:[#allocation7] sm:$0x3] %v492
    %s500 = scalar_lea.vmem [#allocation2], 8
    %v501 = vld [vmem:[%s500] sm:$0xff]
    %s502 = scalar_lea.vmem %s1, 2
    %v503 = vld [vmem:[%s502] sm:$0x3]
    %504 = vmatprep.subr.mxu0 %v57
    %505 = vmatpush1.msra.mxu0 %v56
    %506 = vmatprep.subr.mxu0 %v62
    %507 = vmatpush1.msra.mxu0 %v61
    %508 = vmatprep.subr.mxu0 %v67
    %509 = vmatpush1.msra.mxu0 %v66
    %510 = vmatprep.subr.mxu0 %v72
    %511 = vmatpush1.msra.mxu0 %v71
    %512 = vmatprep.subr.mxu0 %v77
    %513 = vmatpush1.msra.mxu0 %v76
    %514 = vmatprep.subr.mxu0 %v82
    %515 = vmatpush1.msra.mxu0 %v81
    %516 = vmatprep.subr.mxu0 %v87
    %517 = vmatpush1.msra.mxu0 %v86
    %518 = vmatprep.subr.mxu0 %v92
    %519 = vmatpush1.msra.mxu0 %v91
    %520 = vmatprep.subr.mxu0 %v97
    %521 = vmatpush1.msra.mxu0 %v96
    %522 = vmatprep.subr.mxu0 %v102
    %523 = vmatpush1.msra.mxu0 %v101
    %524 = vmatprep.subr.mxu0 %v107
    %525 = vmatpush1.msra.mxu0 %v106
    %526 = vmatprep.subr.mxu0 %v112
    %527 = vmatpush1.msra.mxu0 %v111
    %528 = vmatprep.subr.mxu0 %v117
    %529 = vmatpush1.msra.mxu0 %v116
    %530 = vmatprep.subr.mxu0 %v122
    %531 = vmatpush1.msra.mxu0 %v121
    %532 = vmatprep.subr.mxu0 %v127
    %533 = vmatpush1.msra.mxu0 %v126
    %534 = vmatprep.subr.mxu0 %v132
    %535 = vmatpush1.msra.mxu0 %v131
    %536 = vmatprep.subr.mxu0 %v137
    %537 = vmatpush1.msra.mxu0 %v136
    %538 = vmatprep.subr.mxu0 %v142
    %539 = vmatpush1.msra.mxu0 %v141
    %540 = vmatprep.subr.mxu0 %v147
    %541 = vmatpush1.msra.mxu0 %v146
    %542 = vmatprep.subr.mxu0 %v152
    %543 = vmatpush1.msra.mxu0 %v151
    %544 = vmatprep.subr.mxu0 %v157
    %545 = vmatpush1.msra.mxu0 %v156
    %546 = vmatprep.subr.mxu0 %v162
    %547 = vmatpush1.msra.mxu0 %v161
    %548 = vmatprep.subr.mxu0 %v167
    %549 = vmatpush1.msra.mxu0 %v166
    %550 = vmatprep.subr.mxu0 %v172
    %551 = vmatpush1.msra.mxu0 %v171
    %552 = vmatprep.subr.mxu0 %v177
    %553 = vmatpush1.msra.mxu0 %v176
    %554 = vmatprep.subr.mxu0 %v182
    %555 = vmatpush1.msra.mxu0 %v181
    %556 = vmatprep.subr.mxu0 %v187
    %557 = vmatpush1.msra.mxu0 %v186
    %558 = vmatprep.subr.mxu0 %v192
    %559 = vmatpush1.msra.mxu0 %v191
    %560 = vmatprep.subr.mxu0 %v197
    %561 = vmatpush1.msra.mxu0 %v196
    %562 = vmatprep.subr.mxu0 %v202
    %563 = vmatpush1.msra.mxu0 %v201
    %564 = vmatprep.subr.mxu0 %v207
    %565 = vmatpush1.msra.mxu0 %v206
    %566 = vmatprep.subr.mxu0 %v212
    %567 = vmatpush1.msra.mxu0 %v211
    %568 = vmatprep.mubr.f32.mxu0 %v498
    %569 = vmatmul.mubr.f32.gmra.mrb[0].mxu0 %v496
    %v570 = vpop.f32.mrb[0].mxu0
    %v571 = vadd.f32 0.0, %v570
    %v572 = vpop.f32.mrb[0].mxu0
    %v573 = vadd.f32 0.0, %v572
    %574 = vdwg.mxu0
    %575 = vmatprep.subr.mxu0 %v59
    %576 = vmatpush1.msra.mxu0 %v58
    %577 = vmatprep.subr.mxu0 %v64
    %578 = vmatpush1.msra.mxu0 %v63
    %579 = vmatprep.subr.mxu0 %v69
    %580 = vmatpush1.msra.mxu0 %v68
    %581 = vmatprep.subr.mxu0 %v74
    %582 = vmatpush1.msra.mxu0 %v73
    %583 = vmatprep.subr.mxu0 %v79
    %584 = vmatpush1.msra.mxu0 %v78
    %585 = vmatprep.subr.mxu0 %v84
    %586 = vmatpush1.msra.mxu0 %v83
    %587 = vmatprep.subr.mxu0 %v89
    %588 = vmatpush1.msra.mxu0 %v88
    %589 = vmatprep.subr.mxu0 %v94
    %590 = vmatpush1.msra.mxu0 %v93
    %591 = vmatprep.subr.mxu0 %v99
    %592 = vmatpush1.msra.mxu0 %v98
    %593 = vmatprep.subr.mxu0 %v104
    %594 = vmatpush1.msra.mxu0 %v103
    %595 = vmatprep.subr.mxu0 %v109
    %596 = vmatpush1.msra.mxu0 %v108
    %597 = vmatprep.subr.mxu0 %v114
    %598 = vmatpush1.msra.mxu0 %v113
    %599 = vmatprep.subr.mxu0 %v119
    %600 = vmatpush1.msra.mxu0 %v118
    %601 = vmatprep.subr.mxu0 %v124
    %602 = vmatpush1.msra.mxu0 %v123
    %603 = vmatprep.subr.mxu0 %v129
    %604 = vmatpush1.msra.mxu0 %v128
    %605 = vmatprep.subr.mxu0 %v134
    %606 = vmatpush1.msra.mxu0 %v133
    %607 = vmatprep.subr.mxu0 %v139
    %608 = vmatpush1.msra.mxu0 %v138
    %609 = vmatprep.subr.mxu0 %v144
    %610 = vmatpush1.msra.mxu0 %v143
    %611 = vmatprep.subr.mxu0 %v149
    %612 = vmatpush1.msra.mxu0 %v148
    %613 = vmatprep.subr.mxu0 %v154
    %614 = vmatpush1.msra.mxu0 %v153
    %615 = vmatprep.subr.mxu0 %v159
    %616 = vmatpush1.msra.mxu0 %v158
    %617 = vmatprep.subr.mxu0 %v164
    %618 = vmatpush1.msra.mxu0 %v163
    %619 = vmatprep.subr.mxu0 %v169
    %620 = vmatpush1.msra.mxu0 %v168
    %621 = vmatprep.subr.mxu0 %v174
    %622 = vmatpush1.msra.mxu0 %v173
    %623 = vmatprep.subr.mxu0 %v179
    %624 = vmatpush1.msra.mxu0 %v178
    %625 = vmatprep.subr.mxu0 %v184
    %626 = vmatpush1.msra.mxu0 %v183
    %627 = vmatprep.subr.mxu0 %v189
    %628 = vmatpush1.msra.mxu0 %v188
    %629 = vmatprep.subr.mxu0 %v194
    %630 = vmatpush1.msra.mxu0 %v193
    %631 = vmatprep.subr.mxu0 %v199
    %632 = vmatpush1.msra.mxu0 %v198
    %633 = vmatprep.subr.mxu0 %v204
    %634 = vmatpush1.msra.mxu0 %v203
    %635 = vmatprep.subr.mxu0 %v209
    %636 = vmatpush1.msra.mxu0 %v208
    %637 = vmatprep.subr.mxu0 %v214
    %638 = vmatpush1.msra.mxu0 %v213
    %639 = vmatprep.mubr.f32.mxu0 %v498
    %640 = vmatmul.mubr.f32.gmra.mrb[0].mxu0 %v496
    %v641 = vpop.f32.mrb[0].mxu0
    %v642 = vadd.f32 0.0, %v641
    %v643 = vpop.f32.mrb[0].mxu0
    %v644 = vadd.f32 0.0, %v643
    %645 = vdwg.mxu0
    %646 = vmatprep.subr.mxu0 0.0
    %647 = vmatpush1.msra.mxu0 %v60
    %648 = vmatprep.subr.mxu0 0.0
    %649 = vmatpush1.msra.mxu0 %v65
    %650 = vmatprep.subr.mxu0 0.0
    %651 = vmatpush1.msra.mxu0 %v70
    %652 = vmatprep.subr.mxu0 0.0
    %653 = vmatpush1.msra.mxu0 %v75
    %654 = vmatprep.subr.mxu0 0.0
    %655 = vmatpush1.msra.mxu0 %v80
    %656 = vmatprep.subr.mxu0 0.0
    %657 = vmatpush1.msra.mxu0 %v85
    %658 = vmatprep.subr.mxu0 0.0
    %659 = vmatpush1.msra.mxu0 %v90
    %660 = vmatprep.subr.mxu0 0.0
    %661 = vmatpush1.msra.mxu0 %v95
    %662 = vmatprep.subr.mxu0 0.0
    %663 = vmatpush1.msra.mxu0 %v100
    %664 = vmatprep.subr.mxu0 0.0
    %665 = vmatpush1.msra.mxu0 %v105
    %666 = vmatprep.subr.mxu0 0.0
    %667 = vmatpush1.msra.mxu0 %v110
    %668 = vmatprep.subr.mxu0 0.0
    %669 = vmatpush1.msra.mxu0 %v115
    %670 = vmatprep.subr.mxu0 0.0
    %671 = vmatpush1.msra.mxu0 %v120
    %672 = vmatprep.subr.mxu0 0.0
    %673 = vmatpush1.msra.mxu0 %v125
    %674 = vmatprep.subr.mxu0 0.0
    %675 = vmatpush1.msra.mxu0 %v130
    %676 = vmatprep.subr.mxu0 0.0
    %677 = vmatpush1.msra.mxu0 %v135
    %678 = vmatprep.subr.mxu0 0.0
    %679 = vmatpush1.msra.mxu0 %v140
    %680 = vmatprep.subr.mxu0 0.0
    %681 = vmatpush1.msra.mxu0 %v145
    %682 = vmatprep.subr.mxu0 0.0
    %683 = vmatpush1.msra.mxu0 %v150
    %684 = vmatprep.subr.mxu0 0.0
    %685 = vmatpush1.msra.mxu0 %v155
    %686 = vmatprep.subr.mxu0 0.0
    %687 = vmatpush1.msra.mxu0 %v160
    %688 = vmatprep.subr.mxu0 0.0
    %689 = vmatpush1.msra.mxu0 %v165
    %690 = vmatprep.subr.mxu0 0.0
    %691 = vmatpush1.msra.mxu0 %v170
    %692 = vmatprep.subr.mxu0 0.0
    %693 = vmatpush1.msra.mxu0 %v175
    %694 = vmatprep.subr.mxu0 0.0
    %695 = vmatpush1.msra.mxu0 %v180
    %696 = vmatprep.subr.mxu0 0.0
    %697 = vmatpush1.msra.mxu0 %v185
    %698 = vmatprep.subr.mxu0 0.0
    %699 = vmatpush1.msra.mxu0 %v190
    %700 = vmatprep.subr.mxu0 0.0
    %701 = vmatpush1.msra.mxu0 %v195
    %702 = vmatprep.subr.mxu0 0.0
    %703 = vmatpush1.msra.mxu0 %v200
    %704 = vmatprep.subr.mxu0 0.0
    %705 = vmatpush1.msra.mxu0 %v205
    %706 = vmatprep.subr.mxu0 0.0
    %707 = vmatpush1.msra.mxu0 %v210
    %708 = vmatprep.subr.mxu0 0.0
    %709 = vmatpush1.msra.mxu0 %v215
    %710 = vmatprep.mubr.f32.mxu0 %v498
    %711 = vmatmul.mubr.f32.gmra.mrb[0].mxu0 %v496
    %v712 = vpop.f32.mrb[0].mxu0
    %v713 = vadd.f32 0.0, %v712
    %v714 = vpop.f32.mrb[0].mxu0
    %715 = vdwg.mxu0
    %v716 = vadd.f32 %v571, %v437
    %v717 = vtanh.pop %v716
    %v718 = vsub.f32 %v496, %v717
    %720 = vset.pattern.permute.xlu0 0
    %721 = vperm.xlu0 %720, %v503
    %v722 = vpop.permute.xlu0 %721
    %v724 = vmul.f32 %v717, %v722
    %v725 = vadd.f32 %v718, %v724
    %v727 = vcombine.high %v501, %v501
    %v729 = vunpack.c.l.s4 1983009808
    %v730 = vunpack.c.0.s8 %v729
    %v731 = vlaneseq
    %v732 = vshrl.u32 %v731, 7
    %v733 = vsub.s32 %v730, %v732
    %v734 = vrot.slane %v501, %v733
    %v736 = vunpack.c.l.s4 1983009808
    %v737 = vunpack.c.0.s8 %v736
    %v738 = vlaneseq
    %v739 = vshrl.u32 %v738, 7
    %v740 = vsub.s32 %v737, %v739
    %v741 = vrot.slane %v727, %v740
    %v742 = vcombine.high %v734, %v734
    %v743 = vcombine.high %v741, %v741
    %v748 = vadd.f32 %v573, %v734
    %v749 = vadd.f32 %v642, %v742
    %v750 = vadd.f32 %v644, %v741
    %v751 = vadd.f32 %v713, %v743
    %v752 = vxor.u32 %v748, 2147483648
    %v753 = vmul.f32 %v752, 1.442695
    %v754 = vpow.pop %v753
    %v755 = vadd.f32 %v754, 1.0
    %v756 = vrcp.pop %v755
    %v757 = vmul.f32 1.0, %v756
    %v758 = vxor.u32 %v749, 2147483648
    %v759 = vmul.f32 %v758, 1.442695
    %v760 = vpow.pop %v759
    %v761 = vadd.f32 %v760, 1.0
    %v762 = vrcp.pop %v761
    %v763 = vmul.f32 1.0, %v762
    %v764 = vxor.u32 %v750, 2147483648
    %v765 = vmul.f32 %v764, 1.442695
    %v766 = vpow.pop %v765
    %v767 = vadd.f32 %v766, 1.0
    %v768 = vrcp.pop %v767
    %v769 = vmul.f32 1.0, %v768
    %v770 = vtanh.pop %v751
    %v771 = vmul.f32 %v757, %v725
    %v772 = vmul.f32 %v763, %v770
    %v773 = vadd.f32 %v771, %v772
    %v774 = vtanh.pop %v773
    %v775 = vmul.f32 %v769, %v774
    %s776 = scalar_lea.vmem [#allocation7], 2
    %777 = vst [vmem:[%s776] sm:$0x3] %v769
    %s778 = scalar_lea.vmem [#allocation2], 16
    %v779 = vld [vmem:[%s778] sm:$0xff]
    %s780 = scalar_lea.vmem %s1, 4
    %v781 = vld [vmem:[%s780] sm:$0x3]
    %782 = vmatprep.subr.mxu0 %v57
    %783 = vmatpush1.msra.mxu0 %v56
    %784 = vmatprep.subr.mxu0 %v62
    %785 = vmatpush1.msra.mxu0 %v61
    %786 = vmatprep.subr.mxu0 %v67
    %787 = vmatpush1.msra.mxu0 %v66
    %788 = vmatprep.subr.mxu0 %v72
    %789 = vmatpush1.msra.mxu0 %v71
    %790 = vmatprep.subr.mxu0 %v77
    %791 = vmatpush1.msra.mxu0 %v76
    %792 = vmatprep.subr.mxu0 %v82
    %793 = vmatpush1.msra.mxu0 %v81
    %794 = vmatprep.subr.mxu0 %v87
    %795 = vmatpush1.msra.mxu0 %v86
    %796 = vmatprep.subr.mxu0 %v92
    %797 = vmatpush1.msra.mxu0 %v91
    %798 = vmatprep.subr.mxu0 %v97
    %799 = vmatpush1.msra.mxu0 %v96
    %800 = vmatprep.subr.mxu0 %v102
    %801 = vmatpush1.msra.mxu0 %v101
    %802 = vmatprep.subr.mxu0 %v107
    %803 = vmatpush1.msra.mxu0 %v106
    %804 = vmatprep.subr.mxu0 %v112
    %805 = vmatpush1.msra.mxu0 %v111
    %806 = vmatprep.subr.mxu0 %v117
    %807 = vmatpush1.msra.mxu0 %v116
    %808 = vmatprep.subr.mxu0 %v122
    %809 = vmatpush1.msra.mxu0 %v121
    %810 = vmatprep.subr.mxu0 %v127
    %811 = vmatpush1.msra.mxu0 %v126
    %812 = vmatprep.subr.mxu0 %v132
    %813 = vmatpush1.msra.mxu0 %v131
    %814 = vmatprep.subr.mxu0 %v137
    %815 = vmatpush1.msra.mxu0 %v136
    %816 = vmatprep.subr.mxu0 %v142
    %817 = vmatpush1.msra.mxu0 %v141
    %818 = vmatprep.subr.mxu0 %v147
    %819 = vmatpush1.msra.mxu0 %v146
    %820 = vmatprep.subr.mxu0 %v152
    %821 = vmatpush1.msra.mxu0 %v151
    %822 = vmatprep.subr.mxu0 %v157
    %823 = vmatpush1.msra.mxu0 %v156
    %824 = vmatprep.subr.mxu0 %v162
    %825 = vmatpush1.msra.mxu0 %v161
    %826 = vmatprep.subr.mxu0 %v167
    %827 = vmatpush1.msra.mxu0 %v166
    %828 = vmatprep.subr.mxu0 %v172
    %829 = vmatpush1.msra.mxu0 %v171
    %830 = vmatprep.subr.mxu0 %v177
    %831 = vmatpush1.msra.mxu0 %v176
    %832 = vmatprep.subr.mxu0 %v182
    %833 = vmatpush1.msra.mxu0 %v181
    %834 = vmatprep.subr.mxu0 %v187
    %835 = vmatpush1.msra.mxu0 %v186
    %836 = vmatprep.subr.mxu0 %v192
    %837 = vmatpush1.msra.mxu0 %v191
    %838 = vmatprep.subr.mxu0 %v197
    %839 = vmatpush1.msra.mxu0 %v196
    %840 = vmatprep.subr.mxu0 %v202
    %841 = vmatpush1.msra.mxu0 %v201
    %842 = vmatprep.subr.mxu0 %v207
    %843 = vmatpush1.msra.mxu0 %v206
    %844 = vmatprep.subr.mxu0 %v212
    %845 = vmatpush1.msra.mxu0 %v211
    %846 = vmatprep.mubr.f32.mxu0 %v775
    %847 = vmatmul.mubr.f32.gmra.mrb[0].mxu0 %v773
    %v848 = vpop.f32.mrb[0].mxu0
    %v849 = vadd.f32 0.0, %v848
    %v850 = vpop.f32.mrb[0].mxu0
    %v851 = vadd.f32 0.0, %v850
    %852 = vdwg.mxu0
    %853 = vmatprep.subr.mxu0 %v59
    %854 = vmatpush1.msra.mxu0 %v58
    %855 = vmatprep.subr.mxu0 %v64
    %856 = vmatpush1.msra.mxu0 %v63
    %857 = vmatprep.subr.mxu0 %v69
    %858 = vmatpush1.msra.mxu0 %v68
    %859 = vmatprep.subr.mxu0 %v74
    %860 = vmatpush1.msra.mxu0 %v73
    %861 = vmatprep.subr.mxu0 %v79
    %862 = vmatpush1.msra.mxu0 %v78
    %863 = vmatprep.subr.mxu0 %v84
    %864 = vmatpush1.msra.mxu0 %v83
    %865 = vmatprep.subr.mxu0 %v89
    %866 = vmatpush1.msra.mxu0 %v88
    %867 = vmatprep.subr.mxu0 %v94
    %868 = vmatpush1.msra.mxu0 %v93
    %869 = vmatprep.subr.mxu0 %v99
    %870 = vmatpush1.msra.mxu0 %v98
    %871 = vmatprep.subr.mxu0 %v104
    %872 = vmatpush1.msra.mxu0 %v103
    %873 = vmatprep.subr.mxu0 %v109
    %874 = vmatpush1.msra.mxu0 %v108
    %875 = vmatprep.subr.mxu0 %v114
    %876 = vmatpush1.msra.mxu0 %v113
    %877 = vmatprep.subr.mxu0 %v119
    %878 = vmatpush1.msra.mxu0 %v118
    %879 = vmatprep.subr.mxu0 %v124
    %880 = vmatpush1.msra.mxu0 %v123
    %881 = vmatprep.subr.mxu0 %v129
    %882 = vmatpush1.msra.mxu0 %v128
    %883 = vmatprep.subr.mxu0 %v134
    %884 = vmatpush1.msra.mxu0 %v133
    %885 = vmatprep.subr.mxu0 %v139
    %886 = vmatpush1.msra.mxu0 %v138
    %887 = vmatprep.subr.mxu0 %v144
    %888 = vmatpush1.msra.mxu0 %v143
    %889 = vmatprep.subr.mxu0 %v149
    %890 = vmatpush1.msra.mxu0 %v148
    %891 = vmatprep.subr.mxu0 %v154
    %892 = vmatpush1.msra.mxu0 %v153
    %893 = vmatprep.subr.mxu0 %v159
    %894 = vmatpush1.msra.mxu0 %v158
    %895 = vmatprep.subr.mxu0 %v164
    %896 = vmatpush1.msra.mxu0 %v163
    %897 = vmatprep.subr.mxu0 %v169
    %898 = vmatpush1.msra.mxu0 %v168
    %899 = vmatprep.subr.mxu0 %v174
    %900 = vmatpush1.msra.mxu0 %v173
    %901 = vmatprep.subr.mxu0 %v179
    %902 = vmatpush1.msra.mxu0 %v178
    %903 = vmatprep.subr.mxu0 %v184
    %904 = vmatpush1.msra.mxu0 %v183
    %905 = vmatprep.subr.mxu0 %v189
    %906 = vmatpush1.msra.mxu0 %v188
    %907 = vmatprep.subr.mxu0 %v194
    %908 = vmatpush1.msra.mxu0 %v193
    %909 = vmatprep.subr.mxu0 %v199
    %910 = vmatpush1.msra.mxu0 %v198
    %911 = vmatprep.subr.mxu0 %v204
    %912 = vmatpush1.msra.mxu0 %v203
    %913 = vmatprep.subr.mxu0 %v209
    %914 = vmatpush1.msra.mxu0 %v208
    %915 = vmatprep.subr.mxu0 %v214
    %916 = vmatpush1.msra.mxu0 %v213
    %917 = vmatprep.mubr.f32.mxu0 %v775
    %918 = vmatmul.mubr.f32.gmra.mrb[0].mxu0 %v773
    %v919 = vpop.f32.mrb[0].mxu0
    %v920 = vadd.f32 0.0, %v919
    %v921 = vpop.f32.mrb[0].mxu0
    %v922 = vadd.f32 0.0, %v921
    %923 = vdwg.mxu0
    %924 = vmatprep.subr.mxu0 0.0
    %925 = vmatpush1.msra.mxu0 %v60
    %926 = vmatprep.subr.mxu0 0.0
    %927 = vmatpush1.msra.mxu0 %v65
    %928 = vmatprep.subr.mxu0 0.0
    %929 = vmatpush1.msra.mxu0 %v70
    %930 = vmatprep.subr.mxu0 0.0
    %931 = vmatpush1.msra.mxu0 %v75
    %932 = vmatprep.subr.mxu0 0.0
    %933 = vmatpush1.msra.mxu0 %v80
    %934 = vmatprep.subr.mxu0 0.0
    %935 = vmatpush1.msra.mxu0 %v85
    %936 = vmatprep.subr.mxu0 0.0
    %937 = vmatpush1.msra.mxu0 %v90
    %938 = vmatprep.subr.mxu0 0.0
    %939 = vmatpush1.msra.mxu0 %v95
    %940 = vmatprep.subr.mxu0 0.0
    %941 = vmatpush1.msra.mxu0 %v100
    %942 = vmatprep.subr.mxu0 0.0
    %943 = vmatpush1.msra.mxu0 %v105
    %944 = vmatprep.subr.mxu0 0.0
    %945 = vmatpush1.msra.mxu0 %v110
    %946 = vmatprep.subr.mxu0 0.0
    %947 = vmatpush1.msra.mxu0 %v115
    %948 = vmatprep.subr.mxu0 0.0
    %949 = vmatpush1.msra.mxu0 %v120
    %950 = vmatprep.subr.mxu0 0.0
    %951 = vmatpush1.msra.mxu0 %v125
    %952 = vmatprep.subr.mxu0 0.0
    %953 = vmatpush1.msra.mxu0 %v130
    %954 = vmatprep.subr.mxu0 0.0
    %955 = vmatpush1.msra.mxu0 %v135
    %956 = vmatprep.subr.mxu0 0.0
    %957 = vmatpush1.msra.mxu0 %v140
    %958 = vmatprep.subr.mxu0 0.0
    %959 = vmatpush1.msra.mxu0 %v145
    %960 = vmatprep.subr.mxu0 0.0
    %961 = vmatpush1.msra.mxu0 %v150
    %962 = vmatprep.subr.mxu0 0.0
    %963 = vmatpush1.msra.mxu0 %v155
    %964 = vmatprep.subr.mxu0 0.0
    %965 = vmatpush1.msra.mxu0 %v160
    %966 = vmatprep.subr.mxu0 0.0
    %967 = vmatpush1.msra.mxu0 %v165
    %968 = vmatprep.subr.mxu0 0.0
    %969 = vmatpush1.msra.mxu0 %v170
    %970 = vmatprep.subr.mxu0 0.0
    %971 = vmatpush1.msra.mxu0 %v175
    %972 = vmatprep.subr.mxu0 0.0
    %973 = vmatpush1.msra.mxu0 %v180
    %974 = vmatprep.subr.mxu0 0.0
    %975 = vmatpush1.msra.mxu0 %v185
    %976 = vmatprep.subr.mxu0 0.0
    %977 = vmatpush1.msra.mxu0 %v190
    %978 = vmatprep.subr.mxu0 0.0
    %979 = vmatpush1.msra.mxu0 %v195
    %980 = vmatprep.subr.mxu0 0.0
    %981 = vmatpush1.msra.mxu0 %v200
    %982 = vmatprep.subr.mxu0 0.0
    %983 = vmatpush1.msra.mxu0 %v205
    %984 = vmatprep.subr.mxu0 0.0
    %985 = vmatpush1.msra.mxu0 %v210
    %986 = vmatprep.subr.mxu0 0.0
    %987 = vmatpush1.msra.mxu0 %v215
    %988 = vmatprep.mubr.f32.mxu0 %v775
    %989 = vmatmul.mubr.f32.gmra.mrb[0].mxu0 %v773
    %v990 = vpop.f32.mrb[0].mxu0
    %v991 = vadd.f32 0.0, %v990
    %v992 = vpop.f32.mrb[0].mxu0
    %993 = vdwg.mxu0
    %v994 = vadd.f32 %v849, %v437
    %v995 = vtanh.pop %v994
    %v996 = vsub.f32 %v773, %v995
    %998 = vset.pattern.permute.xlu0 0
    %999 = vperm.xlu0 %998, %v781
    %v1000 = vpop.permute.xlu0 %999
    %v1002 = vmul.f32 %v995, %v1000
    %v1003 = vadd.f32 %v996, %v1002
    %v1005 = vcombine.high %v779, %v779
    %v1007 = vunpack.c.l.s4 1983009808
    %v1008 = vunpack.c.0.s8 %v1007
    %v1009 = vlaneseq
    %v1010 = vshrl.u32 %v1009, 7
    %v1011 = vsub.s32 %v1008, %v1010
    %v1012 = vrot.slane %v779, %v1011
    %v1014 = vunpack.c.l.s4 1983009808
    %v1015 = vunpack.c.0.s8 %v1014
    %v1016 = vlaneseq
    %v1017 = vshrl.u32 %v1016, 7
    %v1018 = vsub.s32 %v1015, %v1017
    %v1019 = vrot.slane %v1005, %v1018
    %v1020 = vcombine.high %v1012, %v1012
    %v1021 = vcombine.high %v1019, %v1019
    %v1026 = vadd.f32 %v851, %v1012
    %v1027 = vadd.f32 %v920, %v1020
    %v1028 = vadd.f32 %v922, %v1019
    %v1029 = vadd.f32 %v991, %v1021
    %v1030 = vxor.u32 %v1026, 2147483648
    %v1031 = vmul.f32 %v1030, 1.442695
    %v1032 = vpow.pop %v1031
    %v1033 = vadd.f32 %v1032, 1.0
    %v1034 = vrcp.pop %v1033
    %v1035 = vmul.f32 1.0, %v1034
    %v1036 = vxor.u32 %v1027, 2147483648
    %v1037 = vmul.f32 %v1036, 1.442695
    %v1038 = vpow.pop %v1037
    %v1039 = vadd.f32 %v1038, 1.0
    %v1040 = vrcp.pop %v1039
    %v1041 = vmul.f32 1.0, %v1040
    %v1042 = vxor.u32 %v1028, 2147483648
    %v1043 = vmul.f32 %v1042, 1.442695
    %v1044 = vpow.pop %v1043
    %v1045 = vadd.f32 %v1044, 1.0
    %v1046 = vrcp.pop %v1045
    %v1047 = vmul.f32 1.0, %v1046
    %v1048 = vtanh.pop %v1029
    %v1049 = vmul.f32 %v1035, %v1003
    %v1050 = vmul.f32 %v1041, %v1048
    %v1051 = vadd.f32 %v1049, %v1050
    %v1052 = vtanh.pop %v1051
    %v1053 = vmul.f32 %v1047, %v1052
    %s1054 = scalar_lea.vmem [#allocation7], 4
    %1055 = vst [vmem:[%s1054] sm:$0x3] %v1047
    %s1056 = scalar_lea.vmem [#allocation2], 24
    %v1057 = vld [vmem:[%s1056] sm:$0xff]
    %s1058 = scalar_lea.vmem %s1, 6
    %v1059 = vld [vmem:[%s1058] sm:$0x3]
    %1060 = vmatprep.subr.mxu0 %v57
    %1061 = vmatpush1.msra.mxu0 %v56
    %1062 = vmatprep.subr.mxu0 %v62
    %1063 = vmatpush1.msra.mxu0 %v61
    %1064 = vmatprep.subr.mxu0 %v67
    %1065 = vmatpush1.msra.mxu0 %v66
    %1066 = vmatprep.subr.mxu0 %v72
    %1067 = vmatpush1.msra.mxu0 %v71
    %1068 = vmatprep.subr.mxu0 %v77
    %1069 = vmatpush1.msra.mxu0 %v76
    %1070 = vmatprep.subr.mxu0 %v82
    %1071 = vmatpush1.msra.mxu0 %v81
    %1072 = vmatprep.subr.mxu0 %v87
    %1073 = vmatpush1.msra.mxu0 %v86
    %1074 = vmatprep.subr.mxu0 %v92
    %1075 = vmatpush1.msra.mxu0 %v91
    %1076 = vmatprep.subr.mxu0 %v97
    %1077 = vmatpush1.msra.mxu0 %v96
    %1078 = vmatprep.subr.mxu0 %v102
    %1079 = vmatpush1.msra.mxu0 %v101
    %1080 = vmatprep.subr.mxu0 %v107
    %1081 = vmatpush1.msra.mxu0 %v106
    %1082 = vmatprep.subr.mxu0 %v112
    %1083 = vmatpush1.msra.mxu0 %v111
    %1084 = vmatprep.subr.mxu0 %v117
    %1085 = vmatpush1.msra.mxu0 %v116
    %1086 = vmatprep.subr.mxu0 %v122
    %1087 = vmatpush1.msra.mxu0 %v121
    %1088 = vmatprep.subr.mxu0 %v127
    %1089 = vmatpush1.msra.mxu0 %v126
    %1090 = vmatprep.subr.mxu0 %v132
    %1091 = vmatpush1.msra.mxu0 %v131
    %1092 = vmatprep.subr.mxu0 %v137
    %1093 = vmatpush1.msra.mxu0 %v136
    %1094 = vmatprep.subr.mxu0 %v142
    %1095 = vmatpush1.msra.mxu0 %v141
    %1096 = vmatprep.subr.mxu0 %v147
    %1097 = vmatpush1.msra.mxu0 %v146
    %1098 = vmatprep.subr.mxu0 %v152
    %1099 = vmatpush1.msra.mxu0 %v151
    %1100 = vmatprep.subr.mxu0 %v157
    %1101 = vmatpush1.msra.mxu0 %v156
    %1102 = vmatprep.subr.mxu0 %v162
    %1103 = vmatpush1.msra.mxu0 %v161
    %1104 = vmatprep.subr.mxu0 %v167
    %1105 = vmatpush1.msra.mxu0 %v166
    %1106 = vmatprep.subr.mxu0 %v172
    %1107 = vmatpush1.msra.mxu0 %v171
    %1108 = vmatprep.subr.mxu0 %v177
    %1109 = vmatpush1.msra.mxu0 %v176
    %1110 = vmatprep.subr.mxu0 %v182
    %1111 = vmatpush1.msra.mxu0 %v181
    %1112 = vmatprep.subr.mxu0 %v187
    %1113 = vmatpush1.msra.mxu0 %v186
    %1114 = vmatprep.subr.mxu0 %v192
    %1115 = vmatpush1.msra.mxu0 %v191
    %1116 = vmatprep.subr.mxu0 %v197
    %1117 = vmatpush1.msra.mxu0 %v196
    %1118 = vmatprep.subr.mxu0 %v202
    %1119 = vmatpush1.msra.mxu0 %v201
    %1120 = vmatprep.subr.mxu0 %v207
    %1121 = vmatpush1.msra.mxu0 %v206
    %1122 = vmatprep.subr.mxu0 %v212
    %1123 = vmatpush1.msra.mxu0 %v211
    %1124 = vmatprep.mubr.f32.mxu0 %v1053
    %1125 = vmatmul.mubr.f32.gmra.mrb[0].mxu0 %v1051
    %v1126 = vpop.f32.mrb[0].mxu0
    %v1127 = vadd.f32 0.0, %v1126
    %v1128 = vpop.f32.mrb[0].mxu0
    %v1129 = vadd.f32 0.0, %v1128
    %1130 = vdwg.mxu0
    %1131 = vmatprep.subr.mxu0 %v59
    %1132 = vmatpush1.msra.mxu0 %v58
    %1133 = vmatprep.subr.mxu0 %v64
    %1134 = vmatpush1.msra.mxu0 %v63
    %1135 = vmatprep.subr.mxu0 %v69
    %1136 = vmatpush1.msra.mxu0 %v68
    %1137 = vmatprep.subr.mxu0 %v74
    %1138 = vmatpush1.msra.mxu0 %v73
    %1139 = vmatprep.subr.mxu0 %v79
    %1140 = vmatpush1.msra.mxu0 %v78
    %1141 = vmatprep.subr.mxu0 %v84
    %1142 = vmatpush1.msra.mxu0 %v83
    %1143 = vmatprep.subr.mxu0 %v89
    %1144 = vmatpush1.msra.mxu0 %v88
    %1145 = vmatprep.subr.mxu0 %v94
    %1146 = vmatpush1.msra.mxu0 %v93
    %1147 = vmatprep.subr.mxu0 %v99
    %1148 = vmatpush1.msra.mxu0 %v98
    %1149 = vmatprep.subr.mxu0 %v104
    %1150 = vmatpush1.msra.mxu0 %v103
    %1151 = vmatprep.subr.mxu0 %v109
    %1152 = vmatpush1.msra.mxu0 %v108
    %1153 = vmatprep.subr.mxu0 %v114
    %1154 = vmatpush1.msra.mxu0 %v113
    %1155 = vmatprep.subr.mxu0 %v119
    %1156 = vmatpush1.msra.mxu0 %v118
    %1157 = vmatprep.subr.mxu0 %v124
    %1158 = vmatpush1.msra.mxu0 %v123
    %1159 = vmatprep.subr.mxu0 %v129
    %1160 = vmatpush1.msra.mxu0 %v128
    %1161 = vmatprep.subr.mxu0 %v134
    %1162 = vmatpush1.msra.mxu0 %v133
    %1163 = vmatprep.subr.mxu0 %v139
    %1164 = vmatpush1.msra.mxu0 %v138
    %1165 = vmatprep.subr.mxu0 %v144
    %1166 = vmatpush1.msra.mxu0 %v143
    %1167 = vmatprep.subr.mxu0 %v149
    %1168 = vmatpush1.msra.mxu0 %v148
    %1169 = vmatprep.subr.mxu0 %v154
    %1170 = vmatpush1.msra.mxu0 %v153
    %1171 = vmatprep.subr.mxu0 %v159
    %1172 = vmatpush1.msra.mxu0 %v158
    %1173 = vmatprep.subr.mxu0 %v164
    %1174 = vmatpush1.msra.mxu0 %v163
    %1175 = vmatprep.subr.mxu0 %v169
    %1176 = vmatpush1.msra.mxu0 %v168
    %1177 = vmatprep.subr.mxu0 %v174
    %1178 = vmatpush1.msra.mxu0 %v173
    %1179 = vmatprep.subr.mxu0 %v179
    %1180 = vmatpush1.msra.mxu0 %v178
    %1181 = vmatprep.subr.mxu0 %v184
    %1182 = vmatpush1.msra.mxu0 %v183
    %1183 = vmatprep.subr.mxu0 %v189
    %1184 = vmatpush1.msra.mxu0 %v188
    %1185 = vmatprep.subr.mxu0 %v194
    %1186 = vmatpush1.msra.mxu0 %v193
    %1187 = vmatprep.subr.mxu0 %v199
    %1188 = vmatpush1.msra.mxu0 %v198
    %1189 = vmatprep.subr.mxu0 %v204
    %1190 = vmatpush1.msra.mxu0 %v203
    %1191 = vmatprep.subr.mxu0 %v209
    %1192 = vmatpush1.msra.mxu0 %v208
    %1193 = vmatprep.subr.mxu0 %v214
    %1194 = vmatpush1.msra.mxu0 %v213
    %1195 = vmatprep.mubr.f32.mxu0 %v1053
    %1196 = vmatmul.mubr.f32.gmra.mrb[0].mxu0 %v1051
    %v1197 = vpop.f32.mrb[0].mxu0
    %v1198 = vadd.f32 0.0, %v1197
    %v1199 = vpop.f32.mrb[0].mxu0
    %v1200 = vadd.f32 0.0, %v1199
    %1201 = vdwg.mxu0
    %1202 = vmatprep.subr.mxu0 0.0
    %1203 = vmatpush1.msra.mxu0 %v60
    %1204 = vmatprep.subr.mxu0 0.0
    %1205 = vmatpush1.msra.mxu0 %v65
    %1206 = vmatprep.subr.mxu0 0.0
    %1207 = vmatpush1.msra.mxu0 %v70
    %1208 = vmatprep.subr.mxu0 0.0
    %1209 = vmatpush1.msra.mxu0 %v75
    %1210 = vmatprep.subr.mxu0 0.0
    %1211 = vmatpush1.msra.mxu0 %v80
    %1212 = vmatprep.subr.mxu0 0.0
    %1213 = vmatpush1.msra.mxu0 %v85
    %1214 = vmatprep.subr.mxu0 0.0
    %1215 = vmatpush1.msra.mxu0 %v90
    %1216 = vmatprep.subr.mxu0 0.0
    %1217 = vmatpush1.msra.mxu0 %v95
    %1218 = vmatprep.subr.mxu0 0.0
    %1219 = vmatpush1.msra.mxu0 %v100
    %1220 = vmatprep.subr.mxu0 0.0
    %1221 = vmatpush1.msra.mxu0 %v105
    %1222 = vmatprep.subr.mxu0 0.0
    %1223 = vmatpush1.msra.mxu0 %v110
    %1224 = vmatprep.subr.mxu0 0.0
    %1225 = vmatpush1.msra.mxu0 %v115
    %1226 = vmatprep.subr.mxu0 0.0
    %1227 = vmatpush1.msra.mxu0 %v120
    %1228 = vmatprep.subr.mxu0 0.0
    %1229 = vmatpush1.msra.mxu0 %v125
    %1230 = vmatprep.subr.mxu0 0.0
    %1231 = vmatpush1.msra.mxu0 %v130
    %1232 = vmatprep.subr.mxu0 0.0
    %1233 = vmatpush1.msra.mxu0 %v135
    %1234 = vmatprep.subr.mxu0 0.0
    %1235 = vmatpush1.msra.mxu0 %v140
    %1236 = vmatprep.subr.mxu0 0.0
    %1237 = vmatpush1.msra.mxu0 %v145
    %1238 = vmatprep.subr.mxu0 0.0
    %1239 = vmatpush1.msra.mxu0 %v150
    %1240 = vmatprep.subr.mxu0 0.0
    %1241 = vmatpush1.msra.mxu0 %v155
    %1242 = vmatprep.subr.mxu0 0.0
    %1243 = vmatpush1.msra.mxu0 %v160
    %1244 = vmatprep.subr.mxu0 0.0
    %1245 = vmatpush1.msra.mxu0 %v165
    %1246 = vmatprep.subr.mxu0 0.0
    %1247 = vmatpush1.msra.mxu0 %v170
    %1248 = vmatprep.subr.mxu0 0.0
    %1249 = vmatpush1.msra.mxu0 %v175
    %1250 = vmatprep.subr.mxu0 0.0
    %1251 = vmatpush1.msra.mxu0 %v180
    %1252 = vmatprep.subr.mxu0 0.0
    %1253 = vmatpush1.msra.mxu0 %v185
    %1254 = vmatprep.subr.mxu0 0.0
    %1255 = vmatpush1.msra.mxu0 %v190
    %1256 = vmatprep.subr.mxu0 0.0
    %1257 = vmatpush1.msra.mxu0 %v195
    %1258 = vmatprep.subr.mxu0 0.0
    %1259 = vmatpush1.msra.mxu0 %v200
    %1260 = vmatprep.subr.mxu0 0.0
    %1261 = vmatpush1.msra.mxu0 %v205
    %1262 = vmatprep.subr.mxu0 0.0
    %1263 = vmatpush1.msra.mxu0 %v210
    %1264 = vmatprep.subr.mxu0 0.0
    %1265 = vmatpush1.msra.mxu0 %v215
    %1266 = vmatprep.mubr.f32.mxu0 %v1053
    %1267 = vmatmul.mubr.f32.gmra.mrb[0].mxu0 %v1051
    %v1268 = vpop.f32.mrb[0].mxu0
    %v1269 = vadd.f32 0.0, %v1268
    %v1270 = vpop.f32.mrb[0].mxu0
    %1271 = vdwg.mxu0
    %v1272 = vadd.f32 %v1127, %v437
    %v1273 = vtanh.pop %v1272
    %v1274 = vsub.f32 %v1051, %v1273
    %1276 = vset.pattern.permute.xlu0 0
    %1277 = vperm.xlu0 %1276, %v1059
    %v1278 = vpop.permute.xlu0 %1277
    %v1280 = vmul.f32 %v1273, %v1278
    %v1281 = vadd.f32 %v1274, %v1280
    %v1283 = vcombine.high %v1057, %v1057
    %v1285 = vunpack.c.l.s4 1983009808
    %v1286 = vunpack.c.0.s8 %v1285
    %v1287 = vlaneseq
    %v1288 = vshrl.u32 %v1287, 7
    %v1289 = vsub.s32 %v1286, %v1288
    %v1290 = vrot.slane %v1057, %v1289
    %v1292 = vunpack.c.l.s4 1983009808
    %v1293 = vunpack.c.0.s8 %v1292
    %v1294 = vlaneseq
    %v1295 = vshrl.u32 %v1294, 7
    %v1296 = vsub.s32 %v1293, %v1295
    %v1297 = vrot.slane %v1283, %v1296
    %v1298 = vcombine.high %v1290, %v1290
    %v1299 = vcombine.high %v1297, %v1297
    %v1304 = vadd.f32 %v1129, %v1290
    %v1305 = vadd.f32 %v1198, %v1298
    %v1306 = vadd.f32 %v1200, %v1297
    %v1307 = vadd.f32 %v1269, %v1299
    %v1308 = vxor.u32 %v1304, 2147483648
    %v1309 = vmul.f32 %v1308, 1.442695
    %v1310 = vpow.pop %v1309
    %v1311 = vadd.f32 %v1310, 1.0
    %v1312 = vrcp.pop %v1311
    %v1313 = vmul.f32 1.0, %v1312
    %v1314 = vxor.u32 %v1305, 2147483648
    %v1315 = vmul.f32 %v1314, 1.442695
    %v1316 = vpow.pop %v1315
    %v1317 = vadd.f32 %v1316, 1.0
    %v1318 = vrcp.pop %v1317
    %v1319 = vmul.f32 1.0, %v1318
    %v1320 = vxor.u32 %v1306, 2147483648
    %v1321 = vmul.f32 %v1320, 1.442695
    %v1322 = vpow.pop %v1321
    %v1323 = vadd.f32 %v1322, 1.0
    %v1324 = vrcp.pop %v1323
    %v1325 = vmul.f32 1.0, %v1324
    %v1326 = vtanh.pop %v1307
    %v1327 = vmul.f32 %v1313, %v1281
    %v1328 = vmul.f32 %v1319, %v1326
    %v1329 = vadd.f32 %v1327, %v1328
    %v1330 = vtanh.pop %v1329
    %v1331 = vmul.f32 %v1325, %v1330
    %s1332 = scalar_lea.vmem [#allocation7], 6
    %1333 = vst [vmem:[%s1332] sm:$0x3] %v1325
    %s1334 = scalar_lea.vmem [#allocation2], 32
    %v1335 = vld [vmem:[%s1334] sm:$0xff]
    %s1336 = scalar_lea.vmem %s1, 8
    %v1337 = vld [vmem:[%s1336] sm:$0x3]
    %1338 = vmatprep.subr.mxu0 %v57
    %1339 = vmatpush1.msra.mxu0 %v56
    %1340 = vmatprep.subr.mxu0 %v62
    %1341 = vmatpush1.msra.mxu0 %v61
    %1342 = vmatprep.subr.mxu0 %v67
    %1343 = vmatpush1.msra.mxu0 %v66
    %1344 = vmatprep.subr.mxu0 %v72
    %1345 = vmatpush1.msra.mxu0 %v71
    %1346 = vmatprep.subr.mxu0 %v77
    %1347 = vmatpush1.msra.mxu0 %v76
    %1348 = vmatprep.subr.mxu0 %v82
    %1349 = vmatpush1.msra.mxu0 %v81
    %1350 = vmatprep.subr.mxu0 %v87
    %1351 = vmatpush1.msra.mxu0 %v86
    %1352 = vmatprep.subr.mxu0 %v92
    %1353 = vmatpush1.msra.mxu0 %v91
    %1354 = vmatprep.subr.mxu0 %v97
    %1355 = vmatpush1.msra.mxu0 %v96
    %1356 = vmatprep.subr.mxu0 %v102
    %1357 = vmatpush1.msra.mxu0 %v101
    %1358 = vmatprep.subr.mxu0 %v107
    %1359 = vmatpush1.msra.mxu0 %v106
    %1360 = vmatprep.subr.mxu0 %v112
    %1361 = vmatpush1.msra.mxu0 %v111
    %1362 = vmatprep.subr.mxu0 %v117
    %1363 = vmatpush1.msra.mxu0 %v116
    %1364 = vmatprep.subr.mxu0 %v122
    %1365 = vmatpush1.msra.mxu0 %v121
    %1366 = vmatprep.subr.mxu0 %v127
    %1367 = vmatpush1.msra.mxu0 %v126
    %1368 = vmatprep.subr.mxu0 %v132
    %1369 = vmatpush1.msra.mxu0 %v131
    %1370 = vmatprep.subr.mxu0 %v137
    %1371 = vmatpush1.msra.mxu0 %v136
    %1372 = vmatprep.subr.mxu0 %v142
    %1373 = vmatpush1.msra.mxu0 %v141
    %1374 = vmatprep.subr.mxu0 %v147
    %1375 = vmatpush1.msra.mxu0 %v146
    %1376 = vmatprep.subr.mxu0 %v152
    %1377 = vmatpush1.msra.mxu0 %v151
    %1378 = vmatprep.subr.mxu0 %v157
    %1379 = vmatpush1.msra.mxu0 %v156
    %1380 = vmatprep.subr.mxu0 %v162
    %1381 = vmatpush1.msra.mxu0 %v161
    %1382 = vmatprep.subr.mxu0 %v167
    %1383 = vmatpush1.msra.mxu0 %v166
    %1384 = vmatprep.subr.mxu0 %v172
    %1385 = vmatpush1.msra.mxu0 %v171
    %1386 = vmatprep.subr.mxu0 %v177
    %1387 = vmatpush1.msra.mxu0 %v176
    %1388 = vmatprep.subr.mxu0 %v182
    %1389 = vmatpush1.msra.mxu0 %v181
    %1390 = vmatprep.subr.mxu0 %v187
    %1391 = vmatpush1.msra.mxu0 %v186
    %1392 = vmatprep.subr.mxu0 %v192
    %1393 = vmatpush1.msra.mxu0 %v191
    %1394 = vmatprep.subr.mxu0 %v197
    %1395 = vmatpush1.msra.mxu0 %v196
    %1396 = vmatprep.subr.mxu0 %v202
    %1397 = vmatpush1.msra.mxu0 %v201
    %1398 = vmatprep.subr.mxu0 %v207
    %1399 = vmatpush1.msra.mxu0 %v206
    %1400 = vmatprep.subr.mxu0 %v212
    %1401 = vmatpush1.msra.mxu0 %v211
    %1402 = vmatprep.mubr.f32.mxu0 %v1331
    %1403 = vmatmul.mubr.f32.gmra.mrb[0].mxu0 %v1329
    %v1404 = vpop.f32.mrb[0].mxu0
    %v1405 = vadd.f32 0.0, %v1404
    %v1406 = vpop.f32.mrb[0].mxu0
    %v1407 = vadd.f32 0.0, %v1406
    %1408 = vdwg.mxu0
    %1409 = vmatprep.subr.mxu0 %v59
    %1410 = vmatpush1.msra.mxu0 %v58
    %1411 = vmatprep.subr.mxu0 %v64
    %1412 = vmatpush1.msra.mxu0 %v63
    %1413 = vmatprep.subr.mxu0 %v69
    %1414 = vmatpush1.msra.mxu0 %v68
    %1415 = vmatprep.subr.mxu0 %v74
    %1416 = vmatpush1.msra.mxu0 %v73
    %1417 = vmatprep.subr.mxu0 %v79
    %1418 = vmatpush1.msra.mxu0 %v78
    %1419 = vmatprep.subr.mxu0 %v84
    %1420 = vmatpush1.msra.mxu0 %v83
    %1421 = vmatprep.subr.mxu0 %v89
    %1422 = vmatpush1.msra.mxu0 %v88
    %1423 = vmatprep.subr.mxu0 %v94
    %1424 = vmatpush1.msra.mxu0 %v93
    %1425 = vmatprep.subr.mxu0 %v99
    %1426 = vmatpush1.msra.mxu0 %v98
    %1427 = vmatprep.subr.mxu0 %v104
    %1428 = vmatpush1.msra.mxu0 %v103
    %1429 = vmatprep.subr.mxu0 %v109
    %1430 = vmatpush1.msra.mxu0 %v108
    %1431 = vmatprep.subr.mxu0 %v114
    %1432 = vmatpush1.msra.mxu0 %v113
    %1433 = vmatprep.subr.mxu0 %v119
    %1434 = vmatpush1.msra.mxu0 %v118
    %1435 = vmatprep.subr.mxu0 %v124
    %1436 = vmatpush1.msra.mxu0 %v123
    %1437 = vmatprep.subr.mxu0 %v129
    %1438 = vmatpush1.msra.mxu0 %v128
    %1439 = vmatprep.subr.mxu0 %v134
    %1440 = vmatpush1.msra.mxu0 %v133
    %1441 = vmatprep.subr.mxu0 %v139
    %1442 = vmatpush1.msra.mxu0 %v138
    %1443 = vmatprep.subr.mxu0 %v144
    %1444 = vmatpush1.msra.mxu0 %v143
    %1445 = vmatprep.subr.mxu0 %v149
    %1446 = vmatpush1.msra.mxu0 %v148
    %1447 = vmatprep.subr.mxu0 %v154
    %1448 = vmatpush1.msra.mxu0 %v153
    %1449 = vmatprep.subr.mxu0 %v159
    %1450 = vmatpush1.msra.mxu0 %v158
    %1451 = vmatprep.subr.mxu0 %v164
    %1452 = vmatpush1.msra.mxu0 %v163
    %1453 = vmatprep.subr.mxu0 %v169
    %1454 = vmatpush1.msra.mxu0 %v168
    %1455 = vmatprep.subr.mxu0 %v174
    %1456 = vmatpush1.msra.mxu0 %v173
    %1457 = vmatprep.subr.mxu0 %v179
    %1458 = vmatpush1.msra.mxu0 %v178
    %1459 = vmatprep.subr.mxu0 %v184
    %1460 = vmatpush1.msra.mxu0 %v183
    %1461 = vmatprep.subr.mxu0 %v189
    %1462 = vmatpush1.msra.mxu0 %v188
    %1463 = vmatprep.subr.mxu0 %v194
    %1464 = vmatpush1.msra.mxu0 %v193
    %1465 = vmatprep.subr.mxu0 %v199
    %1466 = vmatpush1.msra.mxu0 %v198
    %1467 = vmatprep.subr.mxu0 %v204
    %1468 = vmatpush1.msra.mxu0 %v203
    %1469 = vmatprep.subr.mxu0 %v209
    %1470 = vmatpush1.msra.mxu0 %v208
    %1471 = vmatprep.subr.mxu0 %v214
    %1472 = vmatpush1.msra.mxu0 %v213
    %1473 = vmatprep.mubr.f32.mxu0 %v1331
    %1474 = vmatmul.mubr.f32.gmra.mrb[0].mxu0 %v1329
    %v1475 = vpop.f32.mrb[0].mxu0
    %v1476 = vadd.f32 0.0, %v1475
    %v1477 = vpop.f32.mrb[0].mxu0
    %v1478 = vadd.f32 0.0, %v1477
    %1479 = vdwg.mxu0
    %1480 = vmatprep.subr.mxu0 0.0
    %1481 = vmatpush1.msra.mxu0 %v60
    %1482 = vmatprep.subr.mxu0 0.0
    %1483 = vmatpush1.msra.mxu0 %v65
    %1484 = vmatprep.subr.mxu0 0.0
    %1485 = vmatpush1.msra.mxu0 %v70
    %1486 = vmatprep.subr.mxu0 0.0
    %1487 = vmatpush1.msra.mxu0 %v75
    %1488 = vmatprep.subr.mxu0 0.0
    %1489 = vmatpush1.msra.mxu0 %v80
    %1490 = vmatprep.subr.mxu0 0.0
    %1491 = vmatpush1.msra.mxu0 %v85
    %1492 = vmatprep.subr.mxu0 0.0
    %1493 = vmatpush1.msra.mxu0 %v90
    %1494 = vmatprep.subr.mxu0 0.0
    %1495 = vmatpush1.msra.mxu0 %v95
    %1496 = vmatprep.subr.mxu0 0.0
    %1497 = vmatpush1.msra.mxu0 %v100
    %1498 = vmatprep.subr.mxu0 0.0
    %1499 = vmatpush1.msra.mxu0 %v105
    %1500 = vmatprep.subr.mxu0 0.0
    %1501 = vmatpush1.msra.mxu0 %v110
    %1502 = vmatprep.subr.mxu0 0.0
    %1503 = vmatpush1.msra.mxu0 %v115
    %1504 = vmatprep.subr.mxu0 0.0
    %1505 = vmatpush1.msra.mxu0 %v120
    %1506 = vmatprep.subr.mxu0 0.0
    %1507 = vmatpush1.msra.mxu0 %v125
    %1508 = vmatprep.subr.mxu0 0.0
    %1509 = vmatpush1.msra.mxu0 %v130
    %1510 = vmatprep.subr.mxu0 0.0
    %1511 = vmatpush1.msra.mxu0 %v135
    %1512 = vmatprep.subr.mxu0 0.0
    %1513 = vmatpush1.msra.mxu0 %v140
    %1514 = vmatprep.subr.mxu0 0.0
    %1515 = vmatpush1.msra.mxu0 %v145
    %1516 = vmatprep.subr.mxu0 0.0
    %1517 = vmatpush1.msra.mxu0 %v150
    %1518 = vmatprep.subr.mxu0 0.0
    %1519 = vmatpush1.msra.mxu0 %v155
    %1520 = vmatprep.subr.mxu0 0.0
    %1521 = vmatpush1.msra.mxu0 %v160
    %1522 = vmatprep.subr.mxu0 0.0
    %1523 = vmatpush1.msra.mxu0 %v165
    %1524 = vmatprep.subr.mxu0 0.0
    %1525 = vmatpush1.msra.mxu0 %v170
    %1526 = vmatprep.subr.mxu0 0.0
    %1527 = vmatpush1.msra.mxu0 %v175
    %1528 = vmatprep.subr.mxu0 0.0
    %1529 = vmatpush1.msra.mxu0 %v180
    %1530 = vmatprep.subr.mxu0 0.0
    %1531 = vmatpush1.msra.mxu0 %v185
    %1532 = vmatprep.subr.mxu0 0.0
    %1533 = vmatpush1.msra.mxu0 %v190
    %1534 = vmatprep.subr.mxu0 0.0
    %1535 = vmatpush1.msra.mxu0 %v195
    %1536 = vmatprep.subr.mxu0 0.0
    %1537 = vmatpush1.msra.mxu0 %v200
    %1538 = vmatprep.subr.mxu0 0.0
    %1539 = vmatpush1.msra.mxu0 %v205
    %1540 = vmatprep.subr.mxu0 0.0
    %1541 = vmatpush1.msra.mxu0 %v210
    %1542 = vmatprep.subr.mxu0 0.0
    %1543 = vmatpush1.msra.mxu0 %v215
    %1544 = vmatprep.mubr.f32.mxu0 %v1331
    %1545 = vmatmul.mubr.f32.gmra.mrb[0].mxu0 %v1329
    %v1546 = vpop.f32.mrb[0].mxu0
    %v1547 = vadd.f32 0.0, %v1546
    %v1548 = vpop.f32.mrb[0].mxu0
    %1549 = vdwg.mxu0
    %v1550 = vadd.f32 %v1405, %v437
    %v1551 = vtanh.pop %v1550
    %v1552 = vsub.f32 %v1329, %v1551
    %1554 = vset.pattern.permute.xlu0 0
    %1555 = vperm.xlu0 %1554, %v1337
    %v1556 = vpop.permute.xlu0 %1555
    %v1558 = vmul.f32 %v1551, %v1556
    %v1559 = vadd.f32 %v1552, %v1558
    %v1561 = vcombine.high %v1335, %v1335
    %v1563 = vunpack.c.l.s4 1983009808
    %v1564 = vunpack.c.0.s8 %v1563
    %v1565 = vlaneseq
    %v1566 = vshrl.u32 %v1565, 7
    %v1567 = vsub.s32 %v1564, %v1566
    %v1568 = vrot.slane %v1335, %v1567
    %v1570 = vunpack.c.l.s4 1983009808
    %v1571 = vunpack.c.0.s8 %v1570
    %v1572 = vlaneseq
    %v1573 = vshrl.u32 %v1572, 7
    %v1574 = vsub.s32 %v1571, %v1573
    %v1575 = vrot.slane %v1561, %v1574
    %v1576 = vcombine.high %v1568, %v1568
    %v1577 = vcombine.high %v1575, %v1575
    %v1582 = vadd.f32 %v1407, %v1568
    %v1583 = vadd.f32 %v1476, %v1576
    %v1584 = vadd.f32 %v1478, %v1575
    %v1585 = vadd.f32 %v1547, %v1577
    %v1586 = vxor.u32 %v1582, 2147483648
    %v1587 = vmul.f32 %v1586, 1.442695
    %v1588 = vpow.pop %v1587
    %v1589 = vadd.f32 %v1588, 1.0
    %v1590 = vrcp.pop %v1589
    %v1591 = vmul.f32 1.0, %v1590
    %v1592 = vxor.u32 %v1583, 2147483648
    %v1593 = vmul.f32 %v1592, 1.442695
    %v1594 = vpow.pop %v1593
    %v1595 = vadd.f32 %v1594, 1.0
    %v1596 = vrcp.pop %v1595
    %v1597 = vmul.f32 1.0, %v1596
    %v1598 = vxor.u32 %v1584, 2147483648
    %v1599 = vmul.f32 %v1598, 1.442695
    %v1600 = vpow.pop %v1599
    %v1601 = vadd.f32 %v1600, 1.0
    %v1602 = vrcp.pop %v1601
    %v1603 = vmul.f32 1.0, %v1602
    %v1604 = vtanh.pop %v1585
    %v1605 = vmul.f32 %v1591, %v1559
    %v1606 = vmul.f32 %v1597, %v1604
    %v1607 = vadd.f32 %v1605, %v1606
    %v1608 = vtanh.pop %v1607
    %v1609 = vmul.f32 %v1603, %v1608
    %s1610 = scalar_lea.vmem [#allocation7], 8
    %1611 = vst [vmem:[%s1610] sm:$0x3] %v1603
    %s1612 = scalar_lea.vmem [#allocation2], 40
    %v1613 = vld [vmem:[%s1612] sm:$0xff]
    %s1614 = scalar_lea.vmem %s1, 10
    %v1615 = vld [vmem:[%s1614] sm:$0x3]
    %1616 = vmatprep.subr.mxu0 %v57
    %1617 = vmatpush1.msra.mxu0 %v56
    %1618 = vmatprep.subr.mxu0 %v62
    %1619 = vmatpush1.msra.mxu0 %v61
    %1620 = vmatprep.subr.mxu0 %v67
    %1621 = vmatpush1.msra.mxu0 %v66
    %1622 = vmatprep.subr.mxu0 %v72
    %1623 = vmatpush1.msra.mxu0 %v71
    %1624 = vmatprep.subr.mxu0 %v77
    %1625 = vmatpush1.msra.mxu0 %v76
    %1626 = vmatprep.subr.mxu0 %v82
    %1627 = vmatpush1.msra.mxu0 %v81
    %1628 = vmatprep.subr.mxu0 %v87
    %1629 = vmatpush1.msra.mxu0 %v86
    %1630 = vmatprep.subr.mxu0 %v92
    %1631 = vmatpush1.msra.mxu0 %v91
    %1632 = vmatprep.subr.mxu0 %v97
    %1633 = vmatpush1.msra.mxu0 %v96
    %1634 = vmatprep.subr.mxu0 %v102
    %1635 = vmatpush1.msra.mxu0 %v101
    %1636 = vmatprep.subr.mxu0 %v107
    %1637 = vmatpush1.msra.mxu0 %v106
    %1638 = vmatprep.subr.mxu0 %v112
    %1639 = vmatpush1.msra.mxu0 %v111
    %1640 = vmatprep.subr.mxu0 %v117
    %1641 = vmatpush1.msra.mxu0 %v116
    %1642 = vmatprep.subr.mxu0 %v122
    %1643 = vmatpush1.msra.mxu0 %v121
    %1644 = vmatprep.subr.mxu0 %v127
    %1645 = vmatpush1.msra.mxu0 %v126
    %1646 = vmatprep.subr.mxu0 %v132
    %1647 = vmatpush1.msra.mxu0 %v131
    %1648 = vmatprep.subr.mxu0 %v137
    %1649 = vmatpush1.msra.mxu0 %v136
    %1650 = vmatprep.subr.mxu0 %v142
    %1651 = vmatpush1.msra.mxu0 %v141
    %1652 = vmatprep.subr.mxu0 %v147
    %1653 = vmatpush1.msra.mxu0 %v146
    %1654 = vmatprep.subr.mxu0 %v152
    %1655 = vmatpush1.msra.mxu0 %v151
    %1656 = vmatprep.subr.mxu0 %v157
    %1657 = vmatpush1.msra.mxu0 %v156
    %1658 = vmatprep.subr.mxu0 %v162
    %1659 = vmatpush1.msra.mxu0 %v161
    %1660 = vmatprep.subr.mxu0 %v167
    %1661 = vmatpush1.msra.mxu0 %v166
    %1662 = vmatprep.subr.mxu0 %v172
    %1663 = vmatpush1.msra.mxu0 %v171
    %1664 = vmatprep.subr.mxu0 %v177
    %1665 = vmatpush1.msra.mxu0 %v176
    %1666 = vmatprep.subr.mxu0 %v182
    %1667 = vmatpush1.msra.mxu0 %v181
    %1668 = vmatprep.subr.mxu0 %v187
    %1669 = vmatpush1.msra.mxu0 %v186
    %1670 = vmatprep.subr.mxu0 %v192
    %1671 = vmatpush1.msra.mxu0 %v191
    %1672 = vmatprep.subr.mxu0 %v197
    %1673 = vmatpush1.msra.mxu0 %v196
    %1674 = vmatprep.subr.mxu0 %v202
    %1675 = vmatpush1.msra.mxu0 %v201
    %1676 = vmatprep.subr.mxu0 %v207
    %1677 = vmatpush1.msra.mxu0 %v206
    %1678 = vmatprep.subr.mxu0 %v212
    %1679 = vmatpush1.msra.mxu0 %v211
    %1680 = vmatprep.mubr.f32.mxu0 %v1609
    %1681 = vmatmul.mubr.f32.gmra.mrb[0].mxu0 %v1607
    %v1682 = vpop.f32.mrb[0].mxu0
    %v1683 = vadd.f32 0.0, %v1682
    %v1684 = vpop.f32.mrb[0].mxu0
    %v1685 = vadd.f32 0.0, %v1684
    %1686 = vdwg.mxu0
    %1687 = vmatprep.subr.mxu0 %v59
    %1688 = vmatpush1.msra.mxu0 %v58
    %1689 = vmatprep.subr.mxu0 %v64
    %1690 = vmatpush1.msra.mxu0 %v63
    %1691 = vmatprep.subr.mxu0 %v69
    %1692 = vmatpush1.msra.mxu0 %v68
    %1693 = vmatprep.subr.mxu0 %v74
    %1694 = vmatpush1.msra.mxu0 %v73
    %1695 = vmatprep.subr.mxu0 %v79
    %1696 = vmatpush1.msra.mxu0 %v78
    %1697 = vmatprep.subr.mxu0 %v84
    %1698 = vmatpush1.msra.mxu0 %v83
    %1699 = vmatprep.subr.mxu0 %v89
    %1700 = vmatpush1.msra.mxu0 %v88
    %1701 = vmatprep.subr.mxu0 %v94
    %1702 = vmatpush1.msra.mxu0 %v93
    %1703 = vmatprep.subr.mxu0 %v99
    %1704 = vmatpush1.msra.mxu0 %v98
    %1705 = vmatprep.subr.mxu0 %v104
    %1706 = vmatpush1.msra.mxu0 %v103
    %1707 = vmatprep.subr.mxu0 %v109
    %1708 = vmatpush1.msra.mxu0 %v108
    %1709 = vmatprep.subr.mxu0 %v114
    %1710 = vmatpush1.msra.mxu0 %v113
    %1711 = vmatprep.subr.mxu0 %v119
    %1712 = vmatpush1.msra.mxu0 %v118
    %1713 = vmatprep.subr.mxu0 %v124
    %1714 = vmatpush1.msra.mxu0 %v123
    %1715 = vmatprep.subr.mxu0 %v129
    %1716 = vmatpush1.msra.mxu0 %v128
    %1717 = vmatprep.subr.mxu0 %v134
    %1718 = vmatpush1.msra.mxu0 %v133
    %1719 = vmatprep.subr.mxu0 %v139
    %1720 = vmatpush1.msra.mxu0 %v138
    %1721 = vmatprep.subr.mxu0 %v144
    %1722 = vmatpush1.msra.mxu0 %v143
    %1723 = vmatprep.subr.mxu0 %v149
    %1724 = vmatpush1.msra.mxu0 %v148
    %1725 = vmatprep.subr.mxu0 %v154
    %1726 = vmatpush1.msra.mxu0 %v153
    %1727 = vmatprep.subr.mxu0 %v159
    %1728 = vmatpush1.msra.mxu0 %v158
    %1729 = vmatprep.subr.mxu0 %v164
    %1730 = vmatpush1.msra.mxu0 %v163
    %1731 = vmatprep.subr.mxu0 %v169
    %1732 = vmatpush1.msra.mxu0 %v168
    %1733 = vmatprep.subr.mxu0 %v174
    %1734 = vmatpush1.msra.mxu0 %v173
    %1735 = vmatprep.subr.mxu0 %v179
    %1736 = vmatpush1.msra.mxu0 %v178
    %1737 = vmatprep.subr.mxu0 %v184
    %1738 = vmatpush1.msra.mxu0 %v183
    %1739 = vmatprep.subr.mxu0 %v189
    %1740 = vmatpush1.msra.mxu0 %v188
    %1741 = vmatprep.subr.mxu0 %v194
    %1742 = vmatpush1.msra.mxu0 %v193
    %1743 = vmatprep.subr.mxu0 %v199
    %1744 = vmatpush1.msra.mxu0 %v198
    %1745 = vmatprep.subr.mxu0 %v204
    %1746 = vmatpush1.msra.mxu0 %v203
    %1747 = vmatprep.subr.mxu0 %v209
    %1748 = vmatpush1.msra.mxu0 %v208
    %1749 = vmatprep.subr.mxu0 %v214
    %1750 = vmatpush1.msra.mxu0 %v213
    %1751 = vmatprep.mubr.f32.mxu0 %v1609
    %1752 = vmatmul.mubr.f32.gmra.mrb[0].mxu0 %v1607
    %v1753 = vpop.f32.mrb[0].mxu0
    %v1754 = vadd.f32 0.0, %v1753
    %v1755 = vpop.f32.mrb[0].mxu0
    %v1756 = vadd.f32 0.0, %v1755
    %1757 = vdwg.mxu0
    %1758 = vmatprep.subr.mxu0 0.0
    %1759 = vmatpush1.msra.mxu0 %v60
    %1760 = vmatprep.subr.mxu0 0.0
    %1761 = vmatpush1.msra.mxu0 %v65
    %1762 = vmatprep.subr.mxu0 0.0
    %1763 = vmatpush1.msra.mxu0 %v70
    %1764 = vmatprep.subr.mxu0 0.0
    %1765 = vmatpush1.msra.mxu0 %v75
    %1766 = vmatprep.subr.mxu0 0.0
    %1767 = vmatpush1.msra.mxu0 %v80
    %1768 = vmatprep.subr.mxu0 0.0
    %1769 = vmatpush1.msra.mxu0 %v85
    %1770 = vmatprep.subr.mxu0 0.0
    %1771 = vmatpush1.msra.mxu0 %v90
    %1772 = vmatprep.subr.mxu0 0.0
    %1773 = vmatpush1.msra.mxu0 %v95
    %1774 = vmatprep.subr.mxu0 0.0
    %1775 = vmatpush1.msra.mxu0 %v100
    %1776 = vmatprep.subr.mxu0 0.0
    %1777 = vmatpush1.msra.mxu0 %v105
    %1778 = vmatprep.subr.mxu0 0.0
    %1779 = vmatpush1.msra.mxu0 %v110
    %1780 = vmatprep.subr.mxu0 0.0
    %1781 = vmatpush1.msra.mxu0 %v115
    %1782 = vmatprep.subr.mxu0 0.0
    %1783 = vmatpush1.msra.mxu0 %v120
    %1784 = vmatprep.subr.mxu0 0.0
    %1785 = vmatpush1.msra.mxu0 %v125
    %1786 = vmatprep.subr.mxu0 0.0
    %1787 = vmatpush1.msra.mxu0 %v130
    %1788 = vmatprep.subr.mxu0 0.0
    %1789 = vmatpush1.msra.mxu0 %v135
    %1790 = vmatprep.subr.mxu0 0.0
    %1791 = vmatpush1.msra.mxu0 %v140
    %1792 = vmatprep.subr.mxu0 0.0
    %1793 = vmatpush1.msra.mxu0 %v145
    %1794 = vmatprep.subr.mxu0 0.0
    %1795 = vmatpush1.msra.mxu0 %v150
    %1796 = vmatprep.subr.mxu0 0.0
    %1797 = vmatpush1.msra.mxu0 %v155
    %1798 = vmatprep.subr.mxu0 0.0
    %1799 = vmatpush1.msra.mxu0 %v160
    %1800 = vmatprep.subr.mxu0 0.0
    %1801 = vmatpush1.msra.mxu0 %v165
    %1802 = vmatprep.subr.mxu0 0.0
    %1803 = vmatpush1.msra.mxu0 %v170
    %1804 = vmatprep.subr.mxu0 0.0
    %1805 = vmatpush1.msra.mxu0 %v175
    %1806 = vmatprep.subr.mxu0 0.0
    %1807 = vmatpush1.msra.mxu0 %v180
    %1808 = vmatprep.subr.mxu0 0.0
    %1809 = vmatpush1.msra.mxu0 %v185
    %1810 = vmatprep.subr.mxu0 0.0
    %1811 = vmatpush1.msra.mxu0 %v190
    %1812 = vmatprep.subr.mxu0 0.0
    %1813 = vmatpush1.msra.mxu0 %v195
    %1814 = vmatprep.subr.mxu0 0.0
    %1815 = vmatpush1.msra.mxu0 %v200
    %1816 = vmatprep.subr.mxu0 0.0
    %1817 = vmatpush1.msra.mxu0 %v205
    %1818 = vmatprep.subr.mxu0 0.0
    %1819 = vmatpush1.msra.mxu0 %v210
    %1820 = vmatprep.subr.mxu0 0.0
    %1821 = vmatpush1.msra.mxu0 %v215
    %1822 = vmatprep.mubr.f32.mxu0 %v1609
    %1823 = vmatmul.mubr.f32.gmra.mrb[0].mxu0 %v1607
    %v1824 = vpop.f32.mrb[0].mxu0
    %v1825 = vadd.f32 0.0, %v1824
    %v1826 = vpop.f32.mrb[0].mxu0
    %1827 = vdwg.mxu0
    %v1828 = vadd.f32 %v1683, %v437
    %v1829 = vtanh.pop %v1828
    %v1830 = vsub.f32 %v1607, %v1829
    %1832 = vset.pattern.permute.xlu0 0
    %1833 = vperm.xlu0 %1832, %v1615
    %v1834 = vpop.permute.xlu0 %1833
    %v1836 = vmul.f32 %v1829, %v1834
    %v1837 = vadd.f32 %v1830, %v1836
    %v1839 = vcombine.high %v1613, %v1613
    %v1841 = vunpack.c.l.s4 1983009808
    %v1842 = vunpack.c.0.s8 %v1841
    %v1843 = vlaneseq
    %v1844 = vshrl.u32 %v1843, 7
    %v1845 = vsub.s32 %v1842, %v1844
    %v1846 = vrot.slane %v1613, %v1845
    %v1848 = vunpack.c.l.s4 1983009808
    %v1849 = vunpack.c.0.s8 %v1848
    %v1850 = vlaneseq
    %v1851 = vshrl.u32 %v1850, 7
    %v1852 = vsub.s32 %v1849, %v1851
    %v1853 = vrot.slane %v1839, %v1852
    %v1854 = vcombine.high %v1846, %v1846
    %v1855 = vcombine.high %v1853, %v1853
    %v1860 = vadd.f32 %v1685, %v1846
    %v1861 = vadd.f32 %v1754, %v1854
    %v1862 = vadd.f32 %v1756, %v1853
    %v1863 = vadd.f32 %v1825, %v1855
    %v1864 = vxor.u32 %v1860, 2147483648
    %v1865 = vmul.f32 %v1864, 1.442695
    %v1866 = vpow.pop %v1865
    %v1867 = vadd.f32 %v1866, 1.0
    %v1868 = vrcp.pop %v1867
    %v1869 = vmul.f32 1.0, %v1868
    %v1870 = vxor.u32 %v1861, 2147483648
    %v1871 = vmul.f32 %v1870, 1.442695
    %v1872 = vpow.pop %v1871
    %v1873 = vadd.f32 %v1872, 1.0
    %v1874 = vrcp.pop %v1873
    %v1875 = vmul.f32 1.0, %v1874
    %v1876 = vxor.u32 %v1862, 2147483648
    %v1877 = vmul.f32 %v1876, 1.442695
    %v1878 = vpow.pop %v1877
    %v1879 = vadd.f32 %v1878, 1.0
    %v1880 = vrcp.pop %v1879
    %v1881 = vmul.f32 1.0, %v1880
    %v1882 = vtanh.pop %v1863
    %v1883 = vmul.f32 %v1869, %v1837
    %v1884 = vmul.f32 %v1875, %v1882
    %v1885 = vadd.f32 %v1883, %v1884
    %v1886 = vtanh.pop %v1885
    %v1887 = vmul.f32 %v1881, %v1886
    %s1888 = scalar_lea.vmem [#allocation7], 10
    %1889 = vst [vmem:[%s1888] sm:$0x3] %v1881
    %s1890 = scalar_lea.vmem [#allocation2], 48
    %v1891 = vld [vmem:[%s1890] sm:$0xff]
    %s1892 = scalar_lea.vmem %s1, 12
    %v1893 = vld [vmem:[%s1892] sm:$0x3]
    %1894 = vmatprep.subr.mxu0 %v57
    %1895 = vmatpush1.msra.mxu0 %v56
    %1896 = vmatprep.subr.mxu0 %v62
    %1897 = vmatpush1.msra.mxu0 %v61
    %1898 = vmatprep.subr.mxu0 %v67
    %1899 = vmatpush1.msra.mxu0 %v66
    %1900 = vmatprep.subr.mxu0 %v72
    %1901 = vmatpush1.msra.mxu0 %v71
    %1902 = vmatprep.subr.mxu0 %v77
    %1903 = vmatpush1.msra.mxu0 %v76
    %1904 = vmatprep.subr.mxu0 %v82
    %1905 = vmatpush1.msra.mxu0 %v81
    %1906 = vmatprep.subr.mxu0 %v87
    %1907 = vmatpush1.msra.mxu0 %v86
    %1908 = vmatprep.subr.mxu0 %v92
    %1909 = vmatpush1.msra.mxu0 %v91
    %1910 = vmatprep.subr.mxu0 %v97
    %1911 = vmatpush1.msra.mxu0 %v96
    %1912 = vmatprep.subr.mxu0 %v102
    %1913 = vmatpush1.msra.mxu0 %v101
    %1914 = vmatprep.subr.mxu0 %v107
    %1915 = vmatpush1.msra.mxu0 %v106
    %1916 = vmatprep.subr.mxu0 %v112
    %1917 = vmatpush1.msra.mxu0 %v111
    %1918 = vmatprep.subr.mxu0 %v117
    %1919 = vmatpush1.msra.mxu0 %v116
    %1920 = vmatprep.subr.mxu0 %v122
    %1921 = vmatpush1.msra.mxu0 %v121
    %1922 = vmatprep.subr.mxu0 %v127
    %1923 = vmatpush1.msra.mxu0 %v126
    %1924 = vmatprep.subr.mxu0 %v132
    %1925 = vmatpush1.msra.mxu0 %v131
    %1926 = vmatprep.subr.mxu0 %v137
    %1927 = vmatpush1.msra.mxu0 %v136
    %1928 = vmatprep.subr.mxu0 %v142
    %1929 = vmatpush1.msra.mxu0 %v141
    %1930 = vmatprep.subr.mxu0 %v147
    %1931 = vmatpush1.msra.mxu0 %v146
    %1932 = vmatprep.subr.mxu0 %v152
    %1933 = vmatpush1.msra.mxu0 %v151
    %1934 = vmatprep.subr.mxu0 %v157
    %1935 = vmatpush1.msra.mxu0 %v156
    %1936 = vmatprep.subr.mxu0 %v162
    %1937 = vmatpush1.msra.mxu0 %v161
    %1938 = vmatprep.subr.mxu0 %v167
    %1939 = vmatpush1.msra.mxu0 %v166
    %1940 = vmatprep.subr.mxu0 %v172
    %1941 = vmatpush1.msra.mxu0 %v171
    %1942 = vmatprep.subr.mxu0 %v177
    %1943 = vmatpush1.msra.mxu0 %v176
    %1944 = vmatprep.subr.mxu0 %v182
    %1945 = vmatpush1.msra.mxu0 %v181
    %1946 = vmatprep.subr.mxu0 %v187
    %1947 = vmatpush1.msra.mxu0 %v186
    %1948 = vmatprep.subr.mxu0 %v192
    %1949 = vmatpush1.msra.mxu0 %v191
    %1950 = vmatprep.subr.mxu0 %v197
    %1951 = vmatpush1.msra.mxu0 %v196
    %1952 = vmatprep.subr.mxu0 %v202
    %1953 = vmatpush1.msra.mxu0 %v201
    %1954 = vmatprep.subr.mxu0 %v207
    %1955 = vmatpush1.msra.mxu0 %v206
    %1956 = vmatprep.subr.mxu0 %v212
    %1957 = vmatpush1.msra.mxu0 %v211
    %1958 = vmatprep.mubr.f32.mxu0 %v1887
    %1959 = vmatmul.mubr.f32.gmra.mrb[0].mxu0 %v1885
    %v1960 = vpop.f32.mrb[0].mxu0
    %v1961 = vadd.f32 0.0, %v1960
    %v1962 = vpop.f32.mrb[0].mxu0
    %v1963 = vadd.f32 0.0, %v1962
    %1964 = vdwg.mxu0
    %1965 = vmatprep.subr.mxu0 %v59
    %1966 = vmatpush1.msra.mxu0 %v58
    %1967 = vmatprep.subr.mxu0 %v64
    %1968 = vmatpush1.msra.mxu0 %v63
    %1969 = vmatprep.subr.mxu0 %v69
    %1970 = vmatpush1.msra.mxu0 %v68
    %1971 = vmatprep.subr.mxu0 %v74
    %1972 = vmatpush1.msra.mxu0 %v73
    %1973 = vmatprep.subr.mxu0 %v79
    %1974 = vmatpush1.msra.mxu0 %v78
    %1975 = vmatprep.subr.mxu0 %v84
    %1976 = vmatpush1.msra.mxu0 %v83
    %1977 = vmatprep.subr.mxu0 %v89
    %1978 = vmatpush1.msra.mxu0 %v88
    %1979 = vmatprep.subr.mxu0 %v94
    %1980 = vmatpush1.msra.mxu0 %v93
    %1981 = vmatprep.subr.mxu0 %v99
    %1982 = vmatpush1.msra.mxu0 %v98
    %1983 = vmatprep.subr.mxu0 %v104
    %1984 = vmatpush1.msra.mxu0 %v103
    %1985 = vmatprep.subr.mxu0 %v109
    %1986 = vmatpush1.msra.mxu0 %v108
    %1987 = vmatprep.subr.mxu0 %v114
    %1988 = vmatpush1.msra.mxu0 %v113
    %1989 = vmatprep.subr.mxu0 %v119
    %1990 = vmatpush1.msra.mxu0 %v118
    %1991 = vmatprep.subr.mxu0 %v124
    %1992 = vmatpush1.msra.mxu0 %v123
    %1993 = vmatprep.subr.mxu0 %v129
    %1994 = vmatpush1.msra.mxu0 %v128
    %1995 = vmatprep.subr.mxu0 %v134
    %1996 = vmatpush1.msra.mxu0 %v133
    %1997 = vmatprep.subr.mxu0 %v139
    %1998 = vmatpush1.msra.mxu0 %v138
    %1999 = vmatprep.subr.mxu0 %v144
    %2000 = vmatpush1.msra.mxu0 %v143
    %2001 = vmatprep.subr.mxu0 %v149
    %2002 = vmatpush1.msra.mxu0 %v148
    %2003 = vmatprep.subr.mxu0 %v154
    %2004 = vmatpush1.msra.mxu0 %v153
    %2005 = vmatprep.subr.mxu0 %v159
    %2006 = vmatpush1.msra.mxu0 %v158
    %2007 = vmatprep.subr.mxu0 %v164
    %2008 = vmatpush1.msra.mxu0 %v163
    %2009 = vmatprep.subr.mxu0 %v169
    %2010 = vmatpush1.msra.mxu0 %v168
    %2011 = vmatprep.subr.mxu0 %v174
    %2012 = vmatpush1.msra.mxu0 %v173
    %2013 = vmatprep.subr.mxu0 %v179
    %2014 = vmatpush1.msra.mxu0 %v178
    %2015 = vmatprep.subr.mxu0 %v184
    %2016 = vmatpush1.msra.mxu0 %v183
    %2017 = vmatprep.subr.mxu0 %v189
    %2018 = vmatpush1.msra.mxu0 %v188
    %2019 = vmatprep.subr.mxu0 %v194
    %2020 = vmatpush1.msra.mxu0 %v193
    %2021 = vmatprep.subr.mxu0 %v199
    %2022 = vmatpush1.msra.mxu0 %v198
    %2023 = vmatprep.subr.mxu0 %v204
    %2024 = vmatpush1.msra.mxu0 %v203
    %2025 = vmatprep.subr.mxu0 %v209
    %2026 = vmatpush1.msra.mxu0 %v208
    %2027 = vmatprep.subr.mxu0 %v214
    %2028 = vmatpush1.msra.mxu0 %v213
    %2029 = vmatprep.mubr.f32.mxu0 %v1887
    %2030 = vmatmul.mubr.f32.gmra.mrb[0].mxu0 %v1885
    %v2031 = vpop.f32.mrb[0].mxu0
    %v2032 = vadd.f32 0.0, %v2031
    %v2033 = vpop.f32.mrb[0].mxu0
    %v2034 = vadd.f32 0.0, %v2033
    %2035 = vdwg.mxu0
    %2036 = vmatprep.subr.mxu0 0.0
    %2037 = vmatpush1.msra.mxu0 %v60
    %2038 = vmatprep.subr.mxu0 0.0
    %2039 = vmatpush1.msra.mxu0 %v65
    %2040 = vmatprep.subr.mxu0 0.0
    %2041 = vmatpush1.msra.mxu0 %v70
    %2042 = vmatprep.subr.mxu0 0.0
    %2043 = vmatpush1.msra.mxu0 %v75
    %2044 = vmatprep.subr.mxu0 0.0
    %2045 = vmatpush1.msra.mxu0 %v80
    %2046 = vmatprep.subr.mxu0 0.0
    %2047 = vmatpush1.msra.mxu0 %v85
    %2048 = vmatprep.subr.mxu0 0.0
    %2049 = vmatpush1.msra.mxu0 %v90
    %2050 = vmatprep.subr.mxu0 0.0
    %2051 = vmatpush1.msra.mxu0 %v95
    %2052 = vmatprep.subr.mxu0 0.0
    %2053 = vmatpush1.msra.mxu0 %v100
    %2054 = vmatprep.subr.mxu0 0.0
    %2055 = vmatpush1.msra.mxu0 %v105
    %2056 = vmatprep.subr.mxu0 0.0
    %2057 = vmatpush1.msra.mxu0 %v110
    %2058 = vmatprep.subr.mxu0 0.0
    %2059 = vmatpush1.msra.mxu0 %v115
    %2060 = vmatprep.subr.mxu0 0.0
    %2061 = vmatpush1.msra.mxu0 %v120
    %2062 = vmatprep.subr.mxu0 0.0
    %2063 = vmatpush1.msra.mxu0 %v125
    %2064 = vmatprep.subr.mxu0 0.0
    %2065 = vmatpush1.msra.mxu0 %v130
    %2066 = vmatprep.subr.mxu0 0.0
    %2067 = vmatpush1.msra.mxu0 %v135
    %2068 = vmatprep.subr.mxu0 0.0
    %2069 = vmatpush1.msra.mxu0 %v140
    %2070 = vmatprep.subr.mxu0 0.0
    %2071 = vmatpush1.msra.mxu0 %v145
    %2072 = vmatprep.subr.mxu0 0.0
    %2073 = vmatpush1.msra.mxu0 %v150
    %2074 = vmatprep.subr.mxu0 0.0
    %2075 = vmatpush1.msra.mxu0 %v155
    %2076 = vmatprep.subr.mxu0 0.0
    %2077 = vmatpush1.msra.mxu0 %v160
    %2078 = vmatprep.subr.mxu0 0.0
    %2079 = vmatpush1.msra.mxu0 %v165
    %2080 = vmatprep.subr.mxu0 0.0
    %2081 = vmatpush1.msra.mxu0 %v170
    %2082 = vmatprep.subr.mxu0 0.0
    %2083 = vmatpush1.msra.mxu0 %v175
    %2084 = vmatprep.subr.mxu0 0.0
    %2085 = vmatpush1.msra.mxu0 %v180
    %2086 = vmatprep.subr.mxu0 0.0
    %2087 = vmatpush1.msra.mxu0 %v185
    %2088 = vmatprep.subr.mxu0 0.0
    %2089 = vmatpush1.msra.mxu0 %v190
    %2090 = vmatprep.subr.mxu0 0.0
    %2091 = vmatpush1.msra.mxu0 %v195
    %2092 = vmatprep.subr.mxu0 0.0
    %2093 = vmatpush1.msra.mxu0 %v200
    %2094 = vmatprep.subr.mxu0 0.0
    %2095 = vmatpush1.msra.mxu0 %v205
    %2096 = vmatprep.subr.mxu0 0.0
    %2097 = vmatpush1.msra.mxu0 %v210
    %2098 = vmatprep.subr.mxu0 0.0
    %2099 = vmatpush1.msra.mxu0 %v215
    %2100 = vmatprep.mubr.f32.mxu0 %v1887
    %2101 = vmatmul.mubr.f32.gmra.mrb[0].mxu0 %v1885
    %v2102 = vpop.f32.mrb[0].mxu0
    %v2103 = vadd.f32 0.0, %v2102
    %v2104 = vpop.f32.mrb[0].mxu0
    %2105 = vdwg.mxu0
    %v2106 = vadd.f32 %v1961, %v437
    %v2107 = vtanh.pop %v2106
    %v2108 = vsub.f32 %v1885, %v2107
    %2110 = vset.pattern.permute.xlu0 0
    %2111 = vperm.xlu0 %2110, %v1893
    %v2112 = vpop.permute.xlu0 %2111
    %v2114 = vmul.f32 %v2107, %v2112
    %v2115 = vadd.f32 %v2108, %v2114
    %v2117 = vcombine.high %v1891, %v1891
    %v2119 = vunpack.c.l.s4 1983009808
    %v2120 = vunpack.c.0.s8 %v2119
    %v2121 = vlaneseq
    %v2122 = vshrl.u32 %v2121, 7
    %v2123 = vsub.s32 %v2120, %v2122
    %v2124 = vrot.slane %v1891, %v2123
    %v2126 = vunpack.c.l.s4 1983009808
    %v2127 = vunpack.c.0.s8 %v2126
    %v2128 = vlaneseq
    %v2129 = vshrl.u32 %v2128, 7
    %v2130 = vsub.s32 %v2127, %v2129
    %v2131 = vrot.slane %v2117, %v2130
    %v2132 = vcombine.high %v2124, %v2124
    %v2133 = vcombine.high %v2131, %v2131
    %v2138 = vadd.f32 %v1963, %v2124
    %v2139 = vadd.f32 %v2032, %v2132
    %v2140 = vadd.f32 %v2034, %v2131
    %v2141 = vadd.f32 %v2103, %v2133
    %v2142 = vxor.u32 %v2138, 2147483648
    %v2143 = vmul.f32 %v2142, 1.442695
    %v2144 = vpow.pop %v2143
    %v2145 = vadd.f32 %v2144, 1.0
    %v2146 = vrcp.pop %v2145
    %v2147 = vmul.f32 1.0, %v2146
    %v2148 = vxor.u32 %v2139, 2147483648
    %v2149 = vmul.f32 %v2148, 1.442695
    %v2150 = vpow.pop %v2149
    %v2151 = vadd.f32 %v2150, 1.0
    %v2152 = vrcp.pop %v2151
    %v2153 = vmul.f32 1.0, %v2152
    %v2154 = vxor.u32 %v2140, 2147483648
    %v2155 = vmul.f32 %v2154, 1.442695
    %v2156 = vpow.pop %v2155
    %v2157 = vadd.f32 %v2156, 1.0
    %v2158 = vrcp.pop %v2157
    %v2159 = vmul.f32 1.0, %v2158
    %v2160 = vtanh.pop %v2141
    %v2161 = vmul.f32 %v2147, %v2115
    %v2162 = vmul.f32 %v2153, %v2160
    %v2163 = vadd.f32 %v2161, %v2162
    %v2164 = vtanh.pop %v2163
    %v2165 = vmul.f32 %v2159, %v2164
    %s2166 = scalar_lea.vmem [#allocation7], 12
    %2167 = vst [vmem:[%s2166] sm:$0x3] %v2159
    %s2168 = scalar_lea.vmem [#allocation2], 56
    %v2169 = vld [vmem:[%s2168] sm:$0xff]
    %s2170 = scalar_lea.vmem %s1, 14
    %v2171 = vld [vmem:[%s2170] sm:$0x3]
    %2172 = vmatprep.subr.mxu0 %v57
    %2173 = vmatpush1.msra.mxu0 %v56
    %2174 = vmatprep.subr.mxu0 %v62
    %2175 = vmatpush1.msra.mxu0 %v61
    %2176 = vmatprep.subr.mxu0 %v67
    %2177 = vmatpush1.msra.mxu0 %v66
    %2178 = vmatprep.subr.mxu0 %v72
    %2179 = vmatpush1.msra.mxu0 %v71
    %2180 = vmatprep.subr.mxu0 %v77
    %2181 = vmatpush1.msra.mxu0 %v76
    %2182 = vmatprep.subr.mxu0 %v82
    %2183 = vmatpush1.msra.mxu0 %v81
    %2184 = vmatprep.subr.mxu0 %v87
    %2185 = vmatpush1.msra.mxu0 %v86
    %2186 = vmatprep.subr.mxu0 %v92
    %2187 = vmatpush1.msra.mxu0 %v91
    %2188 = vmatprep.subr.mxu0 %v97
    %2189 = vmatpush1.msra.mxu0 %v96
    %2190 = vmatprep.subr.mxu0 %v102
    %2191 = vmatpush1.msra.mxu0 %v101
    %2192 = vmatprep.subr.mxu0 %v107
    %2193 = vmatpush1.msra.mxu0 %v106
    %2194 = vmatprep.subr.mxu0 %v112
    %2195 = vmatpush1.msra.mxu0 %v111
    %2196 = vmatprep.subr.mxu0 %v117
    %2197 = vmatpush1.msra.mxu0 %v116
    %2198 = vmatprep.subr.mxu0 %v122
    %2199 = vmatpush1.msra.mxu0 %v121
    %2200 = vmatprep.subr.mxu0 %v127
    %2201 = vmatpush1.msra.mxu0 %v126
    %2202 = vmatprep.subr.mxu0 %v132
    %2203 = vmatpush1.msra.mxu0 %v131
    %2204 = vmatprep.subr.mxu0 %v137
    %2205 = vmatpush1.msra.mxu0 %v136
    %2206 = vmatprep.subr.mxu0 %v142
    %2207 = vmatpush1.msra.mxu0 %v141
    %2208 = vmatprep.subr.mxu0 %v147
    %2209 = vmatpush1.msra.mxu0 %v146
    %2210 = vmatprep.subr.mxu0 %v152
    %2211 = vmatpush1.msra.mxu0 %v151
    %2212 = vmatprep.subr.mxu0 %v157
    %2213 = vmatpush1.msra.mxu0 %v156
    %2214 = vmatprep.subr.mxu0 %v162
    %2215 = vmatpush1.msra.mxu0 %v161
    %2216 = vmatprep.subr.mxu0 %v167
    %2217 = vmatpush1.msra.mxu0 %v166
    %2218 = vmatprep.subr.mxu0 %v172
    %2219 = vmatpush1.msra.mxu0 %v171
    %2220 = vmatprep.subr.mxu0 %v177
    %2221 = vmatpush1.msra.mxu0 %v176
    %2222 = vmatprep.subr.mxu0 %v182
    %2223 = vmatpush1.msra.mxu0 %v181
    %2224 = vmatprep.subr.mxu0 %v187
    %2225 = vmatpush1.msra.mxu0 %v186
    %2226 = vmatprep.subr.mxu0 %v192
    %2227 = vmatpush1.msra.mxu0 %v191
    %2228 = vmatprep.subr.mxu0 %v197
    %2229 = vmatpush1.msra.mxu0 %v196
    %2230 = vmatprep.subr.mxu0 %v202
    %2231 = vmatpush1.msra.mxu0 %v201
    %2232 = vmatprep.subr.mxu0 %v207
    %2233 = vmatpush1.msra.mxu0 %v206
    %2234 = vmatprep.subr.mxu0 %v212
    %2235 = vmatpush1.msra.mxu0 %v211
    %2236 = vmatprep.mubr.f32.mxu0 %v2165
    %2237 = vmatmul.mubr.f32.gmra.mrb[0].mxu0 %v2163
    %v2238 = vpop.f32.mrb[0].mxu0
    %v2239 = vadd.f32 0.0, %v2238
    %v2240 = vpop.f32.mrb[0].mxu0
    %v2241 = vadd.f32 0.0, %v2240
    %2242 = vdwg.mxu0
    %2243 = vmatprep.subr.mxu0 %v59
    %2244 = vmatpush1.msra.mxu0 %v58
    %2245 = vmatprep.subr.mxu0 %v64
    %2246 = vmatpush1.msra.mxu0 %v63
    %2247 = vmatprep.subr.mxu0 %v69
    %2248 = vmatpush1.msra.mxu0 %v68
    %2249 = vmatprep.subr.mxu0 %v74
    %2250 = vmatpush1.msra.mxu0 %v73
    %2251 = vmatprep.subr.mxu0 %v79
    %2252 = vmatpush1.msra.mxu0 %v78
    %2253 = vmatprep.subr.mxu0 %v84
    %2254 = vmatpush1.msra.mxu0 %v83
    %2255 = vmatprep.subr.mxu0 %v89
    %2256 = vmatpush1.msra.mxu0 %v88
    %2257 = vmatprep.subr.mxu0 %v94
    %2258 = vmatpush1.msra.mxu0 %v93
    %2259 = vmatprep.subr.mxu0 %v99
    %2260 = vmatpush1.msra.mxu0 %v98
    %2261 = vmatprep.subr.mxu0 %v104
    %2262 = vmatpush1.msra.mxu0 %v103
    %2263 = vmatprep.subr.mxu0 %v109
    %2264 = vmatpush1.msra.mxu0 %v108
    %2265 = vmatprep.subr.mxu0 %v114
    %2266 = vmatpush1.msra.mxu0 %v113
    %2267 = vmatprep.subr.mxu0 %v119
    %2268 = vmatpush1.msra.mxu0 %v118
    %2269 = vmatprep.subr.mxu0 %v124
    %2270 = vmatpush1.msra.mxu0 %v123
    %2271 = vmatprep.subr.mxu0 %v129
    %2272 = vmatpush1.msra.mxu0 %v128
    %2273 = vmatprep.subr.mxu0 %v134
    %2274 = vmatpush1.msra.mxu0 %v133
    %2275 = vmatprep.subr.mxu0 %v139
    %2276 = vmatpush1.msra.mxu0 %v138
    %2277 = vmatprep.subr.mxu0 %v144
    %2278 = vmatpush1.msra.mxu0 %v143
    %2279 = vmatprep.subr.mxu0 %v149
    %2280 = vmatpush1.msra.mxu0 %v148
    %2281 = vmatprep.subr.mxu0 %v154
    %2282 = vmatpush1.msra.mxu0 %v153
    %2283 = vmatprep.subr.mxu0 %v159
    %2284 = vmatpush1.msra.mxu0 %v158
    %2285 = vmatprep.subr.mxu0 %v164
    %2286 = vmatpush1.msra.mxu0 %v163
    %2287 = vmatprep.subr.mxu0 %v169
    %2288 = vmatpush1.msra.mxu0 %v168
    %2289 = vmatprep.subr.mxu0 %v174
    %2290 = vmatpush1.msra.mxu0 %v173
    %2291 = vmatprep.subr.mxu0 %v179
    %2292 = vmatpush1.msra.mxu0 %v178
    %2293 = vmatprep.subr.mxu0 %v184
    %2294 = vmatpush1.msra.mxu0 %v183
    %2295 = vmatprep.subr.mxu0 %v189
    %2296 = vmatpush1.msra.mxu0 %v188
    %2297 = vmatprep.subr.mxu0 %v194
    %2298 = vmatpush1.msra.mxu0 %v193
    %2299 = vmatprep.subr.mxu0 %v199
    %2300 = vmatpush1.msra.mxu0 %v198
    %2301 = vmatprep.subr.mxu0 %v204
    %2302 = vmatpush1.msra.mxu0 %v203
    %2303 = vmatprep.subr.mxu0 %v209
    %2304 = vmatpush1.msra.mxu0 %v208
    %2305 = vmatprep.subr.mxu0 %v214
    %2306 = vmatpush1.msra.mxu0 %v213
    %2307 = vmatprep.mubr.f32.mxu0 %v2165
    %2308 = vmatmul.mubr.f32.gmra.mrb[0].mxu0 %v2163
    %v2309 = vpop.f32.mrb[0].mxu0
    %v2310 = vadd.f32 0.0, %v2309
    %v2311 = vpop.f32.mrb[0].mxu0
    %v2312 = vadd.f32 0.0, %v2311
    %2313 = vdwg.mxu0
    %2314 = vmatprep.subr.mxu0 0.0
    %2315 = vmatpush1.msra.mxu0 %v60
    %2316 = vmatprep.subr.mxu0 0.0
    %2317 = vmatpush1.msra.mxu0 %v65
    %2318 = vmatprep.subr.mxu0 0.0
    %2319 = vmatpush1.msra.mxu0 %v70
    %2320 = vmatprep.subr.mxu0 0.0
    %2321 = vmatpush1.msra.mxu0 %v75
    %2322 = vmatprep.subr.mxu0 0.0
    %2323 = vmatpush1.msra.mxu0 %v80
    %2324 = vmatprep.subr.mxu0 0.0
    %2325 = vmatpush1.msra.mxu0 %v85
    %2326 = vmatprep.subr.mxu0 0.0
    %2327 = vmatpush1.msra.mxu0 %v90
    %2328 = vmatprep.subr.mxu0 0.0
    %2329 = vmatpush1.msra.mxu0 %v95
    %2330 = vmatprep.subr.mxu0 0.0
    %2331 = vmatpush1.msra.mxu0 %v100
    %2332 = vmatprep.subr.mxu0 0.0
    %2333 = vmatpush1.msra.mxu0 %v105
    %2334 = vmatprep.subr.mxu0 0.0
    %2335 = vmatpush1.msra.mxu0 %v110
    %2336 = vmatprep.subr.mxu0 0.0
    %2337 = vmatpush1.msra.mxu0 %v115
    %2338 = vmatprep.subr.mxu0 0.0
    %2339 = vmatpush1.msra.mxu0 %v120
    %2340 = vmatprep.subr.mxu0 0.0
    %2341 = vmatpush1.msra.mxu0 %v125
    %2342 = vmatprep.subr.mxu0 0.0
    %2343 = vmatpush1.msra.mxu0 %v130
    %2344 = vmatprep.subr.mxu0 0.0
    %2345 = vmatpush1.msra.mxu0 %v135
    %2346 = vmatprep.subr.mxu0 0.0
    %2347 = vmatpush1.msra.mxu0 %v140
    %2348 = vmatprep.subr.mxu0 0.0
    %2349 = vmatpush1.msra.mxu0 %v145
    %2350 = vmatprep.subr.mxu0 0.0
    %2351 = vmatpush1.msra.mxu0 %v150
    %2352 = vmatprep.subr.mxu0 0.0
    %2353 = vmatpush1.msra.mxu0 %v155
    %2354 = vmatprep.subr.mxu0 0.0
    %2355 = vmatpush1.msra.mxu0 %v160
    %2356 = vmatprep.subr.mxu0 0.0
    %2357 = vmatpush1.msra.mxu0 %v165
    %2358 = vmatprep.subr.mxu0 0.0
    %2359 = vmatpush1.msra.mxu0 %v170
    %2360 = vmatprep.subr.mxu0 0.0
    %2361 = vmatpush1.msra.mxu0 %v175
    %2362 = vmatprep.subr.mxu0 0.0
    %2363 = vmatpush1.msra.mxu0 %v180
    %2364 = vmatprep.subr.mxu0 0.0
    %2365 = vmatpush1.msra.mxu0 %v185
    %2366 = vmatprep.subr.mxu0 0.0
    %2367 = vmatpush1.msra.mxu0 %v190
    %2368 = vmatprep.subr.mxu0 0.0
    %2369 = vmatpush1.msra.mxu0 %v195
    %2370 = vmatprep.subr.mxu0 0.0
    %2371 = vmatpush1.msra.mxu0 %v200
    %2372 = vmatprep.subr.mxu0 0.0
    %2373 = vmatpush1.msra.mxu0 %v205
    %2374 = vmatprep.subr.mxu0 0.0
    %2375 = vmatpush1.msra.mxu0 %v210
    %2376 = vmatprep.subr.mxu0 0.0
    %2377 = vmatpush1.msra.mxu0 %v215
    %2378 = vmatprep.mubr.f32.mxu0 %v2165
    %2379 = vmatmul.mubr.f32.gmra.mrb[0].mxu0 %v2163
    %v2380 = vpop.f32.mrb[0].mxu0
    %v2381 = vadd.f32 0.0, %v2380
    %v2382 = vpop.f32.mrb[0].mxu0
    %2383 = vdwg.mxu0
    %v2384 = vadd.f32 %v2239, %v437
    %v2385 = vtanh.pop %v2384
    %v2386 = vsub.f32 %v2163, %v2385
    %2388 = vset.pattern.permute.xlu0 0
    %2389 = vperm.xlu0 %2388, %v2171
    %v2390 = vpop.permute.xlu0 %2389
    %v2392 = vmul.f32 %v2385, %v2390
    %v2393 = vadd.f32 %v2386, %v2392
    %v2395 = vcombine.high %v2169, %v2169
    %v2397 = vunpack.c.l.s4 1983009808
    %v2398 = vunpack.c.0.s8 %v2397
    %v2399 = vlaneseq
    %v2400 = vshrl.u32 %v2399, 7
    %v2401 = vsub.s32 %v2398, %v2400
    %v2402 = vrot.slane %v2169, %v2401
    %v2404 = vunpack.c.l.s4 1983009808
    %v2405 = vunpack.c.0.s8 %v2404
    %v2406 = vlaneseq
    %v2407 = vshrl.u32 %v2406, 7
    %v2408 = vsub.s32 %v2405, %v2407
    %v2409 = vrot.slane %v2395, %v2408
    %v2410 = vcombine.high %v2402, %v2402
    %v2411 = vcombine.high %v2409, %v2409
    %v2416 = vadd.f32 %v2241, %v2402
    %v2417 = vadd.f32 %v2310, %v2410
    %v2418 = vadd.f32 %v2312, %v2409
    %v2419 = vadd.f32 %v2381, %v2411
    %v2420 = vxor.u32 %v2416, 2147483648
    %v2421 = vmul.f32 %v2420, 1.442695
    %v2422 = vpow.pop %v2421
    %v2423 = vadd.f32 %v2422, 1.0
    %v2424 = vrcp.pop %v2423
    %v2425 = vmul.f32 1.0, %v2424
    %v2426 = vxor.u32 %v2417, 2147483648
    %v2427 = vmul.f32 %v2426, 1.442695
    %v2428 = vpow.pop %v2427
    %v2429 = vadd.f32 %v2428, 1.0
    %v2430 = vrcp.pop %v2429
    %v2431 = vmul.f32 1.0, %v2430
    %v2432 = vxor.u32 %v2418, 2147483648
    %v2433 = vmul.f32 %v2432, 1.442695
    %v2434 = vpow.pop %v2433
    %v2435 = vadd.f32 %v2434, 1.0
    %v2436 = vrcp.pop %v2435
    %v2437 = vmul.f32 1.0, %v2436
    %v2438 = vtanh.pop %v2419
    %v2439 = vmul.f32 %v2425, %v2393
    %v2440 = vmul.f32 %v2431, %v2438
    %v2441 = vadd.f32 %v2439, %v2440
    %v2442 = vtanh.pop %v2441
    %v2443 = vmul.f32 %v2437, %v2442
    %s2444 = scalar_lea.vmem [#allocation7], 14
    %2445 = vst [vmem:[%s2444] sm:$0x3] %v2437
    %2446 = vst [vmem:[#allocation8] sm:$0x3] %v2443
    %2447 = vst [vmem:[#allocation10] sm:$0x3] %v2441
    // Predicated region
    $region30: #{tpu_custom_call.1} parent=1 // pred_check
      _
    $region31: #{tpu_custom_call.1} parent=1 // pred_check_branch
      %2449 = sbr.rel (0) target = $region33
    $region32: #{tpu_custom_call.1} parent=1 // pred_region
      %s2451 = ssub.s32 256, 256
      %2452 = vsyncadd [#allocation4], %s2451
      %s2453 = sshll.u32 [#allocation7], 4
      %s2454 = int_to_ptr.vmem [resolvable:$true] %s2453
      %2459 = dma.vmem_to_hbm [thread:$0]  %s2454, 256, %s4, [#allocation4], 32, 32, 2
    $region33: #{tpu_custom_call.1} parent=1 // pred_fallthru
      _
    // Predicated region
    $region34: #{tpu_custom_call.1} parent=1 // pred_check
      _
    $region35: #{tpu_custom_call.1} parent=1 // pred_check_branch
      %2461 = sbr.rel (0) target = $region37
    $region36: #{tpu_custom_call.1} parent=1 // pred_region
      %s2463 = ssub.s32 32, 32
      %2464 = vsyncadd [#allocation9], %s2463
      %s2466 = sshll.u32 [#allocation8], 4
      %s2467 = int_to_ptr.vmem [resolvable:$true] %s2466
      %2469 = dma.vmem_to_hbm [thread:$0]  %s2467, 32, %s5, [#allocation9]
    $region37: #{tpu_custom_call.1} parent=1 // pred_fallthru
      _
    // Predicated region
    $region38: #{tpu_custom_call.1} parent=1 // pred_check
      _
    $region39: #{tpu_custom_call.1} parent=1 // pred_check_branch
      %2471 = sbr.rel (0) target = $region41
    $region40: #{tpu_custom_call.1} parent=1 // pred_region
      %s2473 = ssub.s32 32, 32
      %2474 = vsyncadd [#allocation9], %s2473
      %s2476 = sshll.u32 [#allocation10], 4
      %s2477 = int_to_ptr.vmem [resolvable:$true] %s2476
      %2479 = dma.vmem_to_hbm [thread:$0]  %s2477, 32, %s6, [#allocation9]
    $region41: #{tpu_custom_call.1} parent=1 // pred_fallthru
      _
    // Predicated region
    $region42: #{tpu_custom_call.1} parent=1 // pred_check
      _
    $region43: #{tpu_custom_call.1} parent=1 // pred_check_branch
      %2481 = sbr.rel (0) target = $region45
    $region44: #{tpu_custom_call.1} parent=1 // pred_region
      %2482 = dma.done [#allocation4], 256
    $region45: #{tpu_custom_call.1} parent=1 // pred_fallthru
      _
    // Predicated region
    $region46: #{tpu_custom_call.1} parent=1 // pred_check
      _
    $region47: #{tpu_custom_call.1} parent=1 // pred_check_branch
      %2484 = sbr.rel (0) target = $region49
    $region48: #{tpu_custom_call.1} parent=1 // pred_region
      %2485 = dma.done [#allocation9], 32
    $region49: #{tpu_custom_call.1} parent=1 // pred_fallthru
      _
    // Predicated region
    $region50: #{tpu_custom_call.1} parent=1 // pred_check
      _
    $region51: #{tpu_custom_call.1} parent=1 // pred_check_branch
      %2487 = sbr.rel (0) target = $region53
    $region52: #{tpu_custom_call.1} parent=1 // pred_region
      %2488 = dma.done [#allocation9], 32
    $region53: #{tpu_custom_call.1} parent=1 // pred_fallthru
      _
    %2489 = vsyncpa [#allocation3], 1
    %2490 = vsyncpa [#allocation6], 1
    %2491 = vsyncpa [#allocation4], 1
    %2492 = vsyncpa [#allocation9], 1

</llo_original>
